<compile_context>
chip_gen: v6e
topology: v6e:2x2x1
jax: 0.10.0
libtpu: 0.0.40
codegen_flags: <defaults>
</compile_context>

<pallas_src>
import jax
import jax.numpy as jnp
from jax import lax
from jax.experimental import pallas as pl
from jax.experimental.pallas import tpu as pltpu

# ---------------------------------------------------------------------------
# Model configuration (small shapes consistent with the module)
# ---------------------------------------------------------------------------
BATCH = 2
IMG_SIZE = 4
SEQ = IMG_SIZE * IMG_SIZE        # 16 tokens
DIM = 32                         # per-branch channel dim (input has 2*DIM)
DEPTH = 2
HEADS = 4
DIM_HEAD = 8
MLP_DIM = 64
INNER = HEADS * DIM_HEAD         # 32
LN_EPS = 1e-5
SCALE = DIM_HEAD ** -0.5
M_TOK = BATCH * SEQ              # 32 rows through every matmul


# ---------------------------------------------------------------------------
# In-kernel helpers
# ---------------------------------------------------------------------------
def _layernorm(y, eps=LN_EPS):
    mu = jnp.mean(y, axis=-1, keepdims=True)
    var = jnp.mean(jnp.square(y - mu), axis=-1, keepdims=True)
    return (y - mu) * lax.rsqrt(var + eps)


# ---------------------------------------------------------------------------
# Single fused kernel: full Trans_depth forward (DEPTH layers, statically unrolled)
# ---------------------------------------------------------------------------
def _trans_depth_kernel(x_ref, h_ref, bias_ref,
                        wqkv_ref, bqkv_ref, wo_ref, bo_ref,
                        ln1g_ref, ln1b_ref,
                        w1_ref, b1_ref, w2_ref, b2_ref,
                        ln2g_ref, ln2b_ref,
                        o_ref):
    x = x_ref[...]                    # (M, D) f32
    h = h_ref[...]                    # (M, D) f32
    attn_bias = bias_ref[...]         # (M, M) f32: 0 within a batch, -1e30 across batches

    for l in range(DEPTH):            # static unroll across depth (DEPTH=2)
        # ---- attention: fused qkv projection (single MXU matmul) -------------
        qkv = (jnp.dot(x.astype(jnp.bfloat16), wqkv_ref[l],
                       preferred_element_type=jnp.float32)
               + bqkv_ref[l])                                    # (M, 3*INNER) f32

        mha = jnp.zeros_like(x)                                  # (M, D) f32 accumulator
        for hd in range(HEADS):       # static unroll over heads; back-to-back MXU pushes
            c0 = hd * DIM_HEAD
            q_h = qkv[:, c0:c0 + DIM_HEAD].astype(jnp.bfloat16)                    # (M, Dh)
            k_h = qkv[:, INNER + c0:INNER + c0 + DIM_HEAD].astype(jnp.bfloat16)    # (M, Dh)
            v_h = qkv[:, 2 * INNER + c0:2 * INNER + c0 + DIM_HEAD].astype(jnp.bfloat16)

            # scores over all M tokens; cross-batch pairs killed by the additive mask
            s = lax.dot_general(q_h, k_h, (((1,), (1,)), ((), ())),
                                preferred_element_type=jnp.float32)                # (M, M)
            s = s * SCALE + attn_bias
            m = jnp.max(s, axis=-1, keepdims=True)
            p = jnp.exp(s - m)
            p = p / jnp.sum(p, axis=-1, keepdims=True)

            out_h = jnp.dot(p.astype(jnp.bfloat16), v_h,
                            preferred_element_type=jnp.float32)                    # (M, Dh)
            # head merge fused into the output projection (no lane concat needed)
            mha = mha + jnp.dot(out_h.astype(jnp.bfloat16),
                                wo_ref[l, hd].astype(jnp.bfloat16),
                                preferred_element_type=jnp.float32)                # (M, D)
        mha = mha + bo_ref[l]

        # ---- LN1 + dropout(identity) + residual(x, h) -------------------------
        ln1 = _layernorm(mha) * ln1g_ref[l] + ln1b_ref[l]
        x = ln1 + x + h

        # ---- MLP: Linear -> GELU(tanh) -> Linear ------------------------------
        hid = (jnp.dot(x.astype(jnp.bfloat16), w1_ref[l],
                       preferred_element_type=jnp.float32) + b1_ref[l])            # (M, MLP)
        hid = jax.nn.gelu(hid, approximate=True)
        mlp = (jnp.dot(hid.astype(jnp.bfloat16), w2_ref[l],
                       preferred_element_type=jnp.float32) + b2_ref[l])            # (M, D)

        # ---- LN2 + residual ----------------------------------------------------
        ln2 = _layernorm(mlp) * ln2g_ref[l] + ln2b_ref[l]
        x = ln2 + x

    o_ref[...] = x


# ---------------------------------------------------------------------------
# Wrapper: one pallas_call, every operand a full VMEM-resident block
# ---------------------------------------------------------------------------
def forward(params, x):
    """x: (B, S, 2*DIM) -> (B, S, DIM), mirroring Trans_depth.forward."""
    x, h = jnp.split(x, 2, axis=2)                 # torch.chunk(x, 2, dim=2)
    B, S, D = x.shape
    M = B * S

    # Additive block mask (0 within a batch's tokens, -1e30 across batches).
    tok = jnp.arange(M) // S
    attn_bias = jnp.where(tok[:, None] == tok[None, :], 0.0, -1e30).astype(jnp.float32)

    args = (x.reshape(M, D), h.reshape(M, D), attn_bias,
            params["w_qkv"], params["b_qkv"], params["w_o"], params["b_o"],
            params["ln1_g"], params["ln1_b"],
            params["w1"], params["b1"], params["w2"], params["b2"],
            params["ln2_g"], params["ln2_b"])

    flops = DEPTH * (2 * M * D * 3 * INNER
                     + HEADS * (4 * M * M * DIM_HEAD + 2 * M * DIM_HEAD * D)
                     + 4 * M * D * MLP_DIM)
    transcendentals = DEPTH * (HEADS * M * M + M * MLP_DIM)
    bytes_accessed = sum(a.size * a.dtype.itemsize for a in args) + M * D * 4

    out = pl.pallas_call(
        _trans_depth_kernel,
        out_shape=jax.ShapeDtypeStruct((M, D), jnp.float32),
        in_specs=[pl.BlockSpec(memory_space=pltpu.MemorySpace.VMEM)] * len(args),
        out_specs=pl.BlockSpec(memory_space=pltpu.MemorySpace.VMEM),
        cost_estimate=pl.CostEstimate(flops=flops,
                                      transcendentals=transcendentals,
                                      bytes_accessed=bytes_accessed),
    )(*args)
    return out.reshape(B, S, D)


# ---------------------------------------------------------------------------
# Parameter construction (deterministic, synthetic; matmul weights in bf16,
# stacked with a leading DEPTH axis so the whole stack is one VMEM block)
# ---------------------------------------------------------------------------
def _linear(key, fan_in, fan_out, w_dtype=jnp.bfloat16):
    wk, bk = jax.random.split(key)
    w = (jax.random.normal(wk, (fan_in, fan_out), jnp.float32)
         / jnp.sqrt(jnp.float32(fan_in))).astype(w_dtype)
    b = 0.01 * jax.random.normal(bk, (1, fan_out), jnp.float32)
    return w, b


def _init_block(key):
    ks = jax.random.split(key, 4)
    w_qkv, b_qkv = _linear(ks[0], DIM, 3 * INNER)
    # out-projection stored per head (HEADS, DIM_HEAD, DIM) in f32 so the kernel
    # can grab clean (8, 32) slabs without packed-sublane slicing.
    w_o, b_o = _linear(ks[1], INNER, DIM, w_dtype=jnp.float32)
    w_o = w_o.reshape(HEADS, DIM_HEAD, DIM)
    w1, b1 = _linear(ks[2], DIM, MLP_DIM)
    w2, b2 = _linear(ks[3], MLP_DIM, DIM)
    ones = jnp.ones((1, DIM), jnp.float32)
    zeros = jnp.zeros((1, DIM), jnp.float32)
    return {"w_qkv": w_qkv, "b_qkv": b_qkv,
            "w_o": w_o, "b_o": b_o,
            "ln1_g": ones, "ln1_b": zeros,
            "w1": w1, "b1": b1, "w2": w2, "b2": b2,
            "ln2_g": ones, "ln2_b": zeros}


def init_params(key):
    layers = [_init_block(k) for k in jax.random.split(key, DEPTH)]
    return {name: jnp.stack([lyr[name] for lyr in layers], axis=0)
            for name in layers[0]}


# ---------------------------------------------------------------------------
if __name__ == "__main__":
    key = jax.random.PRNGKey(0)
    pkey, xkey = jax.random.split(key)
    params = init_params(pkey)
    x = jax.random.normal(xkey, (BATCH, SEQ, 2 * DIM), jnp.float32)

    fwd = jax.jit(forward)
    out = jax.block_until_ready(fwd(params, x))

    assert out.shape == (BATCH, SEQ, DIM), out.shape
    assert bool(jnp.all(jnp.isfinite(out)))
    print("KERNEL_OK")
</pallas_src>

<mosaic_0001>
module attributes {stable_mosaic.version = 11 : i64} {
  func.func @_trans_depth_kernel(%arg0: memref<32x32xf32, #tpu.memory_space<vmem>>, %arg1: memref<32x32xf32, #tpu.memory_space<vmem>>, %arg2: memref<32x32xf32, #tpu.memory_space<vmem>>, %arg3: memref<2x32x96xbf16, #tpu.memory_space<vmem>>, %arg4: memref<2x1x96xf32, #tpu.memory_space<vmem>>, %arg5: memref<2x4x8x32xf32, #tpu.memory_space<vmem>>, %arg6: memref<2x1x32xf32, #tpu.memory_space<vmem>>, %arg7: memref<2x1x32xf32, #tpu.memory_space<vmem>>, %arg8: memref<2x1x32xf32, #tpu.memory_space<vmem>>, %arg9: memref<2x32x64xbf16, #tpu.memory_space<vmem>>, %arg10: memref<2x1x64xf32, #tpu.memory_space<vmem>>, %arg11: memref<2x64x32xbf16, #tpu.memory_space<vmem>>, %arg12: memref<2x1x32xf32, #tpu.memory_space<vmem>>, %arg13: memref<2x1x32xf32, #tpu.memory_space<vmem>>, %arg14: memref<2x1x32xf32, #tpu.memory_space<vmem>>, %arg15: memref<32x32xf32, #tpu.memory_space<vmem>>) attributes {dimension_semantics = [], scalar_prefetch = 0 : i64, scratch_operands = 0 : i64, tpu.core_type = #tpu.core_type<tc>} {
    %c0 = arith.constant 0 : index
    %c0_0 = arith.constant 0 : index
    %0 = vector.load %arg0[%c0, %c0_0] : memref<32x32xf32, #tpu.memory_space<vmem>>, vector<32x32xf32>
    %c0_1 = arith.constant 0 : index
    %c0_2 = arith.constant 0 : index
    %1 = vector.load %arg1[%c0_1, %c0_2] : memref<32x32xf32, #tpu.memory_space<vmem>>, vector<32x32xf32>
    %c0_3 = arith.constant 0 : index
    %c0_4 = arith.constant 0 : index
    %2 = vector.load %arg2[%c0_3, %c0_4] : memref<32x32xf32, #tpu.memory_space<vmem>>, vector<32x32xf32>
    %3 = arith.truncf %0 : vector<32x32xf32> to vector<32x32xbf16>
    %c0_5 = arith.constant 0 : index
    %c0_6 = arith.constant 0 : index
    %c0_7 = arith.constant 0 : index
    %4 = vector.load %arg3[%c0_5, %c0_6, %c0_7] : memref<2x32x96xbf16, #tpu.memory_space<vmem>>, vector<1x32x96xbf16>
    %5 = vector.shape_cast %4 : vector<1x32x96xbf16> to vector<32x96xbf16>
    %cst = arith.constant dense<0.000000e+00> : vector<32x96xf32>
    %6 = tpu.matmul %3, %5, %cst {dimension_numbers = #tpu.dot_dimension_numbers<[1], [0], [0], [1], [0, 0, 1, 1], [], []>} : vector<32x32xbf16>, vector<32x96xbf16>, vector<32x96xf32> -> vector<32x96xf32>
    %c0_8 = arith.constant 0 : index
    %c0_9 = arith.constant 0 : index
    %c0_10 = arith.constant 0 : index
    %7 = vector.load %arg4[%c0_8, %c0_9, %c0_10] : memref<2x1x96xf32, #tpu.memory_space<vmem>>, vector<1x1x96xf32>
    %8 = vector.shape_cast %7 : vector<1x1x96xf32> to vector<1x96xf32>
    %9 = vector.broadcast %8 : vector<1x96xf32> to vector<32x96xf32>
    %10 = arith.addf %6, %9 : vector<32x96xf32>
    %cst_11 = arith.constant 0.000000e+00 : f32
    %11 = vector.broadcast %cst_11 : f32 to vector<32x32xf32>
    %12 = vector.extract_strided_slice %10 {offsets = [0, 0], sizes = [32, 8], strides = [1, 1]} : vector<32x96xf32> to vector<32x8xf32>
    %13 = arith.truncf %12 : vector<32x8xf32> to vector<32x8xbf16>
    %14 = vector.extract_strided_slice %10 {offsets = [0, 32], sizes = [32, 8], strides = [1, 1]} : vector<32x96xf32> to vector<32x8xf32>
    %15 = arith.truncf %14 : vector<32x8xf32> to vector<32x8xbf16>
    %16 = vector.extract_strided_slice %10 {offsets = [0, 64], sizes = [32, 8], strides = [1, 1]} : vector<32x96xf32> to vector<32x8xf32>
    %17 = arith.truncf %16 : vector<32x8xf32> to vector<32x8xbf16>
    %cst_12 = arith.constant dense<0.000000e+00> : vector<32x32xf32>
    %18 = tpu.matmul %13, %15, %cst_12 {dimension_numbers = #tpu.dot_dimension_numbers<[1], [1], [0], [0], [0, 0, 1, 0], [], []>} : vector<32x8xbf16>, vector<32x8xbf16>, vector<32x32xf32> -> vector<32x32xf32>
    %cst_13 = arith.constant 0.353553385 : f32
    %19 = vector.broadcast %cst_13 : f32 to vector<32x32xf32>
    %20 = arith.mulf %18, %19 : vector<32x32xf32>
    %21 = arith.addf %20, %2 : vector<32x32xf32>
    %cst_14 = arith.constant dense<0xFF800000> : vector<32xf32>
    %22 = vector.multi_reduction <maximumf>, %21, %cst_14 [1] : vector<32x32xf32> to vector<32xf32>
    %23 = vector.shape_cast %22 : vector<32xf32> to vector<32x1xf32>
    %24 = vector.broadcast %23 : vector<32x1xf32> to vector<32x32xf32>
    %25 = arith.subf %21, %24 : vector<32x32xf32>
    %26 = math.exp %25 : vector<32x32xf32>
    %cst_15 = arith.constant dense<0.000000e+00> : vector<32xf32>
    %27 = vector.multi_reduction <add>, %26, %cst_15 [1] : vector<32x32xf32> to vector<32xf32>
    %28 = vector.shape_cast %27 : vector<32xf32> to vector<32x1xf32>
    %29 = vector.broadcast %28 : vector<32x1xf32> to vector<32x32xf32>
    %30 = arith.divf %26, %29 : vector<32x32xf32>
    %31 = arith.truncf %30 : vector<32x32xf32> to vector<32x32xbf16>
    %cst_16 = arith.constant dense<0.000000e+00> : vector<32x8xf32>
    %32 = tpu.matmul %31, %17, %cst_16 {dimension_numbers = #tpu.dot_dimension_numbers<[1], [0], [0], [1], [0, 0, 1, 1], [], []>} : vector<32x32xbf16>, vector<32x8xbf16>, vector<32x8xf32> -> vector<32x8xf32>
    %33 = arith.truncf %32 : vector<32x8xf32> to vector<32x8xbf16>
    %c0_17 = arith.constant 0 : index
    %c0_18 = arith.constant 0 : index
    %c0_19 = arith.constant 0 : index
    %c0_20 = arith.constant 0 : index
    %34 = vector.load %arg5[%c0_17, %c0_18, %c0_19, %c0_20] : memref<2x4x8x32xf32, #tpu.memory_space<vmem>>, vector<1x1x8x32xf32>
    %35 = vector.shape_cast %34 : vector<1x1x8x32xf32> to vector<8x32xf32>
    %36 = arith.truncf %35 : vector<8x32xf32> to vector<8x32xbf16>
    %cst_21 = arith.constant dense<0.000000e+00> : vector<32x32xf32>
    %37 = tpu.matmul %33, %36, %cst_21 {dimension_numbers = #tpu.dot_dimension_numbers<[1], [0], [0], [1], [0, 0, 1, 1], [], []>} : vector<32x8xbf16>, vector<8x32xbf16>, vector<32x32xf32> -> vector<32x32xf32>
    %38 = arith.addf %11, %37 : vector<32x32xf32>
    %39 = vector.extract_strided_slice %10 {offsets = [0, 8], sizes = [32, 8], strides = [1, 1]} : vector<32x96xf32> to vector<32x8xf32>
    %40 = arith.truncf %39 : vector<32x8xf32> to vector<32x8xbf16>
    %41 = vector.extract_strided_slice %10 {offsets = [0, 40], sizes = [32, 8], strides = [1, 1]} : vector<32x96xf32> to vector<32x8xf32>
    %42 = arith.truncf %41 : vector<32x8xf32> to vector<32x8xbf16>
    %43 = vector.extract_strided_slice %10 {offsets = [0, 72], sizes = [32, 8], strides = [1, 1]} : vector<32x96xf32> to vector<32x8xf32>
    %44 = arith.truncf %43 : vector<32x8xf32> to vector<32x8xbf16>
    %cst_22 = arith.constant dense<0.000000e+00> : vector<32x32xf32>
    %45 = tpu.matmul %40, %42, %cst_22 {dimension_numbers = #tpu.dot_dimension_numbers<[1], [1], [0], [0], [0, 0, 1, 0], [], []>} : vector<32x8xbf16>, vector<32x8xbf16>, vector<32x32xf32> -> vector<32x32xf32>
    %cst_23 = arith.constant 0.353553385 : f32
    %46 = vector.broadcast %cst_23 : f32 to vector<32x32xf32>
    %47 = arith.mulf %45, %46 : vector<32x32xf32>
    %48 = arith.addf %47, %2 : vector<32x32xf32>
    %cst_24 = arith.constant dense<0xFF800000> : vector<32xf32>
    %49 = vector.multi_reduction <maximumf>, %48, %cst_24 [1] : vector<32x32xf32> to vector<32xf32>
    %50 = vector.shape_cast %49 : vector<32xf32> to vector<32x1xf32>
    %51 = vector.broadcast %50 : vector<32x1xf32> to vector<32x32xf32>
    %52 = arith.subf %48, %51 : vector<32x32xf32>
    %53 = math.exp %52 : vector<32x32xf32>
    %cst_25 = arith.constant dense<0.000000e+00> : vector<32xf32>
    %54 = vector.multi_reduction <add>, %53, %cst_25 [1] : vector<32x32xf32> to vector<32xf32>
    %55 = vector.shape_cast %54 : vector<32xf32> to vector<32x1xf32>
    %56 = vector.broadcast %55 : vector<32x1xf32> to vector<32x32xf32>
    %57 = arith.divf %53, %56 : vector<32x32xf32>
    %58 = arith.truncf %57 : vector<32x32xf32> to vector<32x32xbf16>
    %cst_26 = arith.constant dense<0.000000e+00> : vector<32x8xf32>
    %59 = tpu.matmul %58, %44, %cst_26 {dimension_numbers = #tpu.dot_dimension_numbers<[1], [0], [0], [1], [0, 0, 1, 1], [], []>} : vector<32x32xbf16>, vector<32x8xbf16>, vector<32x8xf32> -> vector<32x8xf32>
    %60 = arith.truncf %59 : vector<32x8xf32> to vector<32x8xbf16>
    %c0_27 = arith.constant 0 : index
    %c1 = arith.constant 1 : index
    %c0_28 = arith.constant 0 : index
    %c0_29 = arith.constant 0 : index
    %61 = vector.load %arg5[%c0_27, %c1, %c0_28, %c0_29] : memref<2x4x8x32xf32, #tpu.memory_space<vmem>>, vector<1x1x8x32xf32>
    %62 = vector.shape_cast %61 : vector<1x1x8x32xf32> to vector<8x32xf32>
    %63 = arith.truncf %62 : vector<8x32xf32> to vector<8x32xbf16>
    %cst_30 = arith.constant dense<0.000000e+00> : vector<32x32xf32>
    %64 = tpu.matmul %60, %63, %cst_30 {dimension_numbers = #tpu.dot_dimension_numbers<[1], [0], [0], [1], [0, 0, 1, 1], [], []>} : vector<32x8xbf16>, vector<8x32xbf16>, vector<32x32xf32> -> vector<32x32xf32>
    %65 = arith.addf %38, %64 : vector<32x32xf32>
    %66 = vector.extract_strided_slice %10 {offsets = [0, 16], sizes = [32, 8], strides = [1, 1]} : vector<32x96xf32> to vector<32x8xf32>
    %67 = arith.truncf %66 : vector<32x8xf32> to vector<32x8xbf16>
    %68 = vector.extract_strided_slice %10 {offsets = [0, 48], sizes = [32, 8], strides = [1, 1]} : vector<32x96xf32> to vector<32x8xf32>
    %69 = arith.truncf %68 : vector<32x8xf32> to vector<32x8xbf16>
    %70 = vector.extract_strided_slice %10 {offsets = [0, 80], sizes = [32, 8], strides = [1, 1]} : vector<32x96xf32> to vector<32x8xf32>
    %71 = arith.truncf %70 : vector<32x8xf32> to vector<32x8xbf16>
    %cst_31 = arith.constant dense<0.000000e+00> : vector<32x32xf32>
    %72 = tpu.matmul %67, %69, %cst_31 {dimension_numbers = #tpu.dot_dimension_numbers<[1], [1], [0], [0], [0, 0, 1, 0], [], []>} : vector<32x8xbf16>, vector<32x8xbf16>, vector<32x32xf32> -> vector<32x32xf32>
    %cst_32 = arith.constant 0.353553385 : f32
    %73 = vector.broadcast %cst_32 : f32 to vector<32x32xf32>
    %74 = arith.mulf %72, %73 : vector<32x32xf32>
    %75 = arith.addf %74, %2 : vector<32x32xf32>
    %cst_33 = arith.constant dense<0xFF800000> : vector<32xf32>
    %76 = vector.multi_reduction <maximumf>, %75, %cst_33 [1] : vector<32x32xf32> to vector<32xf32>
    %77 = vector.shape_cast %76 : vector<32xf32> to vector<32x1xf32>
    %78 = vector.broadcast %77 : vector<32x1xf32> to vector<32x32xf32>
    %79 = arith.subf %75, %78 : vector<32x32xf32>
    %80 = math.exp %79 : vector<32x32xf32>
    %cst_34 = arith.constant dense<0.000000e+00> : vector<32xf32>
    %81 = vector.multi_reduction <add>, %80, %cst_34 [1] : vector<32x32xf32> to vector<32xf32>
    %82 = vector.shape_cast %81 : vector<32xf32> to vector<32x1xf32>
    %83 = vector.broadcast %82 : vector<32x1xf32> to vector<32x32xf32>
    %84 = arith.divf %80, %83 : vector<32x32xf32>
    %85 = arith.truncf %84 : vector<32x32xf32> to vector<32x32xbf16>
    %cst_35 = arith.constant dense<0.000000e+00> : vector<32x8xf32>
    %86 = tpu.matmul %85, %71, %cst_35 {dimension_numbers = #tpu.dot_dimension_numbers<[1], [0], [0], [1], [0, 0, 1, 1], [], []>} : vector<32x32xbf16>, vector<32x8xbf16>, vector<32x8xf32> -> vector<32x8xf32>
    %87 = arith.truncf %86 : vector<32x8xf32> to vector<32x8xbf16>
    %c0_36 = arith.constant 0 : index
    %c2 = arith.constant 2 : index
    %c0_37 = arith.constant 0 : index
    %c0_38 = arith.constant 0 : index
    %88 = vector.load %arg5[%c0_36, %c2, %c0_37, %c0_38] : memref<2x4x8x32xf32, #tpu.memory_space<vmem>>, vector<1x1x8x32xf32>
    %89 = vector.shape_cast %88 : vector<1x1x8x32xf32> to vector<8x32xf32>
    %90 = arith.truncf %89 : vector<8x32xf32> to vector<8x32xbf16>
    %cst_39 = arith.constant dense<0.000000e+00> : vector<32x32xf32>
    %91 = tpu.matmul %87, %90, %cst_39 {dimension_numbers = #tpu.dot_dimension_numbers<[1], [0], [0], [1], [0, 0, 1, 1], [], []>} : vector<32x8xbf16>, vector<8x32xbf16>, vector<32x32xf32> -> vector<32x32xf32>
    %92 = arith.addf %65, %91 : vector<32x32xf32>
    %93 = vector.extract_strided_slice %10 {offsets = [0, 24], sizes = [32, 8], strides = [1, 1]} : vector<32x96xf32> to vector<32x8xf32>
    %94 = arith.truncf %93 : vector<32x8xf32> to vector<32x8xbf16>
    %95 = vector.extract_strided_slice %10 {offsets = [0, 56], sizes = [32, 8], strides = [1, 1]} : vector<32x96xf32> to vector<32x8xf32>
    %96 = arith.truncf %95 : vector<32x8xf32> to vector<32x8xbf16>
    %97 = vector.extract_strided_slice %10 {offsets = [0, 88], sizes = [32, 8], strides = [1, 1]} : vector<32x96xf32> to vector<32x8xf32>
    %98 = arith.truncf %97 : vector<32x8xf32> to vector<32x8xbf16>
    %cst_40 = arith.constant dense<0.000000e+00> : vector<32x32xf32>
    %99 = tpu.matmul %94, %96, %cst_40 {dimension_numbers = #tpu.dot_dimension_numbers<[1], [1], [0], [0], [0, 0, 1, 0], [], []>} : vector<32x8xbf16>, vector<32x8xbf16>, vector<32x32xf32> -> vector<32x32xf32>
    %cst_41 = arith.constant 0.353553385 : f32
    %100 = vector.broadcast %cst_41 : f32 to vector<32x32xf32>
    %101 = arith.mulf %99, %100 : vector<32x32xf32>
    %102 = arith.addf %101, %2 : vector<32x32xf32>
    %cst_42 = arith.constant dense<0xFF800000> : vector<32xf32>
    %103 = vector.multi_reduction <maximumf>, %102, %cst_42 [1] : vector<32x32xf32> to vector<32xf32>
    %104 = vector.shape_cast %103 : vector<32xf32> to vector<32x1xf32>
    %105 = vector.broadcast %104 : vector<32x1xf32> to vector<32x32xf32>
    %106 = arith.subf %102, %105 : vector<32x32xf32>
    %107 = math.exp %106 : vector<32x32xf32>
    %cst_43 = arith.constant dense<0.000000e+00> : vector<32xf32>
    %108 = vector.multi_reduction <add>, %107, %cst_43 [1] : vector<32x32xf32> to vector<32xf32>
    %109 = vector.shape_cast %108 : vector<32xf32> to vector<32x1xf32>
    %110 = vector.broadcast %109 : vector<32x1xf32> to vector<32x32xf32>
    %111 = arith.divf %107, %110 : vector<32x32xf32>
    %112 = arith.truncf %111 : vector<32x32xf32> to vector<32x32xbf16>
    %cst_44 = arith.constant dense<0.000000e+00> : vector<32x8xf32>
    %113 = tpu.matmul %112, %98, %cst_44 {dimension_numbers = #tpu.dot_dimension_numbers<[1], [0], [0], [1], [0, 0, 1, 1], [], []>} : vector<32x32xbf16>, vector<32x8xbf16>, vector<32x8xf32> -> vector<32x8xf32>
    %114 = arith.truncf %113 : vector<32x8xf32> to vector<32x8xbf16>
    %c0_45 = arith.constant 0 : index
    %c3 = arith.constant 3 : index
    %c0_46 = arith.constant 0 : index
    %c0_47 = arith.constant 0 : index
    %115 = vector.load %arg5[%c0_45, %c3, %c0_46, %c0_47] : memref<2x4x8x32xf32, #tpu.memory_space<vmem>>, vector<1x1x8x32xf32>
    %116 = vector.shape_cast %115 : vector<1x1x8x32xf32> to vector<8x32xf32>
    %117 = arith.truncf %116 : vector<8x32xf32> to vector<8x32xbf16>
    %cst_48 = arith.constant dense<0.000000e+00> : vector<32x32xf32>
    %118 = tpu.matmul %114, %117, %cst_48 {dimension_numbers = #tpu.dot_dimension_numbers<[1], [0], [0], [1], [0, 0, 1, 1], [], []>} : vector<32x8xbf16>, vector<8x32xbf16>, vector<32x32xf32> -> vector<32x32xf32>
    %119 = arith.addf %92, %118 : vector<32x32xf32>
    %c0_49 = arith.constant 0 : index
    %c0_50 = arith.constant 0 : index
    %c0_51 = arith.constant 0 : index
    %120 = vector.load %arg6[%c0_49, %c0_50, %c0_51] : memref<2x1x32xf32, #tpu.memory_space<vmem>>, vector<1x1x32xf32>
    %121 = vector.shape_cast %120 : vector<1x1x32xf32> to vector<1x32xf32>
    %122 = vector.broadcast %121 : vector<1x32xf32> to vector<32x32xf32>
    %123 = arith.addf %119, %122 : vector<32x32xf32>
    %cst_52 = arith.constant dense<0.000000e+00> : vector<32xf32>
    %124 = vector.multi_reduction <add>, %123, %cst_52 [1] : vector<32x32xf32> to vector<32xf32>
    %125 = vector.shape_cast %124 : vector<32xf32> to vector<32x1xf32>
    %cst_53 = arith.constant 3.200000e+01 : f32
    %126 = vector.broadcast %cst_53 : f32 to vector<32x1xf32>
    %127 = arith.divf %125, %126 : vector<32x1xf32>
    %128 = vector.broadcast %127 : vector<32x1xf32> to vector<32x32xf32>
    %129 = arith.subf %123, %128 : vector<32x32xf32>
    %130 = arith.mulf %129, %129 : vector<32x32xf32>
    %cst_54 = arith.constant dense<0.000000e+00> : vector<32xf32>
    %131 = vector.multi_reduction <add>, %130, %cst_54 [1] : vector<32x32xf32> to vector<32xf32>
    %132 = vector.shape_cast %131 : vector<32xf32> to vector<32x1xf32>
    %cst_55 = arith.constant 3.200000e+01 : f32
    %133 = vector.broadcast %cst_55 : f32 to vector<32x1xf32>
    %134 = arith.divf %132, %133 : vector<32x1xf32>
    %135 = vector.broadcast %127 : vector<32x1xf32> to vector<32x32xf32>
    %136 = arith.subf %123, %135 : vector<32x32xf32>
    %cst_56 = arith.constant 9.99999974E-6 : f32
    %137 = vector.broadcast %cst_56 : f32 to vector<32x1xf32>
    %138 = arith.addf %134, %137 : vector<32x1xf32>
    %139 = math.rsqrt %138 : vector<32x1xf32>
    %140 = vector.broadcast %139 : vector<32x1xf32> to vector<32x32xf32>
    %141 = arith.mulf %136, %140 : vector<32x32xf32>
    %c0_57 = arith.constant 0 : index
    %c0_58 = arith.constant 0 : index
    %c0_59 = arith.constant 0 : index
    %142 = vector.load %arg7[%c0_57, %c0_58, %c0_59] : memref<2x1x32xf32, #tpu.memory_space<vmem>>, vector<1x1x32xf32>
    %143 = vector.shape_cast %142 : vector<1x1x32xf32> to vector<1x32xf32>
    %144 = vector.broadcast %143 : vector<1x32xf32> to vector<32x32xf32>
    %145 = arith.mulf %141, %144 : vector<32x32xf32>
    %c0_60 = arith.constant 0 : index
    %c0_61 = arith.constant 0 : index
    %c0_62 = arith.constant 0 : index
    %146 = vector.load %arg8[%c0_60, %c0_61, %c0_62] : memref<2x1x32xf32, #tpu.memory_space<vmem>>, vector<1x1x32xf32>
    %147 = vector.shape_cast %146 : vector<1x1x32xf32> to vector<1x32xf32>
    %148 = vector.broadcast %147 : vector<1x32xf32> to vector<32x32xf32>
    %149 = arith.addf %145, %148 : vector<32x32xf32>
    %150 = arith.addf %149, %0 : vector<32x32xf32>
    %151 = arith.addf %150, %1 : vector<32x32xf32>
    %152 = arith.truncf %151 : vector<32x32xf32> to vector<32x32xbf16>
    %c0_63 = arith.constant 0 : index
    %c0_64 = arith.constant 0 : index
    %c0_65 = arith.constant 0 : index
    %153 = vector.load %arg9[%c0_63, %c0_64, %c0_65] : memref<2x32x64xbf16, #tpu.memory_space<vmem>>, vector<1x32x64xbf16>
    %154 = vector.shape_cast %153 : vector<1x32x64xbf16> to vector<32x64xbf16>
    %cst_66 = arith.constant dense<0.000000e+00> : vector<32x64xf32>
    %155 = tpu.matmul %152, %154, %cst_66 {dimension_numbers = #tpu.dot_dimension_numbers<[1], [0], [0], [1], [0, 0, 1, 1], [], []>} : vector<32x32xbf16>, vector<32x64xbf16>, vector<32x64xf32> -> vector<32x64xf32>
    %c0_67 = arith.constant 0 : index
    %c0_68 = arith.constant 0 : index
    %c0_69 = arith.constant 0 : index
    %156 = vector.load %arg10[%c0_67, %c0_68, %c0_69] : memref<2x1x64xf32, #tpu.memory_space<vmem>>, vector<1x1x64xf32>
    %157 = vector.shape_cast %156 : vector<1x1x64xf32> to vector<1x64xf32>
    %158 = vector.broadcast %157 : vector<1x64xf32> to vector<32x64xf32>
    %159 = arith.addf %155, %158 : vector<32x64xf32>
    %160 = arith.mulf %159, %159 : vector<32x64xf32>
    %161 = arith.mulf %159, %160 : vector<32x64xf32>
    %cst_70 = arith.constant 4.471500e-02 : f32
    %162 = vector.broadcast %cst_70 : f32 to vector<32x64xf32>
    %163 = arith.mulf %162, %161 : vector<32x64xf32>
    %164 = arith.addf %159, %163 : vector<32x64xf32>
    %cst_71 = arith.constant 0.797884583 : f32
    %165 = vector.broadcast %cst_71 : f32 to vector<32x64xf32>
    %166 = arith.mulf %165, %164 : vector<32x64xf32>
    %167 = math.tanh %166 : vector<32x64xf32>
    %cst_72 = arith.constant 1.000000e+00 : f32
    %168 = vector.broadcast %cst_72 : f32 to vector<32x64xf32>
    %169 = arith.addf %168, %167 : vector<32x64xf32>
    %cst_73 = arith.constant 5.000000e-01 : f32
    %170 = vector.broadcast %cst_73 : f32 to vector<32x64xf32>
    %171 = arith.mulf %170, %169 : vector<32x64xf32>
    %172 = arith.mulf %159, %171 : vector<32x64xf32>
    %173 = arith.truncf %172 : vector<32x64xf32> to vector<32x64xbf16>
    %c0_74 = arith.constant 0 : index
    %c0_75 = arith.constant 0 : index
    %c0_76 = arith.constant 0 : index
    %174 = vector.load %arg11[%c0_74, %c0_75, %c0_76] : memref<2x64x32xbf16, #tpu.memory_space<vmem>>, vector<1x64x32xbf16>
    %175 = vector.shape_cast %174 : vector<1x64x32xbf16> to vector<64x32xbf16>
    %cst_77 = arith.constant dense<0.000000e+00> : vector<32x32xf32>
    %176 = tpu.matmul %173, %175, %cst_77 {dimension_numbers = #tpu.dot_dimension_numbers<[1], [0], [0], [1], [0, 0, 1, 1], [], []>} : vector<32x64xbf16>, vector<64x32xbf16>, vector<32x32xf32> -> vector<32x32xf32>
    %c0_78 = arith.constant 0 : index
    %c0_79 = arith.constant 0 : index
    %c0_80 = arith.constant 0 : index
    %177 = vector.load %arg12[%c0_78, %c0_79, %c0_80] : memref<2x1x32xf32, #tpu.memory_space<vmem>>, vector<1x1x32xf32>
    %178 = vector.shape_cast %177 : vector<1x1x32xf32> to vector<1x32xf32>
    %179 = vector.broadcast %178 : vector<1x32xf32> to vector<32x32xf32>
    %180 = arith.addf %176, %179 : vector<32x32xf32>
    %cst_81 = arith.constant dense<0.000000e+00> : vector<32xf32>
    %181 = vector.multi_reduction <add>, %180, %cst_81 [1] : vector<32x32xf32> to vector<32xf32>
    %182 = vector.shape_cast %181 : vector<32xf32> to vector<32x1xf32>
    %cst_82 = arith.constant 3.200000e+01 : f32
    %183 = vector.broadcast %cst_82 : f32 to vector<32x1xf32>
    %184 = arith.divf %182, %183 : vector<32x1xf32>
    %185 = vector.broadcast %184 : vector<32x1xf32> to vector<32x32xf32>
    %186 = arith.subf %180, %185 : vector<32x32xf32>
    %187 = arith.mulf %186, %186 : vector<32x32xf32>
    %cst_83 = arith.constant dense<0.000000e+00> : vector<32xf32>
    %188 = vector.multi_reduction <add>, %187, %cst_83 [1] : vector<32x32xf32> to vector<32xf32>
    %189 = vector.shape_cast %188 : vector<32xf32> to vector<32x1xf32>
    %cst_84 = arith.constant 3.200000e+01 : f32
    %190 = vector.broadcast %cst_84 : f32 to vector<32x1xf32>
    %191 = arith.divf %189, %190 : vector<32x1xf32>
    %192 = vector.broadcast %184 : vector<32x1xf32> to vector<32x32xf32>
    %193 = arith.subf %180, %192 : vector<32x32xf32>
    %cst_85 = arith.constant 9.99999974E-6 : f32
    %194 = vector.broadcast %cst_85 : f32 to vector<32x1xf32>
    %195 = arith.addf %191, %194 : vector<32x1xf32>
    %196 = math.rsqrt %195 : vector<32x1xf32>
    %197 = vector.broadcast %196 : vector<32x1xf32> to vector<32x32xf32>
    %198 = arith.mulf %193, %197 : vector<32x32xf32>
    %c0_86 = arith.constant 0 : index
    %c0_87 = arith.constant 0 : index
    %c0_88 = arith.constant 0 : index
    %199 = vector.load %arg13[%c0_86, %c0_87, %c0_88] : memref<2x1x32xf32, #tpu.memory_space<vmem>>, vector<1x1x32xf32>
    %200 = vector.shape_cast %199 : vector<1x1x32xf32> to vector<1x32xf32>
    %201 = vector.broadcast %200 : vector<1x32xf32> to vector<32x32xf32>
    %202 = arith.mulf %198, %201 : vector<32x32xf32>
    %c0_89 = arith.constant 0 : index
    %c0_90 = arith.constant 0 : index
    %c0_91 = arith.constant 0 : index
    %203 = vector.load %arg14[%c0_89, %c0_90, %c0_91] : memref<2x1x32xf32, #tpu.memory_space<vmem>>, vector<1x1x32xf32>
    %204 = vector.shape_cast %203 : vector<1x1x32xf32> to vector<1x32xf32>
    %205 = vector.broadcast %204 : vector<1x32xf32> to vector<32x32xf32>
    %206 = arith.addf %202, %205 : vector<32x32xf32>
    %207 = arith.addf %206, %151 : vector<32x32xf32>
    %208 = arith.truncf %207 : vector<32x32xf32> to vector<32x32xbf16>
    %c1_92 = arith.constant 1 : index
    %c0_93 = arith.constant 0 : index
    %c0_94 = arith.constant 0 : index
    %209 = vector.load %arg3[%c1_92, %c0_93, %c0_94] : memref<2x32x96xbf16, #tpu.memory_space<vmem>>, vector<1x32x96xbf16>
    %210 = vector.shape_cast %209 : vector<1x32x96xbf16> to vector<32x96xbf16>
    %cst_95 = arith.constant dense<0.000000e+00> : vector<32x96xf32>
    %211 = tpu.matmul %208, %210, %cst_95 {dimension_numbers = #tpu.dot_dimension_numbers<[1], [0], [0], [1], [0, 0, 1, 1], [], []>} : vector<32x32xbf16>, vector<32x96xbf16>, vector<32x96xf32> -> vector<32x96xf32>
    %c1_96 = arith.constant 1 : index
    %c0_97 = arith.constant 0 : index
    %c0_98 = arith.constant 0 : index
    %212 = vector.load %arg4[%c1_96, %c0_97, %c0_98] : memref<2x1x96xf32, #tpu.memory_space<vmem>>, vector<1x1x96xf32>
    %213 = vector.shape_cast %212 : vector<1x1x96xf32> to vector<1x96xf32>
    %214 = vector.broadcast %213 : vector<1x96xf32> to vector<32x96xf32>
    %215 = arith.addf %211, %214 : vector<32x96xf32>
    %cst_99 = arith.constant 0.000000e+00 : f32
    %216 = vector.broadcast %cst_99 : f32 to vector<32x32xf32>
    %217 = vector.extract_strided_slice %215 {offsets = [0, 0], sizes = [32, 8], strides = [1, 1]} : vector<32x96xf32> to vector<32x8xf32>
    %218 = arith.truncf %217 : vector<32x8xf32> to vector<32x8xbf16>
    %219 = vector.extract_strided_slice %215 {offsets = [0, 32], sizes = [32, 8], strides = [1, 1]} : vector<32x96xf32> to vector<32x8xf32>
    %220 = arith.truncf %219 : vector<32x8xf32> to vector<32x8xbf16>
    %221 = vector.extract_strided_slice %215 {offsets = [0, 64], sizes = [32, 8], strides = [1, 1]} : vector<32x96xf32> to vector<32x8xf32>
    %222 = arith.truncf %221 : vector<32x8xf32> to vector<32x8xbf16>
    %cst_100 = arith.constant dense<0.000000e+00> : vector<32x32xf32>
    %223 = tpu.matmul %218, %220, %cst_100 {dimension_numbers = #tpu.dot_dimension_numbers<[1], [1], [0], [0], [0, 0, 1, 0], [], []>} : vector<32x8xbf16>, vector<32x8xbf16>, vector<32x32xf32> -> vector<32x32xf32>
    %cst_101 = arith.constant 0.353553385 : f32
    %224 = vector.broadcast %cst_101 : f32 to vector<32x32xf32>
    %225 = arith.mulf %223, %224 : vector<32x32xf32>
    %226 = arith.addf %225, %2 : vector<32x32xf32>
    %cst_102 = arith.constant dense<0xFF800000> : vector<32xf32>
    %227 = vector.multi_reduction <maximumf>, %226, %cst_102 [1] : vector<32x32xf32> to vector<32xf32>
    %228 = vector.shape_cast %227 : vector<32xf32> to vector<32x1xf32>
    %229 = vector.broadcast %228 : vector<32x1xf32> to vector<32x32xf32>
    %230 = arith.subf %226, %229 : vector<32x32xf32>
    %231 = math.exp %230 : vector<32x32xf32>
    %cst_103 = arith.constant dense<0.000000e+00> : vector<32xf32>
    %232 = vector.multi_reduction <add>, %231, %cst_103 [1] : vector<32x32xf32> to vector<32xf32>
    %233 = vector.shape_cast %232 : vector<32xf32> to vector<32x1xf32>
    %234 = vector.broadcast %233 : vector<32x1xf32> to vector<32x32xf32>
    %235 = arith.divf %231, %234 : vector<32x32xf32>
    %236 = arith.truncf %235 : vector<32x32xf32> to vector<32x32xbf16>
    %cst_104 = arith.constant dense<0.000000e+00> : vector<32x8xf32>
    %237 = tpu.matmul %236, %222, %cst_104 {dimension_numbers = #tpu.dot_dimension_numbers<[1], [0], [0], [1], [0, 0, 1, 1], [], []>} : vector<32x32xbf16>, vector<32x8xbf16>, vector<32x8xf32> -> vector<32x8xf32>
    %238 = arith.truncf %237 : vector<32x8xf32> to vector<32x8xbf16>
    %c1_105 = arith.constant 1 : index
    %c0_106 = arith.constant 0 : index
    %c0_107 = arith.constant 0 : index
    %c0_108 = arith.constant 0 : index
    %239 = vector.load %arg5[%c1_105, %c0_106, %c0_107, %c0_108] : memref<2x4x8x32xf32, #tpu.memory_space<vmem>>, vector<1x1x8x32xf32>
    %240 = vector.shape_cast %239 : vector<1x1x8x32xf32> to vector<8x32xf32>
    %241 = arith.truncf %240 : vector<8x32xf32> to vector<8x32xbf16>
    %cst_109 = arith.constant dense<0.000000e+00> : vector<32x32xf32>
    %242 = tpu.matmul %238, %241, %cst_109 {dimension_numbers = #tpu.dot_dimension_numbers<[1], [0], [0], [1], [0, 0, 1, 1], [], []>} : vector<32x8xbf16>, vector<8x32xbf16>, vector<32x32xf32> -> vector<32x32xf32>
    %243 = arith.addf %216, %242 : vector<32x32xf32>
    %244 = vector.extract_strided_slice %215 {offsets = [0, 8], sizes = [32, 8], strides = [1, 1]} : vector<32x96xf32> to vector<32x8xf32>
    %245 = arith.truncf %244 : vector<32x8xf32> to vector<32x8xbf16>
    %246 = vector.extract_strided_slice %215 {offsets = [0, 40], sizes = [32, 8], strides = [1, 1]} : vector<32x96xf32> to vector<32x8xf32>
    %247 = arith.truncf %246 : vector<32x8xf32> to vector<32x8xbf16>
    %248 = vector.extract_strided_slice %215 {offsets = [0, 72], sizes = [32, 8], strides = [1, 1]} : vector<32x96xf32> to vector<32x8xf32>
    %249 = arith.truncf %248 : vector<32x8xf32> to vector<32x8xbf16>
    %cst_110 = arith.constant dense<0.000000e+00> : vector<32x32xf32>
    %250 = tpu.matmul %245, %247, %cst_110 {dimension_numbers = #tpu.dot_dimension_numbers<[1], [1], [0], [0], [0, 0, 1, 0], [], []>} : vector<32x8xbf16>, vector<32x8xbf16>, vector<32x32xf32> -> vector<32x32xf32>
    %cst_111 = arith.constant 0.353553385 : f32
    %251 = vector.broadcast %cst_111 : f32 to vector<32x32xf32>
    %252 = arith.mulf %250, %251 : vector<32x32xf32>
    %253 = arith.addf %252, %2 : vector<32x32xf32>
    %cst_112 = arith.constant dense<0xFF800000> : vector<32xf32>
    %254 = vector.multi_reduction <maximumf>, %253, %cst_112 [1] : vector<32x32xf32> to vector<32xf32>
    %255 = vector.shape_cast %254 : vector<32xf32> to vector<32x1xf32>
    %256 = vector.broadcast %255 : vector<32x1xf32> to vector<32x32xf32>
    %257 = arith.subf %253, %256 : vector<32x32xf32>
    %258 = math.exp %257 : vector<32x32xf32>
    %cst_113 = arith.constant dense<0.000000e+00> : vector<32xf32>
    %259 = vector.multi_reduction <add>, %258, %cst_113 [1] : vector<32x32xf32> to vector<32xf32>
    %260 = vector.shape_cast %259 : vector<32xf32> to vector<32x1xf32>
    %261 = vector.broadcast %260 : vector<32x1xf32> to vector<32x32xf32>
    %262 = arith.divf %258, %261 : vector<32x32xf32>
    %263 = arith.truncf %262 : vector<32x32xf32> to vector<32x32xbf16>
    %cst_114 = arith.constant dense<0.000000e+00> : vector<32x8xf32>
    %264 = tpu.matmul %263, %249, %cst_114 {dimension_numbers = #tpu.dot_dimension_numbers<[1], [0], [0], [1], [0, 0, 1, 1], [], []>} : vector<32x32xbf16>, vector<32x8xbf16>, vector<32x8xf32> -> vector<32x8xf32>
    %265 = arith.truncf %264 : vector<32x8xf32> to vector<32x8xbf16>
    %c1_115 = arith.constant 1 : index
    %c1_116 = arith.constant 1 : index
    %c0_117 = arith.constant 0 : index
    %c0_118 = arith.constant 0 : index
    %266 = vector.load %arg5[%c1_115, %c1_116, %c0_117, %c0_118] : memref<2x4x8x32xf32, #tpu.memory_space<vmem>>, vector<1x1x8x32xf32>
    %267 = vector.shape_cast %266 : vector<1x1x8x32xf32> to vector<8x32xf32>
    %268 = arith.truncf %267 : vector<8x32xf32> to vector<8x32xbf16>
    %cst_119 = arith.constant dense<0.000000e+00> : vector<32x32xf32>
    %269 = tpu.matmul %265, %268, %cst_119 {dimension_numbers = #tpu.dot_dimension_numbers<[1], [0], [0], [1], [0, 0, 1, 1], [], []>} : vector<32x8xbf16>, vector<8x32xbf16>, vector<32x32xf32> -> vector<32x32xf32>
    %270 = arith.addf %243, %269 : vector<32x32xf32>
    %271 = vector.extract_strided_slice %215 {offsets = [0, 16], sizes = [32, 8], strides = [1, 1]} : vector<32x96xf32> to vector<32x8xf32>
    %272 = arith.truncf %271 : vector<32x8xf32> to vector<32x8xbf16>
    %273 = vector.extract_strided_slice %215 {offsets = [0, 48], sizes = [32, 8], strides = [1, 1]} : vector<32x96xf32> to vector<32x8xf32>
    %274 = arith.truncf %273 : vector<32x8xf32> to vector<32x8xbf16>
    %275 = vector.extract_strided_slice %215 {offsets = [0, 80], sizes = [32, 8], strides = [1, 1]} : vector<32x96xf32> to vector<32x8xf32>
    %276 = arith.truncf %275 : vector<32x8xf32> to vector<32x8xbf16>
    %cst_120 = arith.constant dense<0.000000e+00> : vector<32x32xf32>
    %277 = tpu.matmul %272, %274, %cst_120 {dimension_numbers = #tpu.dot_dimension_numbers<[1], [1], [0], [0], [0, 0, 1, 0], [], []>} : vector<32x8xbf16>, vector<32x8xbf16>, vector<32x32xf32> -> vector<32x32xf32>
    %cst_121 = arith.constant 0.353553385 : f32
    %278 = vector.broadcast %cst_121 : f32 to vector<32x32xf32>
    %279 = arith.mulf %277, %278 : vector<32x32xf32>
    %280 = arith.addf %279, %2 : vector<32x32xf32>
    %cst_122 = arith.constant dense<0xFF800000> : vector<32xf32>
    %281 = vector.multi_reduction <maximumf>, %280, %cst_122 [1] : vector<32x32xf32> to vector<32xf32>
    %282 = vector.shape_cast %281 : vector<32xf32> to vector<32x1xf32>
    %283 = vector.broadcast %282 : vector<32x1xf32> to vector<32x32xf32>
    %284 = arith.subf %280, %283 : vector<32x32xf32>
    %285 = math.exp %284 : vector<32x32xf32>
    %cst_123 = arith.constant dense<0.000000e+00> : vector<32xf32>
    %286 = vector.multi_reduction <add>, %285, %cst_123 [1] : vector<32x32xf32> to vector<32xf32>
    %287 = vector.shape_cast %286 : vector<32xf32> to vector<32x1xf32>
    %288 = vector.broadcast %287 : vector<32x1xf32> to vector<32x32xf32>
    %289 = arith.divf %285, %288 : vector<32x32xf32>
    %290 = arith.truncf %289 : vector<32x32xf32> to vector<32x32xbf16>
    %cst_124 = arith.constant dense<0.000000e+00> : vector<32x8xf32>
    %291 = tpu.matmul %290, %276, %cst_124 {dimension_numbers = #tpu.dot_dimension_numbers<[1], [0], [0], [1], [0, 0, 1, 1], [], []>} : vector<32x32xbf16>, vector<32x8xbf16>, vector<32x8xf32> -> vector<32x8xf32>
    %292 = arith.truncf %291 : vector<32x8xf32> to vector<32x8xbf16>
    %c1_125 = arith.constant 1 : index
    %c2_126 = arith.constant 2 : index
    %c0_127 = arith.constant 0 : index
    %c0_128 = arith.constant 0 : index
    %293 = vector.load %arg5[%c1_125, %c2_126, %c0_127, %c0_128] : memref<2x4x8x32xf32, #tpu.memory_space<vmem>>, vector<1x1x8x32xf32>
    %294 = vector.shape_cast %293 : vector<1x1x8x32xf32> to vector<8x32xf32>
    %295 = arith.truncf %294 : vector<8x32xf32> to vector<8x32xbf16>
    %cst_129 = arith.constant dense<0.000000e+00> : vector<32x32xf32>
    %296 = tpu.matmul %292, %295, %cst_129 {dimension_numbers = #tpu.dot_dimension_numbers<[1], [0], [0], [1], [0, 0, 1, 1], [], []>} : vector<32x8xbf16>, vector<8x32xbf16>, vector<32x32xf32> -> vector<32x32xf32>
    %297 = arith.addf %270, %296 : vector<32x32xf32>
    %298 = vector.extract_strided_slice %215 {offsets = [0, 24], sizes = [32, 8], strides = [1, 1]} : vector<32x96xf32> to vector<32x8xf32>
    %299 = arith.truncf %298 : vector<32x8xf32> to vector<32x8xbf16>
    %300 = vector.extract_strided_slice %215 {offsets = [0, 56], sizes = [32, 8], strides = [1, 1]} : vector<32x96xf32> to vector<32x8xf32>
    %301 = arith.truncf %300 : vector<32x8xf32> to vector<32x8xbf16>
    %302 = vector.extract_strided_slice %215 {offsets = [0, 88], sizes = [32, 8], strides = [1, 1]} : vector<32x96xf32> to vector<32x8xf32>
    %303 = arith.truncf %302 : vector<32x8xf32> to vector<32x8xbf16>
    %cst_130 = arith.constant dense<0.000000e+00> : vector<32x32xf32>
    %304 = tpu.matmul %299, %301, %cst_130 {dimension_numbers = #tpu.dot_dimension_numbers<[1], [1], [0], [0], [0, 0, 1, 0], [], []>} : vector<32x8xbf16>, vector<32x8xbf16>, vector<32x32xf32> -> vector<32x32xf32>
    %cst_131 = arith.constant 0.353553385 : f32
    %305 = vector.broadcast %cst_131 : f32 to vector<32x32xf32>
    %306 = arith.mulf %304, %305 : vector<32x32xf32>
    %307 = arith.addf %306, %2 : vector<32x32xf32>
    %cst_132 = arith.constant dense<0xFF800000> : vector<32xf32>
    %308 = vector.multi_reduction <maximumf>, %307, %cst_132 [1] : vector<32x32xf32> to vector<32xf32>
    %309 = vector.shape_cast %308 : vector<32xf32> to vector<32x1xf32>
    %310 = vector.broadcast %309 : vector<32x1xf32> to vector<32x32xf32>
    %311 = arith.subf %307, %310 : vector<32x32xf32>
    %312 = math.exp %311 : vector<32x32xf32>
    %cst_133 = arith.constant dense<0.000000e+00> : vector<32xf32>
    %313 = vector.multi_reduction <add>, %312, %cst_133 [1] : vector<32x32xf32> to vector<32xf32>
    %314 = vector.shape_cast %313 : vector<32xf32> to vector<32x1xf32>
    %315 = vector.broadcast %314 : vector<32x1xf32> to vector<32x32xf32>
    %316 = arith.divf %312, %315 : vector<32x32xf32>
    %317 = arith.truncf %316 : vector<32x32xf32> to vector<32x32xbf16>
    %cst_134 = arith.constant dense<0.000000e+00> : vector<32x8xf32>
    %318 = tpu.matmul %317, %303, %cst_134 {dimension_numbers = #tpu.dot_dimension_numbers<[1], [0], [0], [1], [0, 0, 1, 1], [], []>} : vector<32x32xbf16>, vector<32x8xbf16>, vector<32x8xf32> -> vector<32x8xf32>
    %319 = arith.truncf %318 : vector<32x8xf32> to vector<32x8xbf16>
    %c1_135 = arith.constant 1 : index
    %c3_136 = arith.constant 3 : index
    %c0_137 = arith.constant 0 : index
    %c0_138 = arith.constant 0 : index
    %320 = vector.load %arg5[%c1_135, %c3_136, %c0_137, %c0_138] : memref<2x4x8x32xf32, #tpu.memory_space<vmem>>, vector<1x1x8x32xf32>
    %321 = vector.shape_cast %320 : vector<1x1x8x32xf32> to vector<8x32xf32>
    %322 = arith.truncf %321 : vector<8x32xf32> to vector<8x32xbf16>
    %cst_139 = arith.constant dense<0.000000e+00> : vector<32x32xf32>
    %323 = tpu.matmul %319, %322, %cst_139 {dimension_numbers = #tpu.dot_dimension_numbers<[1], [0], [0], [1], [0, 0, 1, 1], [], []>} : vector<32x8xbf16>, vector<8x32xbf16>, vector<32x32xf32> -> vector<32x32xf32>
    %324 = arith.addf %297, %323 : vector<32x32xf32>
    %c1_140 = arith.constant 1 : index
    %c0_141 = arith.constant 0 : index
    %c0_142 = arith.constant 0 : index
    %325 = vector.load %arg6[%c1_140, %c0_141, %c0_142] : memref<2x1x32xf32, #tpu.memory_space<vmem>>, vector<1x1x32xf32>
    %326 = vector.shape_cast %325 : vector<1x1x32xf32> to vector<1x32xf32>
    %327 = vector.broadcast %326 : vector<1x32xf32> to vector<32x32xf32>
    %328 = arith.addf %324, %327 : vector<32x32xf32>
    %cst_143 = arith.constant dense<0.000000e+00> : vector<32xf32>
    %329 = vector.multi_reduction <add>, %328, %cst_143 [1] : vector<32x32xf32> to vector<32xf32>
    %330 = vector.shape_cast %329 : vector<32xf32> to vector<32x1xf32>
    %cst_144 = arith.constant 3.200000e+01 : f32
    %331 = vector.broadcast %cst_144 : f32 to vector<32x1xf32>
    %332 = arith.divf %330, %331 : vector<32x1xf32>
    %333 = vector.broadcast %332 : vector<32x1xf32> to vector<32x32xf32>
    %334 = arith.subf %328, %333 : vector<32x32xf32>
    %335 = arith.mulf %334, %334 : vector<32x32xf32>
    %cst_145 = arith.constant dense<0.000000e+00> : vector<32xf32>
    %336 = vector.multi_reduction <add>, %335, %cst_145 [1] : vector<32x32xf32> to vector<32xf32>
    %337 = vector.shape_cast %336 : vector<32xf32> to vector<32x1xf32>
    %cst_146 = arith.constant 3.200000e+01 : f32
    %338 = vector.broadcast %cst_146 : f32 to vector<32x1xf32>
    %339 = arith.divf %337, %338 : vector<32x1xf32>
    %340 = vector.broadcast %332 : vector<32x1xf32> to vector<32x32xf32>
    %341 = arith.subf %328, %340 : vector<32x32xf32>
    %cst_147 = arith.constant 9.99999974E-6 : f32
    %342 = vector.broadcast %cst_147 : f32 to vector<32x1xf32>
    %343 = arith.addf %339, %342 : vector<32x1xf32>
    %344 = math.rsqrt %343 : vector<32x1xf32>
    %345 = vector.broadcast %344 : vector<32x1xf32> to vector<32x32xf32>
    %346 = arith.mulf %341, %345 : vector<32x32xf32>
    %c1_148 = arith.constant 1 : index
    %c0_149 = arith.constant 0 : index
    %c0_150 = arith.constant 0 : index
    %347 = vector.load %arg7[%c1_148, %c0_149, %c0_150] : memref<2x1x32xf32, #tpu.memory_space<vmem>>, vector<1x1x32xf32>
    %348 = vector.shape_cast %347 : vector<1x1x32xf32> to vector<1x32xf32>
    %349 = vector.broadcast %348 : vector<1x32xf32> to vector<32x32xf32>
    %350 = arith.mulf %346, %349 : vector<32x32xf32>
    %c1_151 = arith.constant 1 : index
    %c0_152 = arith.constant 0 : index
    %c0_153 = arith.constant 0 : index
    %351 = vector.load %arg8[%c1_151, %c0_152, %c0_153] : memref<2x1x32xf32, #tpu.memory_space<vmem>>, vector<1x1x32xf32>
    %352 = vector.shape_cast %351 : vector<1x1x32xf32> to vector<1x32xf32>
    %353 = vector.broadcast %352 : vector<1x32xf32> to vector<32x32xf32>
    %354 = arith.addf %350, %353 : vector<32x32xf32>
    %355 = arith.addf %354, %207 : vector<32x32xf32>
    %356 = arith.addf %355, %1 : vector<32x32xf32>
    %357 = arith.truncf %356 : vector<32x32xf32> to vector<32x32xbf16>
    %c1_154 = arith.constant 1 : index
    %c0_155 = arith.constant 0 : index
    %c0_156 = arith.constant 0 : index
    %358 = vector.load %arg9[%c1_154, %c0_155, %c0_156] : memref<2x32x64xbf16, #tpu.memory_space<vmem>>, vector<1x32x64xbf16>
    %359 = vector.shape_cast %358 : vector<1x32x64xbf16> to vector<32x64xbf16>
    %cst_157 = arith.constant dense<0.000000e+00> : vector<32x64xf32>
    %360 = tpu.matmul %357, %359, %cst_157 {dimension_numbers = #tpu.dot_dimension_numbers<[1], [0], [0], [1], [0, 0, 1, 1], [], []>} : vector<32x32xbf16>, vector<32x64xbf16>, vector<32x64xf32> -> vector<32x64xf32>
    %c1_158 = arith.constant 1 : index
    %c0_159 = arith.constant 0 : index
    %c0_160 = arith.constant 0 : index
    %361 = vector.load %arg10[%c1_158, %c0_159, %c0_160] : memref<2x1x64xf32, #tpu.memory_space<vmem>>, vector<1x1x64xf32>
    %362 = vector.shape_cast %361 : vector<1x1x64xf32> to vector<1x64xf32>
    %363 = vector.broadcast %362 : vector<1x64xf32> to vector<32x64xf32>
    %364 = arith.addf %360, %363 : vector<32x64xf32>
    %365 = arith.mulf %364, %364 : vector<32x64xf32>
    %366 = arith.mulf %364, %365 : vector<32x64xf32>
    %cst_161 = arith.constant 4.471500e-02 : f32
    %367 = vector.broadcast %cst_161 : f32 to vector<32x64xf32>
    %368 = arith.mulf %367, %366 : vector<32x64xf32>
    %369 = arith.addf %364, %368 : vector<32x64xf32>
    %cst_162 = arith.constant 0.797884583 : f32
    %370 = vector.broadcast %cst_162 : f32 to vector<32x64xf32>
    %371 = arith.mulf %370, %369 : vector<32x64xf32>
    %372 = math.tanh %371 : vector<32x64xf32>
    %cst_163 = arith.constant 1.000000e+00 : f32
    %373 = vector.broadcast %cst_163 : f32 to vector<32x64xf32>
    %374 = arith.addf %373, %372 : vector<32x64xf32>
    %cst_164 = arith.constant 5.000000e-01 : f32
    %375 = vector.broadcast %cst_164 : f32 to vector<32x64xf32>
    %376 = arith.mulf %375, %374 : vector<32x64xf32>
    %377 = arith.mulf %364, %376 : vector<32x64xf32>
    %378 = arith.truncf %377 : vector<32x64xf32> to vector<32x64xbf16>
    %c1_165 = arith.constant 1 : index
    %c0_166 = arith.constant 0 : index
    %c0_167 = arith.constant 0 : index
    %379 = vector.load %arg11[%c1_165, %c0_166, %c0_167] : memref<2x64x32xbf16, #tpu.memory_space<vmem>>, vector<1x64x32xbf16>
    %380 = vector.shape_cast %379 : vector<1x64x32xbf16> to vector<64x32xbf16>
    %cst_168 = arith.constant dense<0.000000e+00> : vector<32x32xf32>
    %381 = tpu.matmul %378, %380, %cst_168 {dimension_numbers = #tpu.dot_dimension_numbers<[1], [0], [0], [1], [0, 0, 1, 1], [], []>} : vector<32x64xbf16>, vector<64x32xbf16>, vector<32x32xf32> -> vector<32x32xf32>
    %c1_169 = arith.constant 1 : index
    %c0_170 = arith.constant 0 : index
    %c0_171 = arith.constant 0 : index
    %382 = vector.load %arg12[%c1_169, %c0_170, %c0_171] : memref<2x1x32xf32, #tpu.memory_space<vmem>>, vector<1x1x32xf32>
    %383 = vector.shape_cast %382 : vector<1x1x32xf32> to vector<1x32xf32>
    %384 = vector.broadcast %383 : vector<1x32xf32> to vector<32x32xf32>
    %385 = arith.addf %381, %384 : vector<32x32xf32>
    %cst_172 = arith.constant dense<0.000000e+00> : vector<32xf32>
    %386 = vector.multi_reduction <add>, %385, %cst_172 [1] : vector<32x32xf32> to vector<32xf32>
    %387 = vector.shape_cast %386 : vector<32xf32> to vector<32x1xf32>
    %cst_173 = arith.constant 3.200000e+01 : f32
    %388 = vector.broadcast %cst_173 : f32 to vector<32x1xf32>
    %389 = arith.divf %387, %388 : vector<32x1xf32>
    %390 = vector.broadcast %389 : vector<32x1xf32> to vector<32x32xf32>
    %391 = arith.subf %385, %390 : vector<32x32xf32>
    %392 = arith.mulf %391, %391 : vector<32x32xf32>
    %cst_174 = arith.constant dense<0.000000e+00> : vector<32xf32>
    %393 = vector.multi_reduction <add>, %392, %cst_174 [1] : vector<32x32xf32> to vector<32xf32>
    %394 = vector.shape_cast %393 : vector<32xf32> to vector<32x1xf32>
    %cst_175 = arith.constant 3.200000e+01 : f32
    %395 = vector.broadcast %cst_175 : f32 to vector<32x1xf32>
    %396 = arith.divf %394, %395 : vector<32x1xf32>
    %397 = vector.broadcast %389 : vector<32x1xf32> to vector<32x32xf32>
    %398 = arith.subf %385, %397 : vector<32x32xf32>
    %cst_176 = arith.constant 9.99999974E-6 : f32
    %399 = vector.broadcast %cst_176 : f32 to vector<32x1xf32>
    %400 = arith.addf %396, %399 : vector<32x1xf32>
    %401 = math.rsqrt %400 : vector<32x1xf32>
    %402 = vector.broadcast %401 : vector<32x1xf32> to vector<32x32xf32>
    %403 = arith.mulf %398, %402 : vector<32x32xf32>
    %c1_177 = arith.constant 1 : index
    %c0_178 = arith.constant 0 : index
    %c0_179 = arith.constant 0 : index
    %404 = vector.load %arg13[%c1_177, %c0_178, %c0_179] : memref<2x1x32xf32, #tpu.memory_space<vmem>>, vector<1x1x32xf32>
    %405 = vector.shape_cast %404 : vector<1x1x32xf32> to vector<1x32xf32>
    %406 = vector.broadcast %405 : vector<1x32xf32> to vector<32x32xf32>
    %407 = arith.mulf %403, %406 : vector<32x32xf32>
    %c1_180 = arith.constant 1 : index
    %c0_181 = arith.constant 0 : index
    %c0_182 = arith.constant 0 : index
    %408 = vector.load %arg14[%c1_180, %c0_181, %c0_182] : memref<2x1x32xf32, #tpu.memory_space<vmem>>, vector<1x1x32xf32>
    %409 = vector.shape_cast %408 : vector<1x1x32xf32> to vector<1x32xf32>
    %410 = vector.broadcast %409 : vector<1x32xf32> to vector<32x32xf32>
    %411 = arith.addf %407, %410 : vector<32x32xf32>
    %412 = arith.addf %411, %356 : vector<32x32xf32>
    %c0_183 = arith.constant 0 : index
    %c0_184 = arith.constant 0 : index
    %413 = vector.load %arg15[%c0_183, %c0_184] : memref<32x32xf32, #tpu.memory_space<vmem>>, vector<32x32xf32>
    tpu.vector_store %arg15[%c0_183, %c0_184], %412 {strides = array<i32>} : memref<32x32xf32, #tpu.memory_space<vmem>>, vector<32x32xf32>,
    return
  }
}

</mosaic_0001>

<llo_original>
// kernel: forward.1
$region0: #{forward.1}
  #allocation0 [shape = 'u32[]', space=smem, size = 0x4, offset = 0x4, fixed_abs, tag = 'smem constant byte address 0x4 - core index']
  #allocation1 [shape = 'u32[144,128]{1,0:T(1,128)}', space=vmem, size = 0x12000, scoped, tag = 'internal scratch']
  %s0 = inlined_call_operand.vmem [shape: f32[32,32], index: 0, kind: input, shape index: {}]
  %s1 = inlined_call_operand.vmem [shape: f32[32,32], index: 1, kind: input, shape index: {}]
  %s2 = inlined_call_operand.vmem [shape: f32[32,32], index: 2, kind: input, shape index: {}]
  %s3 = inlined_call_operand.vmem [shape: bf16[2,32,96], index: 3, kind: input, shape index: {}]
  %s4 = inlined_call_operand.vmem [shape: f32[2,1,96], index: 4, kind: input, shape index: {}]
  %s5 = inlined_call_operand.vmem [shape: f32[2,4,8,32], index: 5, kind: input, shape index: {}]
  %s6 = inlined_call_operand.vmem [shape: f32[2,1,32], index: 6, kind: input, shape index: {}]
  %s7 = inlined_call_operand.vmem [shape: f32[2,1,32], index: 7, kind: input, shape index: {}]
  %s8 = inlined_call_operand.vmem [shape: f32[2,1,32], index: 8, kind: input, shape index: {}]
  %s9 = inlined_call_operand.vmem [shape: bf16[2,32,64], index: 9, kind: input, shape index: {}]
  %s10 = inlined_call_operand.vmem [shape: f32[2,1,64], index: 10, kind: input, shape index: {}]
  %s11 = inlined_call_operand.vmem [shape: bf16[2,64,32], index: 11, kind: input, shape index: {}]
  %s12 = inlined_call_operand.vmem [shape: f32[2,1,32], index: 12, kind: input, shape index: {}]
  %s13 = inlined_call_operand.vmem [shape: f32[2,1,32], index: 13, kind: input, shape index: {}]
  %s14 = inlined_call_operand.vmem [shape: f32[2,1,32], index: 14, kind: input, shape index: {}]
  %s15 = inlined_call_operand.hbm [shape: f32[32,32], index: 15, kind: output, shape index: {}]
  %s16 = sld [smem:[#allocation0]]
  $region70: #{forward.1} parent=0
    _
  %s18 = ssub.s32 1, %s16
  %s19 = scalar_select 0, %s18, %s16
  $region1: #{forward.1} parent=0
    #allocation2 [shape = 'u8[16384]{0}', space=vmem, size = 0x4000, scoped, tag = 'output window, operand 0, single buffered']
    #allocation3 [shape = 's32[1]{0}', space=sflag, size = 0x4, scoped, tag = 'scoped memory for forward.1']
    %20 = vsyncpa [#allocation3], 0
    // Predicated region
    $region2: #{forward.1} parent=1 // pred_check
      _
    $region3: #{forward.1} parent=1 // pred_check_branch
      %22 = sbr.rel (0) target = $region5
    $region4: #{forward.1} parent=1 // pred_region
      _
    $region5: #{forward.1} parent=1 // pred_fallthru
      _
    // Predicated region
    $region6: #{forward.1} parent=1 // pred_check
      _
    $region7: #{forward.1} parent=1 // pred_check_branch
      %24 = sbr.rel (0) target = $region9
    $region8: #{forward.1} parent=1 // pred_region
      _
    $region9: #{forward.1} parent=1 // pred_fallthru
      _
    // Predicated region
    $region10: #{forward.1} parent=1 // pred_check
      _
    $region11: #{forward.1} parent=1 // pred_check_branch
      %26 = sbr.rel (0) target = $region13
    $region12: #{forward.1} parent=1 // pred_region
      _
    $region13: #{forward.1} parent=1 // pred_fallthru
      _
    // Predicated region
    $region14: #{forward.1} parent=1 // pred_check
      _
    $region15: #{forward.1} parent=1 // pred_check_branch
      %28 = sbr.rel (0) target = $region17
    $region16: #{forward.1} parent=1 // pred_region
      _
    $region17: #{forward.1} parent=1 // pred_fallthru
      _
    // Predicated region
    $region18: #{forward.1} parent=1 // pred_check
      _
    $region19: #{forward.1} parent=1 // pred_check_branch
      %30 = sbr.rel (0) target = $region21
    $region20: #{forward.1} parent=1 // pred_region
      _
    $region21: #{forward.1} parent=1 // pred_fallthru
      _
    // Predicated region
    $region22: #{forward.1} parent=1 // pred_check
      _
    $region23: #{forward.1} parent=1 // pred_check_branch
      %32 = sbr.rel (0) target = $region25
    $region24: #{forward.1} parent=1 // pred_region
      _
    $region25: #{forward.1} parent=1 // pred_fallthru
      _
    // Predicated region
    $region26: #{forward.1} parent=1 // pred_check
      _
    $region27: #{forward.1} parent=1 // pred_check_branch
      %34 = sbr.rel (0) target = $region29
    $region28: #{forward.1} parent=1 // pred_region
      _
    $region29: #{forward.1} parent=1 // pred_fallthru
      _
    // Predicated region
    $region30: #{forward.1} parent=1 // pred_check
      _
    $region31: #{forward.1} parent=1 // pred_check_branch
      %36 = sbr.rel (0) target = $region33
    $region32: #{forward.1} parent=1 // pred_region
      _
    $region33: #{forward.1} parent=1 // pred_fallthru
      _
    // Predicated region
    $region34: #{forward.1} parent=1 // pred_check
      _
    $region35: #{forward.1} parent=1 // pred_check_branch
      %38 = sbr.rel (0) target = $region37
    $region36: #{forward.1} parent=1 // pred_region
      _
    $region37: #{forward.1} parent=1 // pred_fallthru
      _
    // Predicated region
    $region38: #{forward.1} parent=1 // pred_check
      _
    $region39: #{forward.1} parent=1 // pred_check_branch
      %40 = sbr.rel (0) target = $region41
    $region40: #{forward.1} parent=1 // pred_region
      _
    $region41: #{forward.1} parent=1 // pred_fallthru
      _
    // Predicated region
    $region42: #{forward.1} parent=1 // pred_check
      _
    $region43: #{forward.1} parent=1 // pred_check_branch
      %42 = sbr.rel (0) target = $region45
    $region44: #{forward.1} parent=1 // pred_region
      _
    $region45: #{forward.1} parent=1 // pred_fallthru
      _
    // Predicated region
    $region46: #{forward.1} parent=1 // pred_check
      _
    $region47: #{forward.1} parent=1 // pred_check_branch
      %44 = sbr.rel (0) target = $region49
    $region48: #{forward.1} parent=1 // pred_region
      _
    $region49: #{forward.1} parent=1 // pred_fallthru
      _
    // Predicated region
    $region50: #{forward.1} parent=1 // pred_check
      _
    $region51: #{forward.1} parent=1 // pred_check_branch
      %46 = sbr.rel (0) target = $region53
    $region52: #{forward.1} parent=1 // pred_region
      _
    $region53: #{forward.1} parent=1 // pred_fallthru
      _
    // Predicated region
    $region54: #{forward.1} parent=1 // pred_check
      _
    $region55: #{forward.1} parent=1 // pred_check_branch
      %48 = sbr.rel (0) target = $region57
    $region56: #{forward.1} parent=1 // pred_region
      _
    $region57: #{forward.1} parent=1 // pred_fallthru
      _
    // Predicated region
    $region58: #{forward.1} parent=1 // pred_check
      _
    $region59: #{forward.1} parent=1 // pred_check_branch
      %50 = sbr.rel (0) target = $region61
    $region60: #{forward.1} parent=1 // pred_region
      _
    $region61: #{forward.1} parent=1 // pred_fallthru
      _
    %v52 = vld [vmem:[%s0] sm:$0xff]
    %v53 = vld [vmem:[%s0 + $0x8] sm:$0xff]
    %v54 = vld [vmem:[%s0 + $0x10] sm:$0xff]
    %v55 = vld [vmem:[%s0 + $0x18] sm:$0xff]
    %v56 = vld [vmem:[%s1] sm:$0xff]
    %v57 = vld [vmem:[%s1 + $0x8] sm:$0xff]
    %v58 = vld [vmem:[%s1 + $0x10] sm:$0xff]
    %v59 = vld [vmem:[%s1 + $0x18] sm:$0xff]
    %v60 = vld [vmem:[%s2] sm:$0xff]
    %v61 = vld [vmem:[%s2 + $0x8] sm:$0xff]
    %v62 = vld [vmem:[%s2 + $0x10] sm:$0xff]
    %v63 = vld [vmem:[%s2 + $0x18] sm:$0xff]
    %v64 = vpack.c.bf16 %v53, %v52
    %v65 = vpack.c.bf16 %v55, %v54
    %v66 = vld [vmem:[%s3] sm:$0xf]
    %v67 = vld [vmem:[%s3 + $0x4] sm:$0xf]
    %v68 = vld [vmem:[%s3 + $0x8] sm:$0xf]
    %v69 = vld [vmem:[%s3 + $0xc] sm:$0xf]
    %v70 = vld [vmem:[%s4] sm:$0x1]
    %v72 = vlaneseq
    %v73 = vshrl.u32 %v72, 7
    %v74 = vsub.s32 0, %v73
    %v75 = vrot.slane %v70, %v74
    %v81 = vunpack.c.l.b16 %v66
    %v82 = vunpack.c.l.b16 %v67
    %v83 = vunpack.c.l.b16 %v68
    %v84 = vunpack.c.l.b16 %v69
    %v85 = vpack.c.b16 %v82, %v81
    %v86 = vpack.c.b16 %v84, %v83
    %vm89 = vcmask 261120
    %v91 = vsel %vm89, %v64, 0
    %v94 = vsel %vm89, %v65, 0
    %96 = vmatprep.subr.bf16.mxu0 0
    %97 = vmatpush1.bf16.msra.mxu0 0
    %98 = vmatprep.subr.bf16.mxu0 0
    %99 = vmatpush1.bf16.msra.mxu0 0
    %100 = vmatprep.subr.bf16.mxu0 0
    %101 = vmatpush1.bf16.msra.mxu0 0
    %102 = vmatprep.subr.bf16.mxu0 0
    %103 = vmatpush1.bf16.msra.mxu0 0
    %104 = vmatprep.subr.bf16.mxu0 0
    %105 = vmatpush1.bf16.msra.mxu0 0
    %106 = vmatprep.subr.bf16.mxu0 0
    %107 = vmatpush1.bf16.msra.mxu0 0
    %108 = vmatprep.subr.bf16.mxu0 0
    %109 = vmatpush1.bf16.msra.mxu0 %v86
    %110 = vmatprep.subr.bf16.mxu0 0
    %111 = vmatpush1.bf16.msra.mxu0 %v85
    %112 = vmatprep.subr.bf16.mxu0 0
    %113 = vmatpush2.bf16.msra.mxu0 0
    %114 = vmatprep.subr.bf16.mxu0 0
    %115 = vmatpush2.bf16.msra.mxu0 0
    %116 = vmatprep.subr.bf16.mxu0 0
    %117 = vmatpush2.bf16.msra.mxu0 0
    %118 = vmatprep.subr.bf16.mxu0 0
    %119 = vmatpush2.bf16.msra.mxu0 0
    %120 = vmatprep.subr.bf16.mxu0 0
    %121 = vmatpush2.bf16.msra.mxu0 0
    %122 = vmatprep.subr.bf16.mxu0 0
    %123 = vmatpush2.bf16.msra.mxu0 0
    %124 = vmatprep.subr.bf16.mxu0 0
    %125 = vmatpush2.bf16.msra.mxu0 0
    %126 = vmatprep.subr.bf16.mxu0 0
    %127 = vmatpush2.bf16.msra.mxu0 0
    %128 = vmatprep.mubr.bf16.mxu0 0
    %129 = vmatmul.mubr.bf16.gmra.mxu0 %v91
    %v130 = vpop.f32.mrf.mxu0
    %v131 = vadd.f32 %v75, %v130
    %v132 = vpop.f32.mrf.mxu0
    %v133 = vpop.f32.mrf.mxu0
    %v134 = vadd.f32 %v75, %v133
    %v135 = vpop.f32.mrf.mxu0
    %136 = vmatprep.mubr.bf16.mxu0 0
    %137 = vmatmul.mubr.bf16.gmra.mxu0 %v94
    %v138 = vpop.f32.mrf.mxu0
    %v139 = vadd.f32 %v75, %v138
    %v140 = vpop.f32.mrf.mxu0
    %v141 = vpop.f32.mrf.mxu0
    %v142 = vadd.f32 %v75, %v141
    %v143 = vpop.f32.mrf.mxu0
    %144 = vdwg.mxu0
    %v145 = vpack.c.bf16 %v134, %v131
    %v146 = vpack.c.bf16 %v142, %v139
    %149 = vrot.lane.b32.xlu0 %v145, 96
    %v150 = vpop.permute.xlu0 %149
    %151 = vrot.lane.b32.xlu0 %v146, 96
    %v152 = vpop.permute.xlu0 %151
    %vm153 = vcmask 64512
    %v155 = vsel %vm153, %v145, 0
    %v158 = vsel %vm153, %v146, 0
    %v161 = vsel %vm153, %v150, 0
    %v164 = vsel %vm153, %v152, 0
    %166 = vmatprep.subr.bf16.mxu0 0
    %167 = vmatpush1.bf16.xpose.msra.mxu0 0
    %168 = vmatprep.subr.bf16.mxu0 0
    %169 = vmatpush1.bf16.xpose.msra.mxu0 0
    %170 = vmatprep.subr.bf16.mxu0 0
    %171 = vmatpush1.bf16.xpose.msra.mxu0 0
    %172 = vmatprep.subr.bf16.mxu0 0
    %173 = vmatpush1.bf16.xpose.msra.mxu0 0
    %174 = vmatprep.subr.bf16.mxu0 0
    %175 = vmatpush1.bf16.xpose.msra.mxu0 0
    %176 = vmatprep.subr.bf16.mxu0 0
    %177 = vmatpush1.bf16.xpose.msra.mxu0 0
    %178 = vmatprep.subr.bf16.mxu0 0
    %179 = vmatpush1.bf16.xpose.msra.mxu0 %v164
    %180 = vmatprep.subr.bf16.mxu0 0
    %181 = vmatpush1.bf16.xpose.msra.mxu0 %v161
    %182 = vmatprep.subr.bf16.mxu0 0
    %183 = vmatpush2.bf16.xpose.msra.mxu0 0
    %184 = vmatprep.subr.bf16.mxu0 0
    %185 = vmatpush2.bf16.xpose.msra.mxu0 0
    %186 = vmatprep.subr.bf16.mxu0 0
    %187 = vmatpush2.bf16.xpose.msra.mxu0 0
    %188 = vmatprep.subr.bf16.mxu0 0
    %189 = vmatpush2.bf16.xpose.msra.mxu0 0
    %190 = vmatprep.subr.bf16.mxu0 0
    %191 = vmatpush2.bf16.xpose.msra.mxu0 0
    %192 = vmatprep.subr.bf16.mxu0 0
    %193 = vmatpush2.bf16.xpose.msra.mxu0 0
    %194 = vmatprep.subr.bf16.mxu0 0
    %195 = vmatpush2.bf16.xpose.msra.mxu0 0
    %196 = vmatprep.subr.bf16.mxu0 0
    %197 = vmatpush2.bf16.xpose.msra.mxu0 0
    %198 = vmatprep.mubr.bf16.mxu0 0
    %199 = vmatmul.mubr.bf16.gmra.mxu0 %v155
    %v200 = vpop.f32.mrf.mxu0
    %v201 = vadd.f32 0.0, %v200
    %v202 = vpop.f32.mrf.mxu0
    %v203 = vpop.f32.mrf.mxu0
    %v204 = vadd.f32 0.0, %v203
    %v205 = vpop.f32.mrf.mxu0
    %206 = vmatprep.mubr.bf16.mxu0 0
    %207 = vmatmul.mubr.bf16.gmra.mxu0 %v158
    %v208 = vpop.f32.mrf.mxu0
    %v209 = vadd.f32 0.0, %v208
    %v210 = vpop.f32.mrf.mxu0
    %v211 = vpop.f32.mrf.mxu0
    %v212 = vadd.f32 0.0, %v211
    %v213 = vpop.f32.mrf.mxu0
    %214 = vdwg.mxu0
    %v215 = vmul.f32 %v201, 0.35355338
    %v216 = vmul.f32 %v204, 0.35355338
    %v217 = vmul.f32 %v209, 0.35355338
    %v218 = vmul.f32 %v212, 0.35355338
    %v219 = vadd.f32 %v215, %v60
    %v220 = vadd.f32 %v216, %v61
    %v221 = vadd.f32 %v217, %v62
    %v222 = vadd.f32 %v218, %v63
    %v223 = vsel %vm89, %v219, -inf
    %224 = vmax.xlane.f32.xlu0 %v223
    %v225 = vpop.xlane.xlu0 %224
    %v226 = vsel %vm89, %v220, -inf
    %227 = vmax.xlane.f32.xlu0 %v226
    %v228 = vpop.xlane.xlu0 %227
    %v229 = vsel %vm89, %v221, -inf
    %230 = vmax.xlane.f32.xlu0 %v229
    %v231 = vpop.xlane.xlu0 %230
    %v232 = vsel %vm89, %v222, -inf
    %233 = vmax.xlane.f32.xlu0 %v232
    %v234 = vpop.xlane.xlu0 %233
    %v235 = vsub.f32 %v219, %v225
    %v236 = vsub.f32 %v220, %v228
    %v237 = vsub.f32 %v221, %v231
    %v238 = vsub.f32 %v222, %v234
    %v239 = vmul.f32 %v235, 1.442695
    %v240 = vpow.pop %v239
    %v241 = vmul.f32 %v236, 1.442695
    %v242 = vpow.pop %v241
    %v243 = vmul.f32 %v237, 1.442695
    %v244 = vpow.pop %v243
    %v245 = vmul.f32 %v238, 1.442695
    %v246 = vpow.pop %v245
    %v247 = vsel %vm89, %v240, 0.0
    %248 = vadd.xlane.f32.xlu0 %v247
    %v249 = vpop.xlane.xlu0 %248
    %v250 = vsel %vm89, %v242, 0.0
    %251 = vadd.xlane.f32.xlu0 %v250
    %v252 = vpop.xlane.xlu0 %251
    %v253 = vsel %vm89, %v244, 0.0
    %254 = vadd.xlane.f32.xlu0 %v253
    %v255 = vpop.xlane.xlu0 %254
    %v256 = vsel %vm89, %v246, 0.0
    %257 = vadd.xlane.f32.xlu0 %v256
    %v258 = vpop.xlane.xlu0 %257
    %v259 = vrcp.pop %v249
    %v260 = vmul.f32 %v240, %v259
    %v261 = vrcp.pop %v252
    %v262 = vmul.f32 %v242, %v261
    %v263 = vrcp.pop %v255
    %v264 = vmul.f32 %v244, %v263
    %v265 = vrcp.pop %v258
    %v266 = vmul.f32 %v246, %v265
    %v267 = vpack.c.bf16 %v262, %v260
    %v268 = vpack.c.bf16 %v266, %v264
    %269 = vrot.lane.b32.xlu0 %v145, 64
    %v270 = vpop.permute.xlu0 %269
    %271 = vrot.lane.b32.xlu0 %v146, 64
    %v272 = vpop.permute.xlu0 %271
    %v276 = vsel %vm89, %v267, 0
    %v279 = vsel %vm89, %v268, 0
    %281 = vmatprep.subr.bf16.mxu0 0
    %282 = vmatpush1.bf16.msra.mxu0 0
    %283 = vmatprep.subr.bf16.mxu0 0
    %284 = vmatpush1.bf16.msra.mxu0 0
    %285 = vmatprep.subr.bf16.mxu0 0
    %286 = vmatpush1.bf16.msra.mxu0 0
    %287 = vmatprep.subr.bf16.mxu0 0
    %288 = vmatpush1.bf16.msra.mxu0 0
    %289 = vmatprep.subr.bf16.mxu0 0
    %290 = vmatpush1.bf16.msra.mxu0 0
    %291 = vmatprep.subr.bf16.mxu0 0
    %292 = vmatpush1.bf16.msra.mxu0 0
    %293 = vmatprep.subr.bf16.mxu0 0
    %294 = vmatpush1.bf16.msra.mxu0 %v272
    %295 = vmatprep.subr.bf16.mxu0 0
    %296 = vmatpush1.bf16.msra.mxu0 %v270
    %297 = vmatprep.subr.bf16.mxu0 0
    %298 = vmatpush2.bf16.msra.mxu0 0
    %299 = vmatprep.subr.bf16.mxu0 0
    %300 = vmatpush2.bf16.msra.mxu0 0
    %301 = vmatprep.subr.bf16.mxu0 0
    %302 = vmatpush2.bf16.msra.mxu0 0
    %303 = vmatprep.subr.bf16.mxu0 0
    %304 = vmatpush2.bf16.msra.mxu0 0
    %305 = vmatprep.subr.bf16.mxu0 0
    %306 = vmatpush2.bf16.msra.mxu0 0
    %307 = vmatprep.subr.bf16.mxu0 0
    %308 = vmatpush2.bf16.msra.mxu0 0
    %309 = vmatprep.subr.bf16.mxu0 0
    %310 = vmatpush2.bf16.msra.mxu0 0
    %311 = vmatprep.subr.bf16.mxu0 0
    %312 = vmatpush2.bf16.msra.mxu0 0
    %313 = vmatprep.mubr.bf16.mxu0 0
    %314 = vmatmul.mubr.bf16.gmra.mxu0 %v276
    %v315 = vpop.f32.mrf.mxu0
    %v316 = vadd.f32 0.0, %v315
    %v317 = vpop.f32.mrf.mxu0
    %v318 = vpop.f32.mrf.mxu0
    %v319 = vadd.f32 0.0, %v318
    %v320 = vpop.f32.mrf.mxu0
    %321 = vmatprep.mubr.bf16.mxu0 0
    %322 = vmatmul.mubr.bf16.gmra.mxu0 %v279
    %v323 = vpop.f32.mrf.mxu0
    %v324 = vadd.f32 0.0, %v323
    %v325 = vpop.f32.mrf.mxu0
    %v326 = vpop.f32.mrf.mxu0
    %v327 = vadd.f32 0.0, %v326
    %v328 = vpop.f32.mrf.mxu0
    %329 = vdwg.mxu0
    %v330 = vpack.c.bf16 %v319, %v316
    %v331 = vpack.c.bf16 %v327, %v324
    %v332 = vld [vmem:[%s5] sm:$0xff]
    %v333 = vpack.c.bf16 %v332, %v332
    %334 = vrot.lane.b32.xlu0 %v145, 120
    %v335 = vpop.permute.xlu0 %334
    %336 = vrot.lane.b32.xlu0 %v146, 120
    %v337 = vpop.permute.xlu0 %336
    %338 = vrot.lane.b32.xlu0 %v145, 88
    %v339 = vpop.permute.xlu0 %338
    %340 = vrot.lane.b32.xlu0 %v146, 88
    %v341 = vpop.permute.xlu0 %340
    %v343 = vsel %vm153, %v335, 0
    %v346 = vsel %vm153, %v337, 0
    %v349 = vsel %vm153, %v339, 0
    %v352 = vsel %vm153, %v341, 0
    %354 = vmatprep.subr.bf16.mxu0 0
    %355 = vmatpush1.bf16.xpose.msra.mxu0 0
    %356 = vmatprep.subr.bf16.mxu0 0
    %357 = vmatpush1.bf16.xpose.msra.mxu0 0
    %358 = vmatprep.subr.bf16.mxu0 0
    %359 = vmatpush1.bf16.xpose.msra.mxu0 0
    %360 = vmatprep.subr.bf16.mxu0 0
    %361 = vmatpush1.bf16.xpose.msra.mxu0 0
    %362 = vmatprep.subr.bf16.mxu0 0
    %363 = vmatpush1.bf16.xpose.msra.mxu0 0
    %364 = vmatprep.subr.bf16.mxu0 0
    %365 = vmatpush1.bf16.xpose.msra.mxu0 0
    %366 = vmatprep.subr.bf16.mxu0 0
    %367 = vmatpush1.bf16.xpose.msra.mxu0 %v352
    %368 = vmatprep.subr.bf16.mxu0 0
    %369 = vmatpush1.bf16.xpose.msra.mxu0 %v349
    %370 = vmatprep.subr.bf16.mxu0 0
    %371 = vmatpush2.bf16.xpose.msra.mxu0 0
    %372 = vmatprep.subr.bf16.mxu0 0
    %373 = vmatpush2.bf16.xpose.msra.mxu0 0
    %374 = vmatprep.subr.bf16.mxu0 0
    %375 = vmatpush2.bf16.xpose.msra.mxu0 0
    %376 = vmatprep.subr.bf16.mxu0 0
    %377 = vmatpush2.bf16.xpose.msra.mxu0 0
    %378 = vmatprep.subr.bf16.mxu0 0
    %379 = vmatpush2.bf16.xpose.msra.mxu0 0
    %380 = vmatprep.subr.bf16.mxu0 0
    %381 = vmatpush2.bf16.xpose.msra.mxu0 0
    %382 = vmatprep.subr.bf16.mxu0 0
    %383 = vmatpush2.bf16.xpose.msra.mxu0 0
    %384 = vmatprep.subr.bf16.mxu0 0
    %385 = vmatpush2.bf16.xpose.msra.mxu0 0
    %386 = vmatprep.mubr.bf16.mxu0 0
    %387 = vmatmul.mubr.bf16.gmra.mxu0 %v343
    %v388 = vpop.f32.mrf.mxu0
    %v389 = vadd.f32 0.0, %v388
    %v390 = vpop.f32.mrf.mxu0
    %v391 = vpop.f32.mrf.mxu0
    %v392 = vadd.f32 0.0, %v391
    %v393 = vpop.f32.mrf.mxu0
    %394 = vmatprep.mubr.bf16.mxu0 0
    %395 = vmatmul.mubr.bf16.gmra.mxu0 %v346
    %v396 = vpop.f32.mrf.mxu0
    %v397 = vadd.f32 0.0, %v396
    %v398 = vpop.f32.mrf.mxu0
    %v399 = vpop.f32.mrf.mxu0
    %v400 = vadd.f32 0.0, %v399
    %v401 = vpop.f32.mrf.mxu0
    %402 = vdwg.mxu0
    %v403 = vmul.f32 %v389, 0.35355338
    %v404 = vmul.f32 %v392, 0.35355338
    %v405 = vmul.f32 %v397, 0.35355338
    %v406 = vmul.f32 %v400, 0.35355338
    %v407 = vadd.f32 %v403, %v60
    %v408 = vadd.f32 %v404, %v61
    %v409 = vadd.f32 %v405, %v62
    %v410 = vadd.f32 %v406, %v63
    %v411 = vsel %vm89, %v407, -inf
    %412 = vmax.xlane.f32.xlu0 %v411
    %v413 = vpop.xlane.xlu0 %412
    %v414 = vsel %vm89, %v408, -inf
    %415 = vmax.xlane.f32.xlu0 %v414
    %v416 = vpop.xlane.xlu0 %415
    %v417 = vsel %vm89, %v409, -inf
    %418 = vmax.xlane.f32.xlu0 %v417
    %v419 = vpop.xlane.xlu0 %418
    %v420 = vsel %vm89, %v410, -inf
    %421 = vmax.xlane.f32.xlu0 %v420
    %v422 = vpop.xlane.xlu0 %421
    %v423 = vsub.f32 %v407, %v413
    %v424 = vsub.f32 %v408, %v416
    %v425 = vsub.f32 %v409, %v419
    %v426 = vsub.f32 %v410, %v422
    %v427 = vmul.f32 %v423, 1.442695
    %v428 = vpow.pop %v427
    %v429 = vmul.f32 %v424, 1.442695
    %v430 = vpow.pop %v429
    %v431 = vmul.f32 %v425, 1.442695
    %v432 = vpow.pop %v431
    %v433 = vmul.f32 %v426, 1.442695
    %v434 = vpow.pop %v433
    %v435 = vsel %vm89, %v428, 0.0
    %436 = vadd.xlane.f32.xlu0 %v435
    %v437 = vpop.xlane.xlu0 %436
    %v438 = vsel %vm89, %v430, 0.0
    %439 = vadd.xlane.f32.xlu0 %v438
    %v440 = vpop.xlane.xlu0 %439
    %v441 = vsel %vm89, %v432, 0.0
    %442 = vadd.xlane.f32.xlu0 %v441
    %v443 = vpop.xlane.xlu0 %442
    %v444 = vsel %vm89, %v434, 0.0
    %445 = vadd.xlane.f32.xlu0 %v444
    %v446 = vpop.xlane.xlu0 %445
    %v447 = vrcp.pop %v437
    %v448 = vmul.f32 %v428, %v447
    %v449 = vrcp.pop %v440
    %v450 = vmul.f32 %v430, %v449
    %v451 = vrcp.pop %v443
    %v452 = vmul.f32 %v432, %v451
    %v453 = vrcp.pop %v446
    %v454 = vmul.f32 %v434, %v453
    %v455 = vpack.c.bf16 %v450, %v448
    %v456 = vpack.c.bf16 %v454, %v452
    %457 = vrot.lane.b32.xlu0 %v145, 56
    %v458 = vpop.permute.xlu0 %457
    %459 = vrot.lane.b32.xlu0 %v146, 56
    %v460 = vpop.permute.xlu0 %459
    %v464 = vsel %vm89, %v455, 0
    %v467 = vsel %vm89, %v456, 0
    %469 = vmatprep.subr.bf16.mxu0 0
    %470 = vmatpush1.bf16.msra.mxu0 0
    %471 = vmatprep.subr.bf16.mxu0 0
    %472 = vmatpush1.bf16.msra.mxu0 0
    %473 = vmatprep.subr.bf16.mxu0 0
    %474 = vmatpush1.bf16.msra.mxu0 0
    %475 = vmatprep.subr.bf16.mxu0 0
    %476 = vmatpush1.bf16.msra.mxu0 0
    %477 = vmatprep.subr.bf16.mxu0 0
    %478 = vmatpush1.bf16.msra.mxu0 0
    %479 = vmatprep.subr.bf16.mxu0 0
    %480 = vmatpush1.bf16.msra.mxu0 0
    %481 = vmatprep.subr.bf16.mxu0 0
    %482 = vmatpush1.bf16.msra.mxu0 %v460
    %483 = vmatprep.subr.bf16.mxu0 0
    %484 = vmatpush1.bf16.msra.mxu0 %v458
    %485 = vmatprep.subr.bf16.mxu0 0
    %486 = vmatpush2.bf16.msra.mxu0 0
    %487 = vmatprep.subr.bf16.mxu0 0
    %488 = vmatpush2.bf16.msra.mxu0 0
    %489 = vmatprep.subr.bf16.mxu0 0
    %490 = vmatpush2.bf16.msra.mxu0 0
    %491 = vmatprep.subr.bf16.mxu0 0
    %492 = vmatpush2.bf16.msra.mxu0 0
    %493 = vmatprep.subr.bf16.mxu0 0
    %494 = vmatpush2.bf16.msra.mxu0 0
    %495 = vmatprep.subr.bf16.mxu0 0
    %496 = vmatpush2.bf16.msra.mxu0 0
    %497 = vmatprep.subr.bf16.mxu0 0
    %498 = vmatpush2.bf16.msra.mxu0 0
    %499 = vmatprep.subr.bf16.mxu0 0
    %500 = vmatpush2.bf16.msra.mxu0 0
    %501 = vmatprep.mubr.bf16.mxu0 0
    %502 = vmatmul.mubr.bf16.gmra.mxu0 %v464
    %v503 = vpop.f32.mrf.mxu0
    %v504 = vadd.f32 0.0, %v503
    %v505 = vpop.f32.mrf.mxu0
    %v506 = vpop.f32.mrf.mxu0
    %v507 = vadd.f32 0.0, %v506
    %v508 = vpop.f32.mrf.mxu0
    %509 = vmatprep.mubr.bf16.mxu0 0
    %510 = vmatmul.mubr.bf16.gmra.mxu0 %v467
    %v511 = vpop.f32.mrf.mxu0
    %v512 = vadd.f32 0.0, %v511
    %v513 = vpop.f32.mrf.mxu0
    %v514 = vpop.f32.mrf.mxu0
    %v515 = vadd.f32 0.0, %v514
    %v516 = vpop.f32.mrf.mxu0
    %517 = vdwg.mxu0
    %v518 = vpack.c.bf16 %v507, %v504
    %v519 = vpack.c.bf16 %v515, %v512
    %s520 = scalar_lea.vmem %s5, 8
    %v521 = vld [vmem:[%s520] sm:$0xff]
    %v522 = vpack.c.bf16 %v521, %v521
    %v524 = vsel %vm153, %v518, 0
    %v527 = vsel %vm153, %v519, 0
    %vm529 = vcmask 1043456
    %v531 = vsel %vm529, %v522, 0
    %533 = vmatprep.subr.bf16.mxu0 0
    %534 = vmatpush1.bf16.msra.mxu0 0
    %535 = vmatprep.subr.bf16.mxu0 0
    %536 = vmatpush1.bf16.msra.mxu0 0
    %537 = vmatprep.subr.bf16.mxu0 0
    %538 = vmatpush1.bf16.msra.mxu0 0
    %539 = vmatprep.subr.bf16.mxu0 0
    %540 = vmatpush1.bf16.msra.mxu0 0
    %541 = vmatprep.subr.bf16.mxu0 0
    %542 = vmatpush1.bf16.msra.mxu0 0
    %543 = vmatprep.subr.bf16.mxu0 0
    %544 = vmatpush1.bf16.msra.mxu0 0
    %545 = vmatprep.subr.bf16.mxu0 0
    %546 = vmatpush1.bf16.msra.mxu0 0
    %547 = vmatprep.subr.bf16.mxu0 0
    %548 = vmatpush1.bf16.msra.mxu0 %v531
    %549 = vmatprep.subr.bf16.mxu0 0
    %550 = vmatpush2.bf16.msra.mxu0 0
    %551 = vmatprep.subr.bf16.mxu0 0
    %552 = vmatpush2.bf16.msra.mxu0 0
    %553 = vmatprep.subr.bf16.mxu0 0
    %554 = vmatpush2.bf16.msra.mxu0 0
    %555 = vmatprep.subr.bf16.mxu0 0
    %556 = vmatpush2.bf16.msra.mxu0 0
    %557 = vmatprep.subr.bf16.mxu0 0
    %558 = vmatpush2.bf16.msra.mxu0 0
    %559 = vmatprep.subr.bf16.mxu0 0
    %560 = vmatpush2.bf16.msra.mxu0 0
    %561 = vmatprep.subr.bf16.mxu0 0
    %562 = vmatpush2.bf16.msra.mxu0 0
    %563 = vmatprep.subr.bf16.mxu0 0
    %564 = vmatpush2.bf16.msra.mxu0 0
    %565 = vmatprep.mubr.bf16.mxu0 0
    %566 = vmatmul.mubr.bf16.gmra.mxu0 %v524
    %v567 = vpop.f32.mrf.mxu0
    %v568 = vadd.f32 0.0, %v567
    %v569 = vpop.f32.mrf.mxu0
    %v570 = vpop.f32.mrf.mxu0
    %v571 = vadd.f32 0.0, %v570
    %v572 = vpop.f32.mrf.mxu0
    %573 = vmatprep.mubr.bf16.mxu0 0
    %574 = vmatmul.mubr.bf16.gmra.mxu0 %v527
    %v575 = vpop.f32.mrf.mxu0
    %v576 = vadd.f32 0.0, %v575
    %v577 = vpop.f32.mrf.mxu0
    %v578 = vpop.f32.mrf.mxu0
    %v579 = vadd.f32 0.0, %v578
    %v580 = vpop.f32.mrf.mxu0
    %581 = vdwg.mxu0
    %v583 = vsel %vm153, %v330, 0
    %v586 = vsel %vm153, %v331, 0
    %v589 = vsel %vm529, %v333, 0
    %591 = vmatprep.subr.bf16.mxu0 0
    %592 = vmatpush1.bf16.msra.mxu0 0
    %593 = vmatprep.subr.bf16.mxu0 0
    %594 = vmatpush1.bf16.msra.mxu0 0
    %595 = vmatprep.subr.bf16.mxu0 0
    %596 = vmatpush1.bf16.msra.mxu0 0
    %597 = vmatprep.subr.bf16.mxu0 0
    %598 = vmatpush1.bf16.msra.mxu0 0
    %599 = vmatprep.subr.bf16.mxu0 0
    %600 = vmatpush1.bf16.msra.mxu0 0
    %601 = vmatprep.subr.bf16.mxu0 0
    %602 = vmatpush1.bf16.msra.mxu0 0
    %603 = vmatprep.subr.bf16.mxu0 0
    %604 = vmatpush1.bf16.msra.mxu0 0
    %605 = vmatprep.subr.bf16.mxu0 0
    %606 = vmatpush1.bf16.msra.mxu0 %v589
    %607 = vmatprep.subr.bf16.mxu0 0
    %608 = vmatpush2.bf16.msra.mxu0 0
    %609 = vmatprep.subr.bf16.mxu0 0
    %610 = vmatpush2.bf16.msra.mxu0 0
    %611 = vmatprep.subr.bf16.mxu0 0
    %612 = vmatpush2.bf16.msra.mxu0 0
    %613 = vmatprep.subr.bf16.mxu0 0
    %614 = vmatpush2.bf16.msra.mxu0 0
    %615 = vmatprep.subr.bf16.mxu0 0
    %616 = vmatpush2.bf16.msra.mxu0 0
    %617 = vmatprep.subr.bf16.mxu0 0
    %618 = vmatpush2.bf16.msra.mxu0 0
    %619 = vmatprep.subr.bf16.mxu0 0
    %620 = vmatpush2.bf16.msra.mxu0 0
    %621 = vmatprep.subr.bf16.mxu0 0
    %622 = vmatpush2.bf16.msra.mxu0 0
    %623 = vmatprep.mubr.bf16.mxu0 0
    %624 = vmatmul.mubr.bf16.gmra.mxu0 %v583
    %v625 = vpop.f32.mrf.mxu0
    %v626 = vadd.f32 %v568, %v625
    %v627 = vpop.f32.mrf.mxu0
    %v628 = vpop.f32.mrf.mxu0
    %v629 = vadd.f32 %v571, %v628
    %v630 = vpop.f32.mrf.mxu0
    %631 = vmatprep.mubr.bf16.mxu0 0
    %632 = vmatmul.mubr.bf16.gmra.mxu0 %v586
    %v633 = vpop.f32.mrf.mxu0
    %v634 = vadd.f32 %v576, %v633
    %v635 = vpop.f32.mrf.mxu0
    %v636 = vpop.f32.mrf.mxu0
    %v637 = vadd.f32 %v579, %v636
    %v638 = vpop.f32.mrf.mxu0
    %639 = vdwg.mxu0
    %640 = vrot.lane.b32.xlu0 %v145, 112
    %v641 = vpop.permute.xlu0 %640
    %642 = vrot.lane.b32.xlu0 %v146, 112
    %v643 = vpop.permute.xlu0 %642
    %644 = vrot.lane.b32.xlu0 %v145, 80
    %v645 = vpop.permute.xlu0 %644
    %646 = vrot.lane.b32.xlu0 %v146, 80
    %v647 = vpop.permute.xlu0 %646
    %v649 = vsel %vm153, %v641, 0
    %v652 = vsel %vm153, %v643, 0
    %v655 = vsel %vm153, %v645, 0
    %v658 = vsel %vm153, %v647, 0
    %660 = vmatprep.subr.bf16.mxu0 0
    %661 = vmatpush1.bf16.xpose.msra.mxu0 0
    %662 = vmatprep.subr.bf16.mxu0 0
    %663 = vmatpush1.bf16.xpose.msra.mxu0 0
    %664 = vmatprep.subr.bf16.mxu0 0
    %665 = vmatpush1.bf16.xpose.msra.mxu0 0
    %666 = vmatprep.subr.bf16.mxu0 0
    %667 = vmatpush1.bf16.xpose.msra.mxu0 0
    %668 = vmatprep.subr.bf16.mxu0 0
    %669 = vmatpush1.bf16.xpose.msra.mxu0 0
    %670 = vmatprep.subr.bf16.mxu0 0
    %671 = vmatpush1.bf16.xpose.msra.mxu0 0
    %672 = vmatprep.subr.bf16.mxu0 0
    %673 = vmatpush1.bf16.xpose.msra.mxu0 %v658
    %674 = vmatprep.subr.bf16.mxu0 0
    %675 = vmatpush1.bf16.xpose.msra.mxu0 %v655
    %676 = vmatprep.subr.bf16.mxu0 0
    %677 = vmatpush2.bf16.xpose.msra.mxu0 0
    %678 = vmatprep.subr.bf16.mxu0 0
    %679 = vmatpush2.bf16.xpose.msra.mxu0 0
    %680 = vmatprep.subr.bf16.mxu0 0
    %681 = vmatpush2.bf16.xpose.msra.mxu0 0
    %682 = vmatprep.subr.bf16.mxu0 0
    %683 = vmatpush2.bf16.xpose.msra.mxu0 0
    %684 = vmatprep.subr.bf16.mxu0 0
    %685 = vmatpush2.bf16.xpose.msra.mxu0 0
    %686 = vmatprep.subr.bf16.mxu0 0
    %687 = vmatpush2.bf16.xpose.msra.mxu0 0
    %688 = vmatprep.subr.bf16.mxu0 0
    %689 = vmatpush2.bf16.xpose.msra.mxu0 0
    %690 = vmatprep.subr.bf16.mxu0 0
    %691 = vmatpush2.bf16.xpose.msra.mxu0 0
    %692 = vmatprep.mubr.bf16.mxu0 0
    %693 = vmatmul.mubr.bf16.gmra.mxu0 %v649
    %v694 = vpop.f32.mrf.mxu0
    %v695 = vadd.f32 0.0, %v694
    %v696 = vpop.f32.mrf.mxu0
    %v697 = vpop.f32.mrf.mxu0
    %v698 = vadd.f32 0.0, %v697
    %v699 = vpop.f32.mrf.mxu0
    %700 = vmatprep.mubr.bf16.mxu0 0
    %701 = vmatmul.mubr.bf16.gmra.mxu0 %v652
    %v702 = vpop.f32.mrf.mxu0
    %v703 = vadd.f32 0.0, %v702
    %v704 = vpop.f32.mrf.mxu0
    %v705 = vpop.f32.mrf.mxu0
    %v706 = vadd.f32 0.0, %v705
    %v707 = vpop.f32.mrf.mxu0
    %708 = vdwg.mxu0
    %v709 = vmul.f32 %v695, 0.35355338
    %v710 = vmul.f32 %v698, 0.35355338
    %v711 = vmul.f32 %v703, 0.35355338
    %v712 = vmul.f32 %v706, 0.35355338
    %v713 = vadd.f32 %v709, %v60
    %v714 = vadd.f32 %v710, %v61
    %v715 = vadd.f32 %v711, %v62
    %v716 = vadd.f32 %v712, %v63
    %v717 = vsel %vm89, %v713, -inf
    %718 = vmax.xlane.f32.xlu0 %v717
    %v719 = vpop.xlane.xlu0 %718
    %v720 = vsel %vm89, %v714, -inf
    %721 = vmax.xlane.f32.xlu0 %v720
    %v722 = vpop.xlane.xlu0 %721
    %v723 = vsel %vm89, %v715, -inf
    %724 = vmax.xlane.f32.xlu0 %v723
    %v725 = vpop.xlane.xlu0 %724
    %v726 = vsel %vm89, %v716, -inf
    %727 = vmax.xlane.f32.xlu0 %v726
    %v728 = vpop.xlane.xlu0 %727
    %v729 = vsub.f32 %v713, %v719
    %v730 = vsub.f32 %v714, %v722
    %v731 = vsub.f32 %v715, %v725
    %v732 = vsub.f32 %v716, %v728
    %v733 = vmul.f32 %v729, 1.442695
    %v734 = vpow.pop %v733
    %v735 = vmul.f32 %v730, 1.442695
    %v736 = vpow.pop %v735
    %v737 = vmul.f32 %v731, 1.442695
    %v738 = vpow.pop %v737
    %v739 = vmul.f32 %v732, 1.442695
    %v740 = vpow.pop %v739
    %v741 = vsel %vm89, %v734, 0.0
    %742 = vadd.xlane.f32.xlu0 %v741
    %v743 = vpop.xlane.xlu0 %742
    %v744 = vsel %vm89, %v736, 0.0
    %745 = vadd.xlane.f32.xlu0 %v744
    %v746 = vpop.xlane.xlu0 %745
    %v747 = vsel %vm89, %v738, 0.0
    %748 = vadd.xlane.f32.xlu0 %v747
    %v749 = vpop.xlane.xlu0 %748
    %v750 = vsel %vm89, %v740, 0.0
    %751 = vadd.xlane.f32.xlu0 %v750
    %v752 = vpop.xlane.xlu0 %751
    %v753 = vrcp.pop %v743
    %v754 = vmul.f32 %v734, %v753
    %v755 = vrcp.pop %v746
    %v756 = vmul.f32 %v736, %v755
    %v757 = vrcp.pop %v749
    %v758 = vmul.f32 %v738, %v757
    %v759 = vrcp.pop %v752
    %v760 = vmul.f32 %v740, %v759
    %v761 = vpack.c.bf16 %v756, %v754
    %v762 = vpack.c.bf16 %v760, %v758
    %763 = vrot.lane.b32.xlu0 %v145, 48
    %v764 = vpop.permute.xlu0 %763
    %765 = vrot.lane.b32.xlu0 %v146, 48
    %v766 = vpop.permute.xlu0 %765
    %v770 = vsel %vm89, %v761, 0
    %v773 = vsel %vm89, %v762, 0
    %775 = vmatprep.subr.bf16.mxu0 0
    %776 = vmatpush1.bf16.msra.mxu0 0
    %777 = vmatprep.subr.bf16.mxu0 0
    %778 = vmatpush1.bf16.msra.mxu0 0
    %779 = vmatprep.subr.bf16.mxu0 0
    %780 = vmatpush1.bf16.msra.mxu0 0
    %781 = vmatprep.subr.bf16.mxu0 0
    %782 = vmatpush1.bf16.msra.mxu0 0
    %783 = vmatprep.subr.bf16.mxu0 0
    %784 = vmatpush1.bf16.msra.mxu0 0
    %785 = vmatprep.subr.bf16.mxu0 0
    %786 = vmatpush1.bf16.msra.mxu0 0
    %787 = vmatprep.subr.bf16.mxu0 0
    %788 = vmatpush1.bf16.msra.mxu0 %v766
    %789 = vmatprep.subr.bf16.mxu0 0
    %790 = vmatpush1.bf16.msra.mxu0 %v764
    %791 = vmatprep.subr.bf16.mxu0 0
    %792 = vmatpush2.bf16.msra.mxu0 0
    %793 = vmatprep.subr.bf16.mxu0 0
    %794 = vmatpush2.bf16.msra.mxu0 0
    %795 = vmatprep.subr.bf16.mxu0 0
    %796 = vmatpush2.bf16.msra.mxu0 0
    %797 = vmatprep.subr.bf16.mxu0 0
    %798 = vmatpush2.bf16.msra.mxu0 0
    %799 = vmatprep.subr.bf16.mxu0 0
    %800 = vmatpush2.bf16.msra.mxu0 0
    %801 = vmatprep.subr.bf16.mxu0 0
    %802 = vmatpush2.bf16.msra.mxu0 0
    %803 = vmatprep.subr.bf16.mxu0 0
    %804 = vmatpush2.bf16.msra.mxu0 0
    %805 = vmatprep.subr.bf16.mxu0 0
    %806 = vmatpush2.bf16.msra.mxu0 0
    %807 = vmatprep.mubr.bf16.mxu0 0
    %808 = vmatmul.mubr.bf16.gmra.mxu0 %v770
    %v809 = vpop.f32.mrf.mxu0
    %v810 = vadd.f32 0.0, %v809
    %v811 = vpop.f32.mrf.mxu0
    %v812 = vpop.f32.mrf.mxu0
    %v813 = vadd.f32 0.0, %v812
    %v814 = vpop.f32.mrf.mxu0
    %815 = vmatprep.mubr.bf16.mxu0 0
    %816 = vmatmul.mubr.bf16.gmra.mxu0 %v773
    %v817 = vpop.f32.mrf.mxu0
    %v818 = vadd.f32 0.0, %v817
    %v819 = vpop.f32.mrf.mxu0
    %v820 = vpop.f32.mrf.mxu0
    %v821 = vadd.f32 0.0, %v820
    %v822 = vpop.f32.mrf.mxu0
    %823 = vdwg.mxu0
    %v824 = vpack.c.bf16 %v813, %v810
    %v825 = vpack.c.bf16 %v821, %v818
    %s826 = scalar_lea.vmem %s5, 16
    %v827 = vld [vmem:[%s826] sm:$0xff]
    %v828 = vpack.c.bf16 %v827, %v827
    %v830 = vsel %vm153, %v824, 0
    %v833 = vsel %vm153, %v825, 0
    %v836 = vsel %vm529, %v828, 0
    %838 = vmatprep.subr.bf16.mxu0 0
    %839 = vmatpush1.bf16.msra.mxu0 0
    %840 = vmatprep.subr.bf16.mxu0 0
    %841 = vmatpush1.bf16.msra.mxu0 0
    %842 = vmatprep.subr.bf16.mxu0 0
    %843 = vmatpush1.bf16.msra.mxu0 0
    %844 = vmatprep.subr.bf16.mxu0 0
    %845 = vmatpush1.bf16.msra.mxu0 0
    %846 = vmatprep.subr.bf16.mxu0 0
    %847 = vmatpush1.bf16.msra.mxu0 0
    %848 = vmatprep.subr.bf16.mxu0 0
    %849 = vmatpush1.bf16.msra.mxu0 0
    %850 = vmatprep.subr.bf16.mxu0 0
    %851 = vmatpush1.bf16.msra.mxu0 0
    %852 = vmatprep.subr.bf16.mxu0 0
    %853 = vmatpush1.bf16.msra.mxu0 %v836
    %854 = vmatprep.subr.bf16.mxu0 0
    %855 = vmatpush2.bf16.msra.mxu0 0
    %856 = vmatprep.subr.bf16.mxu0 0
    %857 = vmatpush2.bf16.msra.mxu0 0
    %858 = vmatprep.subr.bf16.mxu0 0
    %859 = vmatpush2.bf16.msra.mxu0 0
    %860 = vmatprep.subr.bf16.mxu0 0
    %861 = vmatpush2.bf16.msra.mxu0 0
    %862 = vmatprep.subr.bf16.mxu0 0
    %863 = vmatpush2.bf16.msra.mxu0 0
    %864 = vmatprep.subr.bf16.mxu0 0
    %865 = vmatpush2.bf16.msra.mxu0 0
    %866 = vmatprep.subr.bf16.mxu0 0
    %867 = vmatpush2.bf16.msra.mxu0 0
    %868 = vmatprep.subr.bf16.mxu0 0
    %869 = vmatpush2.bf16.msra.mxu0 0
    %870 = vmatprep.mubr.bf16.mxu0 0
    %871 = vmatmul.mubr.bf16.gmra.mxu0 %v830
    %v872 = vpop.f32.mrf.mxu0
    %v873 = vadd.f32 0.0, %v872
    %v874 = vpop.f32.mrf.mxu0
    %v875 = vpop.f32.mrf.mxu0
    %v876 = vadd.f32 0.0, %v875
    %v877 = vpop.f32.mrf.mxu0
    %878 = vmatprep.mubr.bf16.mxu0 0
    %879 = vmatmul.mubr.bf16.gmra.mxu0 %v833
    %v880 = vpop.f32.mrf.mxu0
    %v881 = vadd.f32 0.0, %v880
    %v882 = vpop.f32.mrf.mxu0
    %v883 = vpop.f32.mrf.mxu0
    %v884 = vadd.f32 0.0, %v883
    %v885 = vpop.f32.mrf.mxu0
    %886 = vdwg.mxu0
    %v887 = vadd.f32 %v626, %v873
    %v888 = vadd.f32 %v629, %v876
    %v889 = vadd.f32 %v634, %v881
    %v890 = vadd.f32 %v637, %v884
    %891 = vrot.lane.b32.xlu0 %v145, 104
    %v892 = vpop.permute.xlu0 %891
    %893 = vrot.lane.b32.xlu0 %v146, 104
    %v894 = vpop.permute.xlu0 %893
    %895 = vrot.lane.b32.xlu0 %v145, 72
    %v896 = vpop.permute.xlu0 %895
    %897 = vrot.lane.b32.xlu0 %v146, 72
    %v898 = vpop.permute.xlu0 %897
    %v900 = vsel %vm153, %v892, 0
    %v903 = vsel %vm153, %v894, 0
    %v906 = vsel %vm153, %v896, 0
    %v909 = vsel %vm153, %v898, 0
    %911 = vmatprep.subr.bf16.mxu0 0
    %912 = vmatpush1.bf16.xpose.msra.mxu0 0
    %913 = vmatprep.subr.bf16.mxu0 0
    %914 = vmatpush1.bf16.xpose.msra.mxu0 0
    %915 = vmatprep.subr.bf16.mxu0 0
    %916 = vmatpush1.bf16.xpose.msra.mxu0 0
    %917 = vmatprep.subr.bf16.mxu0 0
    %918 = vmatpush1.bf16.xpose.msra.mxu0 0
    %919 = vmatprep.subr.bf16.mxu0 0
    %920 = vmatpush1.bf16.xpose.msra.mxu0 0
    %921 = vmatprep.subr.bf16.mxu0 0
    %922 = vmatpush1.bf16.xpose.msra.mxu0 0
    %923 = vmatprep.subr.bf16.mxu0 0
    %924 = vmatpush1.bf16.xpose.msra.mxu0 %v909
    %925 = vmatprep.subr.bf16.mxu0 0
    %926 = vmatpush1.bf16.xpose.msra.mxu0 %v906
    %927 = vmatprep.subr.bf16.mxu0 0
    %928 = vmatpush2.bf16.xpose.msra.mxu0 0
    %929 = vmatprep.subr.bf16.mxu0 0
    %930 = vmatpush2.bf16.xpose.msra.mxu0 0
    %931 = vmatprep.subr.bf16.mxu0 0
    %932 = vmatpush2.bf16.xpose.msra.mxu0 0
    %933 = vmatprep.subr.bf16.mxu0 0
    %934 = vmatpush2.bf16.xpose.msra.mxu0 0
    %935 = vmatprep.subr.bf16.mxu0 0
    %936 = vmatpush2.bf16.xpose.msra.mxu0 0
    %937 = vmatprep.subr.bf16.mxu0 0
    %938 = vmatpush2.bf16.xpose.msra.mxu0 0
    %939 = vmatprep.subr.bf16.mxu0 0
    %940 = vmatpush2.bf16.xpose.msra.mxu0 0
    %941 = vmatprep.subr.bf16.mxu0 0
    %942 = vmatpush2.bf16.xpose.msra.mxu0 0
    %943 = vmatprep.mubr.bf16.mxu0 0
    %944 = vmatmul.mubr.bf16.gmra.mxu0 %v900
    %v945 = vpop.f32.mrf.mxu0
    %v946 = vadd.f32 0.0, %v945
    %v947 = vpop.f32.mrf.mxu0
    %v948 = vpop.f32.mrf.mxu0
    %v949 = vadd.f32 0.0, %v948
    %v950 = vpop.f32.mrf.mxu0
    %951 = vmatprep.mubr.bf16.mxu0 0
    %952 = vmatmul.mubr.bf16.gmra.mxu0 %v903
    %v953 = vpop.f32.mrf.mxu0
    %v954 = vadd.f32 0.0, %v953
    %v955 = vpop.f32.mrf.mxu0
    %v956 = vpop.f32.mrf.mxu0
    %v957 = vadd.f32 0.0, %v956
    %v958 = vpop.f32.mrf.mxu0
    %959 = vdwg.mxu0
    %v960 = vmul.f32 %v946, 0.35355338
    %v961 = vmul.f32 %v949, 0.35355338
    %v962 = vmul.f32 %v954, 0.35355338
    %v963 = vmul.f32 %v957, 0.35355338
    %v964 = vadd.f32 %v960, %v60
    %v965 = vadd.f32 %v961, %v61
    %v966 = vadd.f32 %v962, %v62
    %v967 = vadd.f32 %v963, %v63
    %v968 = vsel %vm89, %v964, -inf
    %969 = vmax.xlane.f32.xlu0 %v968
    %v970 = vpop.xlane.xlu0 %969
    %v971 = vsel %vm89, %v965, -inf
    %972 = vmax.xlane.f32.xlu0 %v971
    %v973 = vpop.xlane.xlu0 %972
    %v974 = vsel %vm89, %v966, -inf
    %975 = vmax.xlane.f32.xlu0 %v974
    %v976 = vpop.xlane.xlu0 %975
    %v977 = vsel %vm89, %v967, -inf
    %978 = vmax.xlane.f32.xlu0 %v977
    %v979 = vpop.xlane.xlu0 %978
    %v980 = vsub.f32 %v964, %v970
    %v981 = vsub.f32 %v965, %v973
    %v982 = vsub.f32 %v966, %v976
    %v983 = vsub.f32 %v967, %v979
    %v984 = vmul.f32 %v980, 1.442695
    %v985 = vpow.pop %v984
    %v986 = vmul.f32 %v981, 1.442695
    %v987 = vpow.pop %v986
    %v988 = vmul.f32 %v982, 1.442695
    %v989 = vpow.pop %v988
    %v990 = vmul.f32 %v983, 1.442695
    %v991 = vpow.pop %v990
    %v992 = vsel %vm89, %v985, 0.0
    %993 = vadd.xlane.f32.xlu0 %v992
    %v994 = vpop.xlane.xlu0 %993
    %v995 = vsel %vm89, %v987, 0.0
    %996 = vadd.xlane.f32.xlu0 %v995
    %v997 = vpop.xlane.xlu0 %996
    %v998 = vsel %vm89, %v989, 0.0
    %999 = vadd.xlane.f32.xlu0 %v998
    %v1000 = vpop.xlane.xlu0 %999
    %v1001 = vsel %vm89, %v991, 0.0
    %1002 = vadd.xlane.f32.xlu0 %v1001
    %v1003 = vpop.xlane.xlu0 %1002
    %v1004 = vrcp.pop %v994
    %v1005 = vmul.f32 %v985, %v1004
    %v1006 = vrcp.pop %v997
    %v1007 = vmul.f32 %v987, %v1006
    %v1008 = vrcp.pop %v1000
    %v1009 = vmul.f32 %v989, %v1008
    %v1010 = vrcp.pop %v1003
    %v1011 = vmul.f32 %v991, %v1010
    %v1012 = vpack.c.bf16 %v1007, %v1005
    %v1013 = vpack.c.bf16 %v1011, %v1009
    %1014 = vrot.lane.b32.xlu0 %v145, 40
    %v1015 = vpop.permute.xlu0 %1014
    %1016 = vrot.lane.b32.xlu0 %v146, 40
    %v1017 = vpop.permute.xlu0 %1016
    %v1021 = vsel %vm89, %v1012, 0
    %v1024 = vsel %vm89, %v1013, 0
    %1026 = vmatprep.subr.bf16.mxu0 0
    %1027 = vmatpush1.bf16.msra.mxu0 0
    %1028 = vmatprep.subr.bf16.mxu0 0
    %1029 = vmatpush1.bf16.msra.mxu0 0
    %1030 = vmatprep.subr.bf16.mxu0 0
    %1031 = vmatpush1.bf16.msra.mxu0 0
    %1032 = vmatprep.subr.bf16.mxu0 0
    %1033 = vmatpush1.bf16.msra.mxu0 0
    %1034 = vmatprep.subr.bf16.mxu0 0
    %1035 = vmatpush1.bf16.msra.mxu0 0
    %1036 = vmatprep.subr.bf16.mxu0 0
    %1037 = vmatpush1.bf16.msra.mxu0 0
    %1038 = vmatprep.subr.bf16.mxu0 0
    %1039 = vmatpush1.bf16.msra.mxu0 %v1017
    %1040 = vmatprep.subr.bf16.mxu0 0
    %1041 = vmatpush1.bf16.msra.mxu0 %v1015
    %1042 = vmatprep.subr.bf16.mxu0 0
    %1043 = vmatpush2.bf16.msra.mxu0 0
    %1044 = vmatprep.subr.bf16.mxu0 0
    %1045 = vmatpush2.bf16.msra.mxu0 0
    %1046 = vmatprep.subr.bf16.mxu0 0
    %1047 = vmatpush2.bf16.msra.mxu0 0
    %1048 = vmatprep.subr.bf16.mxu0 0
    %1049 = vmatpush2.bf16.msra.mxu0 0
    %1050 = vmatprep.subr.bf16.mxu0 0
    %1051 = vmatpush2.bf16.msra.mxu0 0
    %1052 = vmatprep.subr.bf16.mxu0 0
    %1053 = vmatpush2.bf16.msra.mxu0 0
    %1054 = vmatprep.subr.bf16.mxu0 0
    %1055 = vmatpush2.bf16.msra.mxu0 0
    %1056 = vmatprep.subr.bf16.mxu0 0
    %1057 = vmatpush2.bf16.msra.mxu0 0
    %1058 = vmatprep.mubr.bf16.mxu0 0
    %1059 = vmatmul.mubr.bf16.gmra.mxu0 %v1021
    %v1060 = vpop.f32.mrf.mxu0
    %v1061 = vadd.f32 0.0, %v1060
    %v1062 = vpop.f32.mrf.mxu0
    %v1063 = vpop.f32.mrf.mxu0
    %v1064 = vadd.f32 0.0, %v1063
    %v1065 = vpop.f32.mrf.mxu0
    %1066 = vmatprep.mubr.bf16.mxu0 0
    %1067 = vmatmul.mubr.bf16.gmra.mxu0 %v1024
    %v1068 = vpop.f32.mrf.mxu0
    %v1069 = vadd.f32 0.0, %v1068
    %v1070 = vpop.f32.mrf.mxu0
    %v1071 = vpop.f32.mrf.mxu0
    %v1072 = vadd.f32 0.0, %v1071
    %v1073 = vpop.f32.mrf.mxu0
    %1074 = vdwg.mxu0
    %v1075 = vpack.c.bf16 %v1064, %v1061
    %v1076 = vpack.c.bf16 %v1072, %v1069
    %s1077 = scalar_lea.vmem %s5, 24
    %v1078 = vld [vmem:[%s1077] sm:$0xff]
    %v1079 = vpack.c.bf16 %v1078, %v1078
    %v1081 = vsel %vm153, %v1075, 0
    %v1084 = vsel %vm153, %v1076, 0
    %v1087 = vsel %vm529, %v1079, 0
    %1089 = vmatprep.subr.bf16.mxu0 0
    %1090 = vmatpush1.bf16.msra.mxu0 0
    %1091 = vmatprep.subr.bf16.mxu0 0
    %1092 = vmatpush1.bf16.msra.mxu0 0
    %1093 = vmatprep.subr.bf16.mxu0 0
    %1094 = vmatpush1.bf16.msra.mxu0 0
    %1095 = vmatprep.subr.bf16.mxu0 0
    %1096 = vmatpush1.bf16.msra.mxu0 0
    %1097 = vmatprep.subr.bf16.mxu0 0
    %1098 = vmatpush1.bf16.msra.mxu0 0
    %1099 = vmatprep.subr.bf16.mxu0 0
    %1100 = vmatpush1.bf16.msra.mxu0 0
    %1101 = vmatprep.subr.bf16.mxu0 0
    %1102 = vmatpush1.bf16.msra.mxu0 0
    %1103 = vmatprep.subr.bf16.mxu0 0
    %1104 = vmatpush1.bf16.msra.mxu0 %v1087
    %1105 = vmatprep.subr.bf16.mxu0 0
    %1106 = vmatpush2.bf16.msra.mxu0 0
    %1107 = vmatprep.subr.bf16.mxu0 0
    %1108 = vmatpush2.bf16.msra.mxu0 0
    %1109 = vmatprep.subr.bf16.mxu0 0
    %1110 = vmatpush2.bf16.msra.mxu0 0
    %1111 = vmatprep.subr.bf16.mxu0 0
    %1112 = vmatpush2.bf16.msra.mxu0 0
    %1113 = vmatprep.subr.bf16.mxu0 0
    %1114 = vmatpush2.bf16.msra.mxu0 0
    %1115 = vmatprep.subr.bf16.mxu0 0
    %1116 = vmatpush2.bf16.msra.mxu0 0
    %1117 = vmatprep.subr.bf16.mxu0 0
    %1118 = vmatpush2.bf16.msra.mxu0 0
    %1119 = vmatprep.subr.bf16.mxu0 0
    %1120 = vmatpush2.bf16.msra.mxu0 0
    %1121 = vmatprep.mubr.bf16.mxu0 0
    %1122 = vmatmul.mubr.bf16.gmra.mxu0 %v1081
    %v1123 = vpop.f32.mrf.mxu0
    %v1124 = vadd.f32 0.0, %v1123
    %v1125 = vpop.f32.mrf.mxu0
    %v1126 = vpop.f32.mrf.mxu0
    %v1127 = vadd.f32 0.0, %v1126
    %v1128 = vpop.f32.mrf.mxu0
    %1129 = vmatprep.mubr.bf16.mxu0 0
    %1130 = vmatmul.mubr.bf16.gmra.mxu0 %v1084
    %v1131 = vpop.f32.mrf.mxu0
    %v1132 = vadd.f32 0.0, %v1131
    %v1133 = vpop.f32.mrf.mxu0
    %v1134 = vpop.f32.mrf.mxu0
    %v1135 = vadd.f32 0.0, %v1134
    %v1136 = vpop.f32.mrf.mxu0
    %1137 = vdwg.mxu0
    %v1138 = vadd.f32 %v887, %v1124
    %v1139 = vadd.f32 %v888, %v1127
    %v1140 = vadd.f32 %v889, %v1132
    %v1141 = vadd.f32 %v890, %v1135
    %v1142 = vld [vmem:[%s6] sm:$0x1]
    %v1144 = vlaneseq
    %v1145 = vshrl.u32 %v1144, 7
    %v1146 = vsub.s32 0, %v1145
    %v1147 = vrot.slane %v1142, %v1146
    %v1149 = vadd.f32 %v1138, %v1147
    %v1150 = vadd.f32 %v1139, %v1147
    %v1151 = vadd.f32 %v1140, %v1147
    %v1152 = vadd.f32 %v1141, %v1147
    %v1153 = vsel %vm89, %v1149, 0.0
    %1154 = vadd.xlane.f32.xlu0 %v1153
    %v1155 = vpop.xlane.xlu0 %1154
    %v1156 = vsel %vm89, %v1150, 0.0
    %1157 = vadd.xlane.f32.xlu0 %v1156
    %v1158 = vpop.xlane.xlu0 %1157
    %v1159 = vsel %vm89, %v1151, 0.0
    %1160 = vadd.xlane.f32.xlu0 %v1159
    %v1161 = vpop.xlane.xlu0 %1160
    %v1162 = vsel %vm89, %v1152, 0.0
    %1163 = vadd.xlane.f32.xlu0 %v1162
    %v1164 = vpop.xlane.xlu0 %1163
    %v1165 = vrcp.pop 32.0
    %v1166 = vmul.f32 %v1155, %v1165
    %v1167 = vmul.f32 %v1158, %v1165
    %v1168 = vmul.f32 %v1161, %v1165
    %v1169 = vmul.f32 %v1164, %v1165
    %v1170 = vsub.f32 %v1149, %v1166
    %v1171 = vsub.f32 %v1150, %v1167
    %v1172 = vsub.f32 %v1151, %v1168
    %v1173 = vsub.f32 %v1152, %v1169
    %v1174 = vmul.f32 %v1170, %v1170
    %v1175 = vmul.f32 %v1171, %v1171
    %v1176 = vmul.f32 %v1172, %v1172
    %v1177 = vmul.f32 %v1173, %v1173
    %v1178 = vsel %vm89, %v1174, 0.0
    %1179 = vadd.xlane.f32.xlu0 %v1178
    %v1180 = vpop.xlane.xlu0 %1179
    %v1181 = vsel %vm89, %v1175, 0.0
    %1182 = vadd.xlane.f32.xlu0 %v1181
    %v1183 = vpop.xlane.xlu0 %1182
    %v1184 = vsel %vm89, %v1176, 0.0
    %1185 = vadd.xlane.f32.xlu0 %v1184
    %v1186 = vpop.xlane.xlu0 %1185
    %v1187 = vsel %vm89, %v1177, 0.0
    %1188 = vadd.xlane.f32.xlu0 %v1187
    %v1189 = vpop.xlane.xlu0 %1188
    %v1190 = vmul.f32 %v1180, %v1165
    %v1191 = vmul.f32 %v1183, %v1165
    %v1192 = vmul.f32 %v1186, %v1165
    %v1193 = vmul.f32 %v1189, %v1165
    %v1194 = vadd.f32 %v1190, 1e-05
    %v1195 = vadd.f32 %v1191, 1e-05
    %v1196 = vadd.f32 %v1192, 1e-05
    %v1197 = vadd.f32 %v1193, 1e-05
    %v1198 = vrsqrt.pop %v1194
    %v1199 = vrsqrt.pop %v1195
    %v1200 = vrsqrt.pop %v1196
    %v1201 = vrsqrt.pop %v1197
    %v1202 = vmul.f32 %v1170, %v1198
    %v1203 = vmul.f32 %v1171, %v1199
    %v1204 = vmul.f32 %v1172, %v1200
    %v1205 = vmul.f32 %v1173, %v1201
    %v1206 = vld [vmem:[%s7] sm:$0x1]
    %v1208 = vlaneseq
    %v1209 = vshrl.u32 %v1208, 7
    %v1210 = vsub.s32 0, %v1209
    %v1211 = vrot.slane %v1206, %v1210
    %v1213 = vmul.f32 %v1202, %v1211
    %v1214 = vmul.f32 %v1203, %v1211
    %v1215 = vmul.f32 %v1204, %v1211
    %v1216 = vmul.f32 %v1205, %v1211
    %v1217 = vld [vmem:[%s8] sm:$0x1]
    %v1219 = vlaneseq
    %v1220 = vshrl.u32 %v1219, 7
    %v1221 = vsub.s32 0, %v1220
    %v1222 = vrot.slane %v1217, %v1221
    %v1224 = vadd.f32 %v1213, %v1222
    %v1225 = vadd.f32 %v1214, %v1222
    %v1226 = vadd.f32 %v1215, %v1222
    %v1227 = vadd.f32 %v1216, %v1222
    %v1228 = vadd.f32 %v1224, %v52
    %v1229 = vadd.f32 %v1225, %v53
    %v1230 = vadd.f32 %v1226, %v54
    %v1231 = vadd.f32 %v1227, %v55
    %v1232 = vadd.f32 %v1228, %v56
    %v1233 = vadd.f32 %v1229, %v57
    %v1234 = vadd.f32 %v1230, %v58
    %v1235 = vadd.f32 %v1231, %v59
    %v1236 = vpack.c.bf16 %v1233, %v1232
    %v1237 = vpack.c.bf16 %v1235, %v1234
    %v1238 = vld [vmem:[%s9] sm:$0xf]
    %v1239 = vld [vmem:[%s9 + $0x4] sm:$0xf]
    %v1240 = vld [vmem:[%s9 + $0x8] sm:$0xf]
    %v1241 = vld [vmem:[%s9 + $0xc] sm:$0xf]
    %v1242 = vld [vmem:[%s10] sm:$0x1]
    %v1244 = vlaneseq
    %v1245 = vshrl.u32 %v1244, 7
    %v1246 = vsub.s32 0, %v1245
    %v1247 = vrot.slane %v1242, %v1246
    %v1253 = vunpack.c.l.b16 %v1238
    %v1254 = vunpack.c.l.b16 %v1239
    %v1255 = vunpack.c.l.b16 %v1240
    %v1256 = vunpack.c.l.b16 %v1241
    %v1257 = vpack.c.b16 %v1254, %v1253
    %v1258 = vpack.c.b16 %v1256, %v1255
    %v1262 = vsel %vm89, %v1236, 0
    %v1265 = vsel %vm89, %v1237, 0
    %1267 = vmatprep.subr.bf16.mxu0 0
    %1268 = vmatpush1.bf16.msra.mxu0 0
    %1269 = vmatprep.subr.bf16.mxu0 0
    %1270 = vmatpush1.bf16.msra.mxu0 0
    %1271 = vmatprep.subr.bf16.mxu0 0
    %1272 = vmatpush1.bf16.msra.mxu0 0
    %1273 = vmatprep.subr.bf16.mxu0 0
    %1274 = vmatpush1.bf16.msra.mxu0 0
    %1275 = vmatprep.subr.bf16.mxu0 0
    %1276 = vmatpush1.bf16.msra.mxu0 0
    %1277 = vmatprep.subr.bf16.mxu0 0
    %1278 = vmatpush1.bf16.msra.mxu0 0
    %1279 = vmatprep.subr.bf16.mxu0 0
    %1280 = vmatpush1.bf16.msra.mxu0 %v1258
    %1281 = vmatprep.subr.bf16.mxu0 0
    %1282 = vmatpush1.bf16.msra.mxu0 %v1257
    %1283 = vmatprep.subr.bf16.mxu0 0
    %1284 = vmatpush2.bf16.msra.mxu0 0
    %1285 = vmatprep.subr.bf16.mxu0 0
    %1286 = vmatpush2.bf16.msra.mxu0 0
    %1287 = vmatprep.subr.bf16.mxu0 0
    %1288 = vmatpush2.bf16.msra.mxu0 0
    %1289 = vmatprep.subr.bf16.mxu0 0
    %1290 = vmatpush2.bf16.msra.mxu0 0
    %1291 = vmatprep.subr.bf16.mxu0 0
    %1292 = vmatpush2.bf16.msra.mxu0 0
    %1293 = vmatprep.subr.bf16.mxu0 0
    %1294 = vmatpush2.bf16.msra.mxu0 0
    %1295 = vmatprep.subr.bf16.mxu0 0
    %1296 = vmatpush2.bf16.msra.mxu0 0
    %1297 = vmatprep.subr.bf16.mxu0 0
    %1298 = vmatpush2.bf16.msra.mxu0 0
    %1299 = vmatprep.mubr.bf16.mxu0 0
    %1300 = vmatmul.mubr.bf16.gmra.mxu0 %v1262
    %v1301 = vpop.f32.mrf.mxu0
    %v1302 = vadd.f32 %v1247, %v1301
    %v1303 = vpop.f32.mrf.mxu0
    %v1304 = vpop.f32.mrf.mxu0
    %v1305 = vadd.f32 %v1247, %v1304
    %v1306 = vpop.f32.mrf.mxu0
    %1307 = vmatprep.mubr.bf16.mxu0 0
    %1308 = vmatmul.mubr.bf16.gmra.mxu0 %v1265
    %v1309 = vpop.f32.mrf.mxu0
    %v1310 = vadd.f32 %v1247, %v1309
    %v1311 = vpop.f32.mrf.mxu0
    %v1312 = vpop.f32.mrf.mxu0
    %v1313 = vadd.f32 %v1247, %v1312
    %v1314 = vpop.f32.mrf.mxu0
    %1315 = vdwg.mxu0
    %v1316 = vmul.f32 %v1302, %v1302
    %v1317 = vmul.f32 %v1305, %v1305
    %v1318 = vmul.f32 %v1310, %v1310
    %v1319 = vmul.f32 %v1313, %v1313
    %v1320 = vmul.f32 %v1302, %v1316
    %v1321 = vmul.f32 %v1305, %v1317
    %v1322 = vmul.f32 %v1310, %v1318
    %v1323 = vmul.f32 %v1313, %v1319
    %v1324 = vmul.f32 %v1320, 0.044715
    %v1325 = vmul.f32 %v1321, 0.044715
    %v1326 = vmul.f32 %v1322, 0.044715
    %v1327 = vmul.f32 %v1323, 0.044715
    %v1328 = vadd.f32 %v1302, %v1324
    %v1329 = vadd.f32 %v1305, %v1325
    %v1330 = vadd.f32 %v1310, %v1326
    %v1331 = vadd.f32 %v1313, %v1327
    %v1332 = vmul.f32 %v1328, 0.7978846
    %v1333 = vmul.f32 %v1329, 0.7978846
    %v1334 = vmul.f32 %v1330, 0.7978846
    %v1335 = vmul.f32 %v1331, 0.7978846
    %v1336 = vtanh.pop %v1332
    %v1337 = vtanh.pop %v1333
    %v1338 = vtanh.pop %v1334
    %v1339 = vtanh.pop %v1335
    %v1340 = vadd.f32 %v1336, 1.0
    %v1341 = vadd.f32 %v1337, 1.0
    %v1342 = vadd.f32 %v1338, 1.0
    %v1343 = vadd.f32 %v1339, 1.0
    %v1344 = vmul.f32 %v1340, 0.5
    %v1345 = vmul.f32 %v1341, 0.5
    %v1346 = vmul.f32 %v1342, 0.5
    %v1347 = vmul.f32 %v1343, 0.5
    %v1348 = vmul.f32 %v1302, %v1344
    %v1349 = vmul.f32 %v1305, %v1345
    %v1350 = vmul.f32 %v1310, %v1346
    %v1351 = vmul.f32 %v1313, %v1347
    %v1352 = vpack.c.bf16 %v1349, %v1348
    %v1353 = vpack.c.bf16 %v1351, %v1350
    %v1354 = vld [vmem:[%s11] sm:$0xf]
    %v1355 = vld [vmem:[%s11 + $0x4] sm:$0xf]
    %v1356 = vld [vmem:[%s11 + $0x8] sm:$0xf]
    %v1357 = vld [vmem:[%s11 + $0xc] sm:$0xf]
    %v1358 = vld [vmem:[%s11 + $0x10] sm:$0xf]
    %v1359 = vld [vmem:[%s11 + $0x14] sm:$0xf]
    %v1360 = vld [vmem:[%s11 + $0x18] sm:$0xf]
    %v1361 = vld [vmem:[%s11 + $0x1c] sm:$0xf]
    %v1362 = vld [vmem:[%s12] sm:$0x1]
    %v1364 = vlaneseq
    %v1365 = vshrl.u32 %v1364, 7
    %v1366 = vsub.s32 0, %v1365
    %v1367 = vrot.slane %v1362, %v1366
    %v1377 = vunpack.c.l.b16 %v1354
    %v1378 = vunpack.c.l.b16 %v1355
    %v1379 = vunpack.c.l.b16 %v1356
    %v1380 = vunpack.c.l.b16 %v1357
    %v1381 = vunpack.c.l.b16 %v1358
    %v1382 = vunpack.c.l.b16 %v1359
    %v1383 = vunpack.c.l.b16 %v1360
    %v1384 = vunpack.c.l.b16 %v1361
    %v1385 = vpack.c.b16 %v1378, %v1377
    %v1386 = vpack.c.b16 %v1380, %v1379
    %v1387 = vpack.c.b16 %v1382, %v1381
    %v1388 = vpack.c.b16 %v1384, %v1383
    %vm1393 = vcmask 523264
    %v1395 = vsel %vm1393, %v1352, 0
    %v1398 = vsel %vm1393, %v1353, 0
    %1400 = vmatprep.subr.bf16.mxu0 0
    %1401 = vmatpush1.bf16.msra.mxu0 0
    %1402 = vmatprep.subr.bf16.mxu0 0
    %1403 = vmatpush1.bf16.msra.mxu0 0
    %1404 = vmatprep.subr.bf16.mxu0 0
    %1405 = vmatpush1.bf16.msra.mxu0 0
    %1406 = vmatprep.subr.bf16.mxu0 0
    %1407 = vmatpush1.bf16.msra.mxu0 0
    %1408 = vmatprep.subr.bf16.mxu0 0
    %1409 = vmatpush1.bf16.msra.mxu0 %v1388
    %1410 = vmatprep.subr.bf16.mxu0 0
    %1411 = vmatpush1.bf16.msra.mxu0 %v1387
    %1412 = vmatprep.subr.bf16.mxu0 0
    %1413 = vmatpush1.bf16.msra.mxu0 %v1386
    %1414 = vmatprep.subr.bf16.mxu0 0
    %1415 = vmatpush1.bf16.msra.mxu0 %v1385
    %1416 = vmatprep.subr.bf16.mxu0 0
    %1417 = vmatpush2.bf16.msra.mxu0 0
    %1418 = vmatprep.subr.bf16.mxu0 0
    %1419 = vmatpush2.bf16.msra.mxu0 0
    %1420 = vmatprep.subr.bf16.mxu0 0
    %1421 = vmatpush2.bf16.msra.mxu0 0
    %1422 = vmatprep.subr.bf16.mxu0 0
    %1423 = vmatpush2.bf16.msra.mxu0 0
    %1424 = vmatprep.subr.bf16.mxu0 0
    %1425 = vmatpush2.bf16.msra.mxu0 0
    %1426 = vmatprep.subr.bf16.mxu0 0
    %1427 = vmatpush2.bf16.msra.mxu0 0
    %1428 = vmatprep.subr.bf16.mxu0 0
    %1429 = vmatpush2.bf16.msra.mxu0 0
    %1430 = vmatprep.subr.bf16.mxu0 0
    %1431 = vmatpush2.bf16.msra.mxu0 0
    %1432 = vmatprep.mubr.bf16.mxu0 0
    %1433 = vmatmul.mubr.bf16.gmra.mxu0 %v1395
    %v1434 = vpop.f32.mrf.mxu0
    %v1435 = vadd.f32 %v1367, %v1434
    %v1436 = vpop.f32.mrf.mxu0
    %v1437 = vpop.f32.mrf.mxu0
    %v1438 = vadd.f32 %v1367, %v1437
    %v1439 = vpop.f32.mrf.mxu0
    %1440 = vmatprep.mubr.bf16.mxu0 0
    %1441 = vmatmul.mubr.bf16.gmra.mxu0 %v1398
    %v1442 = vpop.f32.mrf.mxu0
    %v1443 = vadd.f32 %v1367, %v1442
    %v1444 = vpop.f32.mrf.mxu0
    %v1445 = vpop.f32.mrf.mxu0
    %v1446 = vadd.f32 %v1367, %v1445
    %v1447 = vpop.f32.mrf.mxu0
    %1448 = vdwg.mxu0
    %v1449 = vsel %vm89, %v1435, 0.0
    %1450 = vadd.xlane.f32.xlu0 %v1449
    %v1451 = vpop.xlane.xlu0 %1450
    %v1452 = vsel %vm89, %v1438, 0.0
    %1453 = vadd.xlane.f32.xlu0 %v1452
    %v1454 = vpop.xlane.xlu0 %1453
    %v1455 = vsel %vm89, %v1443, 0.0
    %1456 = vadd.xlane.f32.xlu0 %v1455
    %v1457 = vpop.xlane.xlu0 %1456
    %v1458 = vsel %vm89, %v1446, 0.0
    %1459 = vadd.xlane.f32.xlu0 %v1458
    %v1460 = vpop.xlane.xlu0 %1459
    %v1461 = vmul.f32 %v1451, %v1165
    %v1462 = vmul.f32 %v1454, %v1165
    %v1463 = vmul.f32 %v1457, %v1165
    %v1464 = vmul.f32 %v1460, %v1165
    %v1465 = vsub.f32 %v1435, %v1461
    %v1466 = vsub.f32 %v1438, %v1462
    %v1467 = vsub.f32 %v1443, %v1463
    %v1468 = vsub.f32 %v1446, %v1464
    %v1469 = vmul.f32 %v1465, %v1465
    %v1470 = vmul.f32 %v1466, %v1466
    %v1471 = vmul.f32 %v1467, %v1467
    %v1472 = vmul.f32 %v1468, %v1468
    %v1473 = vsel %vm89, %v1469, 0.0
    %1474 = vadd.xlane.f32.xlu0 %v1473
    %v1475 = vpop.xlane.xlu0 %1474
    %v1476 = vsel %vm89, %v1470, 0.0
    %1477 = vadd.xlane.f32.xlu0 %v1476
    %v1478 = vpop.xlane.xlu0 %1477
    %v1479 = vsel %vm89, %v1471, 0.0
    %1480 = vadd.xlane.f32.xlu0 %v1479
    %v1481 = vpop.xlane.xlu0 %1480
    %v1482 = vsel %vm89, %v1472, 0.0
    %1483 = vadd.xlane.f32.xlu0 %v1482
    %v1484 = vpop.xlane.xlu0 %1483
    %v1485 = vmul.f32 %v1475, %v1165
    %v1486 = vmul.f32 %v1478, %v1165
    %v1487 = vmul.f32 %v1481, %v1165
    %v1488 = vmul.f32 %v1484, %v1165
    %v1489 = vadd.f32 %v1485, 1e-05
    %v1490 = vadd.f32 %v1486, 1e-05
    %v1491 = vadd.f32 %v1487, 1e-05
    %v1492 = vadd.f32 %v1488, 1e-05
    %v1493 = vrsqrt.pop %v1489
    %v1494 = vrsqrt.pop %v1490
    %v1495 = vrsqrt.pop %v1491
    %v1496 = vrsqrt.pop %v1492
    %v1497 = vmul.f32 %v1465, %v1493
    %v1498 = vmul.f32 %v1466, %v1494
    %v1499 = vmul.f32 %v1467, %v1495
    %v1500 = vmul.f32 %v1468, %v1496
    %v1501 = vld [vmem:[%s13] sm:$0x1]
    %v1503 = vlaneseq
    %v1504 = vshrl.u32 %v1503, 7
    %v1505 = vsub.s32 0, %v1504
    %v1506 = vrot.slane %v1501, %v1505
    %v1508 = vmul.f32 %v1497, %v1506
    %v1509 = vmul.f32 %v1498, %v1506
    %v1510 = vmul.f32 %v1499, %v1506
    %v1511 = vmul.f32 %v1500, %v1506
    %v1512 = vld [vmem:[%s14] sm:$0x1]
    %v1514 = vlaneseq
    %v1515 = vshrl.u32 %v1514, 7
    %v1516 = vsub.s32 0, %v1515
    %v1517 = vrot.slane %v1512, %v1516
    %v1519 = vadd.f32 %v1508, %v1517
    %v1520 = vadd.f32 %v1509, %v1517
    %v1521 = vadd.f32 %v1510, %v1517
    %v1522 = vadd.f32 %v1511, %v1517
    %v1523 = vadd.f32 %v1519, %v1232
    %v1524 = vadd.f32 %v1520, %v1233
    %v1525 = vadd.f32 %v1521, %v1234
    %v1526 = vadd.f32 %v1522, %v1235
    %v1527 = vpack.c.bf16 %v1524, %v1523
    %v1528 = vpack.c.bf16 %v1526, %v1525
    %s1529 = scalar_lea.vmem %s3, 16
    %v1530 = vld [vmem:[%s1529] sm:$0xf]
    %v1531 = vld [vmem:[%s1529 + $0x4] sm:$0xf]
    %v1532 = vld [vmem:[%s1529 + $0x8] sm:$0xf]
    %v1533 = vld [vmem:[%s1529 + $0xc] sm:$0xf]
    %s1534 = scalar_lea.vmem %s4, 1
    %v1535 = vld [vmem:[%s1534] sm:$0x1]
    %v1537 = vlaneseq
    %v1538 = vshrl.u32 %v1537, 7
    %v1539 = vsub.s32 0, %v1538
    %v1540 = vrot.slane %v1535, %v1539
    %v1546 = vunpack.c.l.b16 %v1530
    %v1547 = vunpack.c.l.b16 %v1531
    %v1548 = vunpack.c.l.b16 %v1532
    %v1549 = vunpack.c.l.b16 %v1533
    %v1550 = vpack.c.b16 %v1547, %v1546
    %v1551 = vpack.c.b16 %v1549, %v1548
    %v1555 = vsel %vm89, %v1527, 0
    %v1558 = vsel %vm89, %v1528, 0
    %1560 = vmatprep.subr.bf16.mxu0 0
    %1561 = vmatpush1.bf16.msra.mxu0 0
    %1562 = vmatprep.subr.bf16.mxu0 0
    %1563 = vmatpush1.bf16.msra.mxu0 0
    %1564 = vmatprep.subr.bf16.mxu0 0
    %1565 = vmatpush1.bf16.msra.mxu0 0
    %1566 = vmatprep.subr.bf16.mxu0 0
    %1567 = vmatpush1.bf16.msra.mxu0 0
    %1568 = vmatprep.subr.bf16.mxu0 0
    %1569 = vmatpush1.bf16.msra.mxu0 0
    %1570 = vmatprep.subr.bf16.mxu0 0
    %1571 = vmatpush1.bf16.msra.mxu0 0
    %1572 = vmatprep.subr.bf16.mxu0 0
    %1573 = vmatpush1.bf16.msra.mxu0 %v1551
    %1574 = vmatprep.subr.bf16.mxu0 0
    %1575 = vmatpush1.bf16.msra.mxu0 %v1550
    %1576 = vmatprep.subr.bf16.mxu0 0
    %1577 = vmatpush2.bf16.msra.mxu0 0
    %1578 = vmatprep.subr.bf16.mxu0 0
    %1579 = vmatpush2.bf16.msra.mxu0 0
    %1580 = vmatprep.subr.bf16.mxu0 0
    %1581 = vmatpush2.bf16.msra.mxu0 0
    %1582 = vmatprep.subr.bf16.mxu0 0
    %1583 = vmatpush2.bf16.msra.mxu0 0
    %1584 = vmatprep.subr.bf16.mxu0 0
    %1585 = vmatpush2.bf16.msra.mxu0 0
    %1586 = vmatprep.subr.bf16.mxu0 0
    %1587 = vmatpush2.bf16.msra.mxu0 0
    %1588 = vmatprep.subr.bf16.mxu0 0
    %1589 = vmatpush2.bf16.msra.mxu0 0
    %1590 = vmatprep.subr.bf16.mxu0 0
    %1591 = vmatpush2.bf16.msra.mxu0 0
    %1592 = vmatprep.mubr.bf16.mxu0 0
    %1593 = vmatmul.mubr.bf16.gmra.mxu0 %v1555
    %v1594 = vpop.f32.mrf.mxu0
    %v1595 = vadd.f32 %v1540, %v1594
    %v1596 = vpop.f32.mrf.mxu0
    %v1597 = vpop.f32.mrf.mxu0
    %v1598 = vadd.f32 %v1540, %v1597
    %v1599 = vpop.f32.mrf.mxu0
    %1600 = vmatprep.mubr.bf16.mxu0 0
    %1601 = vmatmul.mubr.bf16.gmra.mxu0 %v1558
    %v1602 = vpop.f32.mrf.mxu0
    %v1603 = vadd.f32 %v1540, %v1602
    %v1604 = vpop.f32.mrf.mxu0
    %v1605 = vpop.f32.mrf.mxu0
    %v1606 = vadd.f32 %v1540, %v1605
    %v1607 = vpop.f32.mrf.mxu0
    %1608 = vdwg.mxu0
    %v1609 = vpack.c.bf16 %v1598, %v1595
    %v1610 = vpack.c.bf16 %v1606, %v1603
    %1613 = vrot.lane.b32.xlu0 %v1609, 96
    %v1614 = vpop.permute.xlu0 %1613
    %1615 = vrot.lane.b32.xlu0 %v1610, 96
    %v1616 = vpop.permute.xlu0 %1615
    %v1618 = vsel %vm153, %v1609, 0
    %v1621 = vsel %vm153, %v1610, 0
    %v1624 = vsel %vm153, %v1614, 0
    %v1627 = vsel %vm153, %v1616, 0
    %1629 = vmatprep.subr.bf16.mxu0 0
    %1630 = vmatpush1.bf16.xpose.msra.mxu0 0
    %1631 = vmatprep.subr.bf16.mxu0 0
    %1632 = vmatpush1.bf16.xpose.msra.mxu0 0
    %1633 = vmatprep.subr.bf16.mxu0 0
    %1634 = vmatpush1.bf16.xpose.msra.mxu0 0
    %1635 = vmatprep.subr.bf16.mxu0 0
    %1636 = vmatpush1.bf16.xpose.msra.mxu0 0
    %1637 = vmatprep.subr.bf16.mxu0 0
    %1638 = vmatpush1.bf16.xpose.msra.mxu0 0
    %1639 = vmatprep.subr.bf16.mxu0 0
    %1640 = vmatpush1.bf16.xpose.msra.mxu0 0
    %1641 = vmatprep.subr.bf16.mxu0 0
    %1642 = vmatpush1.bf16.xpose.msra.mxu0 %v1627
    %1643 = vmatprep.subr.bf16.mxu0 0
    %1644 = vmatpush1.bf16.xpose.msra.mxu0 %v1624
    %1645 = vmatprep.subr.bf16.mxu0 0
    %1646 = vmatpush2.bf16.xpose.msra.mxu0 0
    %1647 = vmatprep.subr.bf16.mxu0 0
    %1648 = vmatpush2.bf16.xpose.msra.mxu0 0
    %1649 = vmatprep.subr.bf16.mxu0 0
    %1650 = vmatpush2.bf16.xpose.msra.mxu0 0
    %1651 = vmatprep.subr.bf16.mxu0 0
    %1652 = vmatpush2.bf16.xpose.msra.mxu0 0
    %1653 = vmatprep.subr.bf16.mxu0 0
    %1654 = vmatpush2.bf16.xpose.msra.mxu0 0
    %1655 = vmatprep.subr.bf16.mxu0 0
    %1656 = vmatpush2.bf16.xpose.msra.mxu0 0
    %1657 = vmatprep.subr.bf16.mxu0 0
    %1658 = vmatpush2.bf16.xpose.msra.mxu0 0
    %1659 = vmatprep.subr.bf16.mxu0 0
    %1660 = vmatpush2.bf16.xpose.msra.mxu0 0
    %1661 = vmatprep.mubr.bf16.mxu0 0
    %1662 = vmatmul.mubr.bf16.gmra.mxu0 %v1618
    %v1663 = vpop.f32.mrf.mxu0
    %v1664 = vadd.f32 0.0, %v1663
    %v1665 = vpop.f32.mrf.mxu0
    %v1666 = vpop.f32.mrf.mxu0
    %v1667 = vadd.f32 0.0, %v1666
    %v1668 = vpop.f32.mrf.mxu0
    %1669 = vmatprep.mubr.bf16.mxu0 0
    %1670 = vmatmul.mubr.bf16.gmra.mxu0 %v1621
    %v1671 = vpop.f32.mrf.mxu0
    %v1672 = vadd.f32 0.0, %v1671
    %v1673 = vpop.f32.mrf.mxu0
    %v1674 = vpop.f32.mrf.mxu0
    %v1675 = vadd.f32 0.0, %v1674
    %v1676 = vpop.f32.mrf.mxu0
    %1677 = vdwg.mxu0
    %v1678 = vmul.f32 %v1664, 0.35355338
    %v1679 = vmul.f32 %v1667, 0.35355338
    %v1680 = vmul.f32 %v1672, 0.35355338
    %v1681 = vmul.f32 %v1675, 0.35355338
    %v1682 = vadd.f32 %v1678, %v60
    %v1683 = vadd.f32 %v1679, %v61
    %v1684 = vadd.f32 %v1680, %v62
    %v1685 = vadd.f32 %v1681, %v63
    %v1686 = vsel %vm89, %v1682, -inf
    %1687 = vmax.xlane.f32.xlu0 %v1686
    %v1688 = vpop.xlane.xlu0 %1687
    %v1689 = vsel %vm89, %v1683, -inf
    %1690 = vmax.xlane.f32.xlu0 %v1689
    %v1691 = vpop.xlane.xlu0 %1690
    %v1692 = vsel %vm89, %v1684, -inf
    %1693 = vmax.xlane.f32.xlu0 %v1692
    %v1694 = vpop.xlane.xlu0 %1693
    %v1695 = vsel %vm89, %v1685, -inf
    %1696 = vmax.xlane.f32.xlu0 %v1695
    %v1697 = vpop.xlane.xlu0 %1696
    %v1698 = vsub.f32 %v1682, %v1688
    %v1699 = vsub.f32 %v1683, %v1691
    %v1700 = vsub.f32 %v1684, %v1694
    %v1701 = vsub.f32 %v1685, %v1697
    %v1702 = vmul.f32 %v1698, 1.442695
    %v1703 = vpow.pop %v1702
    %v1704 = vmul.f32 %v1699, 1.442695
    %v1705 = vpow.pop %v1704
    %v1706 = vmul.f32 %v1700, 1.442695
    %v1707 = vpow.pop %v1706
    %v1708 = vmul.f32 %v1701, 1.442695
    %v1709 = vpow.pop %v1708
    %v1710 = vsel %vm89, %v1703, 0.0
    %1711 = vadd.xlane.f32.xlu0 %v1710
    %v1712 = vpop.xlane.xlu0 %1711
    %v1713 = vsel %vm89, %v1705, 0.0
    %1714 = vadd.xlane.f32.xlu0 %v1713
    %v1715 = vpop.xlane.xlu0 %1714
    %v1716 = vsel %vm89, %v1707, 0.0
    %1717 = vadd.xlane.f32.xlu0 %v1716
    %v1718 = vpop.xlane.xlu0 %1717
    %v1719 = vsel %vm89, %v1709, 0.0
    %1720 = vadd.xlane.f32.xlu0 %v1719
    %v1721 = vpop.xlane.xlu0 %1720
    %v1722 = vrcp.pop %v1712
    %v1723 = vmul.f32 %v1703, %v1722
    %v1724 = vrcp.pop %v1715
    %v1725 = vmul.f32 %v1705, %v1724
    %v1726 = vrcp.pop %v1718
    %v1727 = vmul.f32 %v1707, %v1726
    %v1728 = vrcp.pop %v1721
    %v1729 = vmul.f32 %v1709, %v1728
    %v1730 = vpack.c.bf16 %v1725, %v1723
    %v1731 = vpack.c.bf16 %v1729, %v1727
    %1732 = vrot.lane.b32.xlu0 %v1609, 64
    %v1733 = vpop.permute.xlu0 %1732
    %1734 = vrot.lane.b32.xlu0 %v1610, 64
    %v1735 = vpop.permute.xlu0 %1734
    %v1739 = vsel %vm89, %v1730, 0
    %v1742 = vsel %vm89, %v1731, 0
    %1744 = vmatprep.subr.bf16.mxu0 0
    %1745 = vmatpush1.bf16.msra.mxu0 0
    %1746 = vmatprep.subr.bf16.mxu0 0
    %1747 = vmatpush1.bf16.msra.mxu0 0
    %1748 = vmatprep.subr.bf16.mxu0 0
    %1749 = vmatpush1.bf16.msra.mxu0 0
    %1750 = vmatprep.subr.bf16.mxu0 0
    %1751 = vmatpush1.bf16.msra.mxu0 0
    %1752 = vmatprep.subr.bf16.mxu0 0
    %1753 = vmatpush1.bf16.msra.mxu0 0
    %1754 = vmatprep.subr.bf16.mxu0 0
    %1755 = vmatpush1.bf16.msra.mxu0 0
    %1756 = vmatprep.subr.bf16.mxu0 0
    %1757 = vmatpush1.bf16.msra.mxu0 %v1735
    %1758 = vmatprep.subr.bf16.mxu0 0
    %1759 = vmatpush1.bf16.msra.mxu0 %v1733
    %1760 = vmatprep.subr.bf16.mxu0 0
    %1761 = vmatpush2.bf16.msra.mxu0 0
    %1762 = vmatprep.subr.bf16.mxu0 0
    %1763 = vmatpush2.bf16.msra.mxu0 0
    %1764 = vmatprep.subr.bf16.mxu0 0
    %1765 = vmatpush2.bf16.msra.mxu0 0
    %1766 = vmatprep.subr.bf16.mxu0 0
    %1767 = vmatpush2.bf16.msra.mxu0 0
    %1768 = vmatprep.subr.bf16.mxu0 0
    %1769 = vmatpush2.bf16.msra.mxu0 0
    %1770 = vmatprep.subr.bf16.mxu0 0
    %1771 = vmatpush2.bf16.msra.mxu0 0
    %1772 = vmatprep.subr.bf16.mxu0 0
    %1773 = vmatpush2.bf16.msra.mxu0 0
    %1774 = vmatprep.subr.bf16.mxu0 0
    %1775 = vmatpush2.bf16.msra.mxu0 0
    %1776 = vmatprep.mubr.bf16.mxu0 0
    %1777 = vmatmul.mubr.bf16.gmra.mxu0 %v1739
    %v1778 = vpop.f32.mrf.mxu0
    %v1779 = vadd.f32 0.0, %v1778
    %v1780 = vpop.f32.mrf.mxu0
    %v1781 = vpop.f32.mrf.mxu0
    %v1782 = vadd.f32 0.0, %v1781
    %v1783 = vpop.f32.mrf.mxu0
    %1784 = vmatprep.mubr.bf16.mxu0 0
    %1785 = vmatmul.mubr.bf16.gmra.mxu0 %v1742
    %v1786 = vpop.f32.mrf.mxu0
    %v1787 = vadd.f32 0.0, %v1786
    %v1788 = vpop.f32.mrf.mxu0
    %v1789 = vpop.f32.mrf.mxu0
    %v1790 = vadd.f32 0.0, %v1789
    %v1791 = vpop.f32.mrf.mxu0
    %1792 = vdwg.mxu0
    %v1793 = vpack.c.bf16 %v1782, %v1779
    %v1794 = vpack.c.bf16 %v1790, %v1787
    %s1795 = scalar_lea.vmem %s5, 32
    %v1796 = vld [vmem:[%s1795] sm:$0xff]
    %v1797 = vpack.c.bf16 %v1796, %v1796
    %1798 = vrot.lane.b32.xlu0 %v1609, 120
    %v1799 = vpop.permute.xlu0 %1798
    %1800 = vrot.lane.b32.xlu0 %v1610, 120
    %v1801 = vpop.permute.xlu0 %1800
    %1802 = vrot.lane.b32.xlu0 %v1609, 88
    %v1803 = vpop.permute.xlu0 %1802
    %1804 = vrot.lane.b32.xlu0 %v1610, 88
    %v1805 = vpop.permute.xlu0 %1804
    %v1807 = vsel %vm153, %v1799, 0
    %v1810 = vsel %vm153, %v1801, 0
    %v1813 = vsel %vm153, %v1803, 0
    %v1816 = vsel %vm153, %v1805, 0
    %1818 = vmatprep.subr.bf16.mxu0 0
    %1819 = vmatpush1.bf16.xpose.msra.mxu0 0
    %1820 = vmatprep.subr.bf16.mxu0 0
    %1821 = vmatpush1.bf16.xpose.msra.mxu0 0
    %1822 = vmatprep.subr.bf16.mxu0 0
    %1823 = vmatpush1.bf16.xpose.msra.mxu0 0
    %1824 = vmatprep.subr.bf16.mxu0 0
    %1825 = vmatpush1.bf16.xpose.msra.mxu0 0
    %1826 = vmatprep.subr.bf16.mxu0 0
    %1827 = vmatpush1.bf16.xpose.msra.mxu0 0
    %1828 = vmatprep.subr.bf16.mxu0 0
    %1829 = vmatpush1.bf16.xpose.msra.mxu0 0
    %1830 = vmatprep.subr.bf16.mxu0 0
    %1831 = vmatpush1.bf16.xpose.msra.mxu0 %v1816
    %1832 = vmatprep.subr.bf16.mxu0 0
    %1833 = vmatpush1.bf16.xpose.msra.mxu0 %v1813
    %1834 = vmatprep.subr.bf16.mxu0 0
    %1835 = vmatpush2.bf16.xpose.msra.mxu0 0
    %1836 = vmatprep.subr.bf16.mxu0 0
    %1837 = vmatpush2.bf16.xpose.msra.mxu0 0
    %1838 = vmatprep.subr.bf16.mxu0 0
    %1839 = vmatpush2.bf16.xpose.msra.mxu0 0
    %1840 = vmatprep.subr.bf16.mxu0 0
    %1841 = vmatpush2.bf16.xpose.msra.mxu0 0
    %1842 = vmatprep.subr.bf16.mxu0 0
    %1843 = vmatpush2.bf16.xpose.msra.mxu0 0
    %1844 = vmatprep.subr.bf16.mxu0 0
    %1845 = vmatpush2.bf16.xpose.msra.mxu0 0
    %1846 = vmatprep.subr.bf16.mxu0 0
    %1847 = vmatpush2.bf16.xpose.msra.mxu0 0
    %1848 = vmatprep.subr.bf16.mxu0 0
    %1849 = vmatpush2.bf16.xpose.msra.mxu0 0
    %1850 = vmatprep.mubr.bf16.mxu0 0
    %1851 = vmatmul.mubr.bf16.gmra.mxu0 %v1807
    %v1852 = vpop.f32.mrf.mxu0
    %v1853 = vadd.f32 0.0, %v1852
    %v1854 = vpop.f32.mrf.mxu0
    %v1855 = vpop.f32.mrf.mxu0
    %v1856 = vadd.f32 0.0, %v1855
    %v1857 = vpop.f32.mrf.mxu0
    %1858 = vmatprep.mubr.bf16.mxu0 0
    %1859 = vmatmul.mubr.bf16.gmra.mxu0 %v1810
    %v1860 = vpop.f32.mrf.mxu0
    %v1861 = vadd.f32 0.0, %v1860
    %v1862 = vpop.f32.mrf.mxu0
    %v1863 = vpop.f32.mrf.mxu0
    %v1864 = vadd.f32 0.0, %v1863
    %v1865 = vpop.f32.mrf.mxu0
    %1866 = vdwg.mxu0
    %v1867 = vmul.f32 %v1853, 0.35355338
    %v1868 = vmul.f32 %v1856, 0.35355338
    %v1869 = vmul.f32 %v1861, 0.35355338
    %v1870 = vmul.f32 %v1864, 0.35355338
    %v1871 = vadd.f32 %v1867, %v60
    %v1872 = vadd.f32 %v1868, %v61
    %v1873 = vadd.f32 %v1869, %v62
    %v1874 = vadd.f32 %v1870, %v63
    %v1875 = vsel %vm89, %v1871, -inf
    %1876 = vmax.xlane.f32.xlu0 %v1875
    %v1877 = vpop.xlane.xlu0 %1876
    %v1878 = vsel %vm89, %v1872, -inf
    %1879 = vmax.xlane.f32.xlu0 %v1878
    %v1880 = vpop.xlane.xlu0 %1879
    %v1881 = vsel %vm89, %v1873, -inf
    %1882 = vmax.xlane.f32.xlu0 %v1881
    %v1883 = vpop.xlane.xlu0 %1882
    %v1884 = vsel %vm89, %v1874, -inf
    %1885 = vmax.xlane.f32.xlu0 %v1884
    %v1886 = vpop.xlane.xlu0 %1885
    %v1887 = vsub.f32 %v1871, %v1877
    %v1888 = vsub.f32 %v1872, %v1880
    %v1889 = vsub.f32 %v1873, %v1883
    %v1890 = vsub.f32 %v1874, %v1886
    %v1891 = vmul.f32 %v1887, 1.442695
    %v1892 = vpow.pop %v1891
    %v1893 = vmul.f32 %v1888, 1.442695
    %v1894 = vpow.pop %v1893
    %v1895 = vmul.f32 %v1889, 1.442695
    %v1896 = vpow.pop %v1895
    %v1897 = vmul.f32 %v1890, 1.442695
    %v1898 = vpow.pop %v1897
    %v1899 = vsel %vm89, %v1892, 0.0
    %1900 = vadd.xlane.f32.xlu0 %v1899
    %v1901 = vpop.xlane.xlu0 %1900
    %v1902 = vsel %vm89, %v1894, 0.0
    %1903 = vadd.xlane.f32.xlu0 %v1902
    %v1904 = vpop.xlane.xlu0 %1903
    %v1905 = vsel %vm89, %v1896, 0.0
    %1906 = vadd.xlane.f32.xlu0 %v1905
    %v1907 = vpop.xlane.xlu0 %1906
    %v1908 = vsel %vm89, %v1898, 0.0
    %1909 = vadd.xlane.f32.xlu0 %v1908
    %v1910 = vpop.xlane.xlu0 %1909
    %v1911 = vrcp.pop %v1901
    %v1912 = vmul.f32 %v1892, %v1911
    %v1913 = vrcp.pop %v1904
    %v1914 = vmul.f32 %v1894, %v1913
    %v1915 = vrcp.pop %v1907
    %v1916 = vmul.f32 %v1896, %v1915
    %v1917 = vrcp.pop %v1910
    %v1918 = vmul.f32 %v1898, %v1917
    %v1919 = vpack.c.bf16 %v1914, %v1912
    %v1920 = vpack.c.bf16 %v1918, %v1916
    %1921 = vrot.lane.b32.xlu0 %v1609, 56
    %v1922 = vpop.permute.xlu0 %1921
    %1923 = vrot.lane.b32.xlu0 %v1610, 56
    %v1924 = vpop.permute.xlu0 %1923
    %v1928 = vsel %vm89, %v1919, 0
    %v1931 = vsel %vm89, %v1920, 0
    %1933 = vmatprep.subr.bf16.mxu0 0
    %1934 = vmatpush1.bf16.msra.mxu0 0
    %1935 = vmatprep.subr.bf16.mxu0 0
    %1936 = vmatpush1.bf16.msra.mxu0 0
    %1937 = vmatprep.subr.bf16.mxu0 0
    %1938 = vmatpush1.bf16.msra.mxu0 0
    %1939 = vmatprep.subr.bf16.mxu0 0
    %1940 = vmatpush1.bf16.msra.mxu0 0
    %1941 = vmatprep.subr.bf16.mxu0 0
    %1942 = vmatpush1.bf16.msra.mxu0 0
    %1943 = vmatprep.subr.bf16.mxu0 0
    %1944 = vmatpush1.bf16.msra.mxu0 0
    %1945 = vmatprep.subr.bf16.mxu0 0
    %1946 = vmatpush1.bf16.msra.mxu0 %v1924
    %1947 = vmatprep.subr.bf16.mxu0 0
    %1948 = vmatpush1.bf16.msra.mxu0 %v1922
    %1949 = vmatprep.subr.bf16.mxu0 0
    %1950 = vmatpush2.bf16.msra.mxu0 0
    %1951 = vmatprep.subr.bf16.mxu0 0
    %1952 = vmatpush2.bf16.msra.mxu0 0
    %1953 = vmatprep.subr.bf16.mxu0 0
    %1954 = vmatpush2.bf16.msra.mxu0 0
    %1955 = vmatprep.subr.bf16.mxu0 0
    %1956 = vmatpush2.bf16.msra.mxu0 0
    %1957 = vmatprep.subr.bf16.mxu0 0
    %1958 = vmatpush2.bf16.msra.mxu0 0
    %1959 = vmatprep.subr.bf16.mxu0 0
    %1960 = vmatpush2.bf16.msra.mxu0 0
    %1961 = vmatprep.subr.bf16.mxu0 0
    %1962 = vmatpush2.bf16.msra.mxu0 0
    %1963 = vmatprep.subr.bf16.mxu0 0
    %1964 = vmatpush2.bf16.msra.mxu0 0
    %1965 = vmatprep.mubr.bf16.mxu0 0
    %1966 = vmatmul.mubr.bf16.gmra.mxu0 %v1928
    %v1967 = vpop.f32.mrf.mxu0
    %v1968 = vadd.f32 0.0, %v1967
    %v1969 = vpop.f32.mrf.mxu0
    %v1970 = vpop.f32.mrf.mxu0
    %v1971 = vadd.f32 0.0, %v1970
    %v1972 = vpop.f32.mrf.mxu0
    %1973 = vmatprep.mubr.bf16.mxu0 0
    %1974 = vmatmul.mubr.bf16.gmra.mxu0 %v1931
    %v1975 = vpop.f32.mrf.mxu0
    %v1976 = vadd.f32 0.0, %v1975
    %v1977 = vpop.f32.mrf.mxu0
    %v1978 = vpop.f32.mrf.mxu0
    %v1979 = vadd.f32 0.0, %v1978
    %v1980 = vpop.f32.mrf.mxu0
    %1981 = vdwg.mxu0
    %v1982 = vpack.c.bf16 %v1971, %v1968
    %v1983 = vpack.c.bf16 %v1979, %v1976
    %s1984 = scalar_lea.vmem %s5, 40
    %v1985 = vld [vmem:[%s1984] sm:$0xff]
    %v1986 = vpack.c.bf16 %v1985, %v1985
    %v1988 = vsel %vm153, %v1982, 0
    %v1991 = vsel %vm153, %v1983, 0
    %v1994 = vsel %vm529, %v1986, 0
    %1996 = vmatprep.subr.bf16.mxu0 0
    %1997 = vmatpush1.bf16.msra.mxu0 0
    %1998 = vmatprep.subr.bf16.mxu0 0
    %1999 = vmatpush1.bf16.msra.mxu0 0
    %2000 = vmatprep.subr.bf16.mxu0 0
    %2001 = vmatpush1.bf16.msra.mxu0 0
    %2002 = vmatprep.subr.bf16.mxu0 0
    %2003 = vmatpush1.bf16.msra.mxu0 0
    %2004 = vmatprep.subr.bf16.mxu0 0
    %2005 = vmatpush1.bf16.msra.mxu0 0
    %2006 = vmatprep.subr.bf16.mxu0 0
    %2007 = vmatpush1.bf16.msra.mxu0 0
    %2008 = vmatprep.subr.bf16.mxu0 0
    %2009 = vmatpush1.bf16.msra.mxu0 0
    %2010 = vmatprep.subr.bf16.mxu0 0
    %2011 = vmatpush1.bf16.msra.mxu0 %v1994
    %2012 = vmatprep.subr.bf16.mxu0 0
    %2013 = vmatpush2.bf16.msra.mxu0 0
    %2014 = vmatprep.subr.bf16.mxu0 0
    %2015 = vmatpush2.bf16.msra.mxu0 0
    %2016 = vmatprep.subr.bf16.mxu0 0
    %2017 = vmatpush2.bf16.msra.mxu0 0
    %2018 = vmatprep.subr.bf16.mxu0 0
    %2019 = vmatpush2.bf16.msra.mxu0 0
    %2020 = vmatprep.subr.bf16.mxu0 0
    %2021 = vmatpush2.bf16.msra.mxu0 0
    %2022 = vmatprep.subr.bf16.mxu0 0
    %2023 = vmatpush2.bf16.msra.mxu0 0
    %2024 = vmatprep.subr.bf16.mxu0 0
    %2025 = vmatpush2.bf16.msra.mxu0 0
    %2026 = vmatprep.subr.bf16.mxu0 0
    %2027 = vmatpush2.bf16.msra.mxu0 0
    %2028 = vmatprep.mubr.bf16.mxu0 0
    %2029 = vmatmul.mubr.bf16.gmra.mxu0 %v1988
    %v2030 = vpop.f32.mrf.mxu0
    %v2031 = vadd.f32 0.0, %v2030
    %v2032 = vpop.f32.mrf.mxu0
    %v2033 = vpop.f32.mrf.mxu0
    %v2034 = vadd.f32 0.0, %v2033
    %v2035 = vpop.f32.mrf.mxu0
    %2036 = vmatprep.mubr.bf16.mxu0 0
    %2037 = vmatmul.mubr.bf16.gmra.mxu0 %v1991
    %v2038 = vpop.f32.mrf.mxu0
    %v2039 = vadd.f32 0.0, %v2038
    %v2040 = vpop.f32.mrf.mxu0
    %v2041 = vpop.f32.mrf.mxu0
    %v2042 = vadd.f32 0.0, %v2041
    %v2043 = vpop.f32.mrf.mxu0
    %2044 = vdwg.mxu0
    %v2046 = vsel %vm153, %v1793, 0
    %v2049 = vsel %vm153, %v1794, 0
    %v2052 = vsel %vm529, %v1797, 0
    %2054 = vmatprep.subr.bf16.mxu0 0
    %2055 = vmatpush1.bf16.msra.mxu0 0
    %2056 = vmatprep.subr.bf16.mxu0 0
    %2057 = vmatpush1.bf16.msra.mxu0 0
    %2058 = vmatprep.subr.bf16.mxu0 0
    %2059 = vmatpush1.bf16.msra.mxu0 0
    %2060 = vmatprep.subr.bf16.mxu0 0
    %2061 = vmatpush1.bf16.msra.mxu0 0
    %2062 = vmatprep.subr.bf16.mxu0 0
    %2063 = vmatpush1.bf16.msra.mxu0 0
    %2064 = vmatprep.subr.bf16.mxu0 0
    %2065 = vmatpush1.bf16.msra.mxu0 0
    %2066 = vmatprep.subr.bf16.mxu0 0
    %2067 = vmatpush1.bf16.msra.mxu0 0
    %2068 = vmatprep.subr.bf16.mxu0 0
    %2069 = vmatpush1.bf16.msra.mxu0 %v2052
    %2070 = vmatprep.subr.bf16.mxu0 0
    %2071 = vmatpush2.bf16.msra.mxu0 0
    %2072 = vmatprep.subr.bf16.mxu0 0
    %2073 = vmatpush2.bf16.msra.mxu0 0
    %2074 = vmatprep.subr.bf16.mxu0 0
    %2075 = vmatpush2.bf16.msra.mxu0 0
    %2076 = vmatprep.subr.bf16.mxu0 0
    %2077 = vmatpush2.bf16.msra.mxu0 0
    %2078 = vmatprep.subr.bf16.mxu0 0
    %2079 = vmatpush2.bf16.msra.mxu0 0
    %2080 = vmatprep.subr.bf16.mxu0 0
    %2081 = vmatpush2.bf16.msra.mxu0 0
    %2082 = vmatprep.subr.bf16.mxu0 0
    %2083 = vmatpush2.bf16.msra.mxu0 0
    %2084 = vmatprep.subr.bf16.mxu0 0
    %2085 = vmatpush2.bf16.msra.mxu0 0
    %2086 = vmatprep.mubr.bf16.mxu0 0
    %2087 = vmatmul.mubr.bf16.gmra.mxu0 %v2046
    %v2088 = vpop.f32.mrf.mxu0
    %v2089 = vadd.f32 %v2031, %v2088
    %v2090 = vpop.f32.mrf.mxu0
    %v2091 = vpop.f32.mrf.mxu0
    %v2092 = vadd.f32 %v2034, %v2091
    %v2093 = vpop.f32.mrf.mxu0
    %2094 = vmatprep.mubr.bf16.mxu0 0
    %2095 = vmatmul.mubr.bf16.gmra.mxu0 %v2049
    %v2096 = vpop.f32.mrf.mxu0
    %v2097 = vadd.f32 %v2039, %v2096
    %v2098 = vpop.f32.mrf.mxu0
    %v2099 = vpop.f32.mrf.mxu0
    %v2100 = vadd.f32 %v2042, %v2099
    %v2101 = vpop.f32.mrf.mxu0
    %2102 = vdwg.mxu0
    %2103 = vrot.lane.b32.xlu0 %v1609, 112
    %v2104 = vpop.permute.xlu0 %2103
    %2105 = vrot.lane.b32.xlu0 %v1610, 112
    %v2106 = vpop.permute.xlu0 %2105
    %2107 = vrot.lane.b32.xlu0 %v1609, 80
    %v2108 = vpop.permute.xlu0 %2107
    %2109 = vrot.lane.b32.xlu0 %v1610, 80
    %v2110 = vpop.permute.xlu0 %2109
    %v2112 = vsel %vm153, %v2104, 0
    %v2115 = vsel %vm153, %v2106, 0
    %v2118 = vsel %vm153, %v2108, 0
    %v2121 = vsel %vm153, %v2110, 0
    %2123 = vmatprep.subr.bf16.mxu0 0
    %2124 = vmatpush1.bf16.xpose.msra.mxu0 0
    %2125 = vmatprep.subr.bf16.mxu0 0
    %2126 = vmatpush1.bf16.xpose.msra.mxu0 0
    %2127 = vmatprep.subr.bf16.mxu0 0
    %2128 = vmatpush1.bf16.xpose.msra.mxu0 0
    %2129 = vmatprep.subr.bf16.mxu0 0
    %2130 = vmatpush1.bf16.xpose.msra.mxu0 0
    %2131 = vmatprep.subr.bf16.mxu0 0
    %2132 = vmatpush1.bf16.xpose.msra.mxu0 0
    %2133 = vmatprep.subr.bf16.mxu0 0
    %2134 = vmatpush1.bf16.xpose.msra.mxu0 0
    %2135 = vmatprep.subr.bf16.mxu0 0
    %2136 = vmatpush1.bf16.xpose.msra.mxu0 %v2121
    %2137 = vmatprep.subr.bf16.mxu0 0
    %2138 = vmatpush1.bf16.xpose.msra.mxu0 %v2118
    %2139 = vmatprep.subr.bf16.mxu0 0
    %2140 = vmatpush2.bf16.xpose.msra.mxu0 0
    %2141 = vmatprep.subr.bf16.mxu0 0
    %2142 = vmatpush2.bf16.xpose.msra.mxu0 0
    %2143 = vmatprep.subr.bf16.mxu0 0
    %2144 = vmatpush2.bf16.xpose.msra.mxu0 0
    %2145 = vmatprep.subr.bf16.mxu0 0
    %2146 = vmatpush2.bf16.xpose.msra.mxu0 0
    %2147 = vmatprep.subr.bf16.mxu0 0
    %2148 = vmatpush2.bf16.xpose.msra.mxu0 0
    %2149 = vmatprep.subr.bf16.mxu0 0
    %2150 = vmatpush2.bf16.xpose.msra.mxu0 0
    %2151 = vmatprep.subr.bf16.mxu0 0
    %2152 = vmatpush2.bf16.xpose.msra.mxu0 0
    %2153 = vmatprep.subr.bf16.mxu0 0
    %2154 = vmatpush2.bf16.xpose.msra.mxu0 0
    %2155 = vmatprep.mubr.bf16.mxu0 0
    %2156 = vmatmul.mubr.bf16.gmra.mxu0 %v2112
    %v2157 = vpop.f32.mrf.mxu0
    %v2158 = vadd.f32 0.0, %v2157
    %v2159 = vpop.f32.mrf.mxu0
    %v2160 = vpop.f32.mrf.mxu0
    %v2161 = vadd.f32 0.0, %v2160
    %v2162 = vpop.f32.mrf.mxu0
    %2163 = vmatprep.mubr.bf16.mxu0 0
    %2164 = vmatmul.mubr.bf16.gmra.mxu0 %v2115
    %v2165 = vpop.f32.mrf.mxu0
    %v2166 = vadd.f32 0.0, %v2165
    %v2167 = vpop.f32.mrf.mxu0
    %v2168 = vpop.f32.mrf.mxu0
    %v2169 = vadd.f32 0.0, %v2168
    %v2170 = vpop.f32.mrf.mxu0
    %2171 = vdwg.mxu0
    %v2172 = vmul.f32 %v2158, 0.35355338
    %v2173 = vmul.f32 %v2161, 0.35355338
    %v2174 = vmul.f32 %v2166, 0.35355338
    %v2175 = vmul.f32 %v2169, 0.35355338
    %v2176 = vadd.f32 %v2172, %v60
    %v2177 = vadd.f32 %v2173, %v61
    %v2178 = vadd.f32 %v2174, %v62
    %v2179 = vadd.f32 %v2175, %v63
    %v2180 = vsel %vm89, %v2176, -inf
    %2181 = vmax.xlane.f32.xlu0 %v2180
    %v2182 = vpop.xlane.xlu0 %2181
    %v2183 = vsel %vm89, %v2177, -inf
    %2184 = vmax.xlane.f32.xlu0 %v2183
    %v2185 = vpop.xlane.xlu0 %2184
    %v2186 = vsel %vm89, %v2178, -inf
    %2187 = vmax.xlane.f32.xlu0 %v2186
    %v2188 = vpop.xlane.xlu0 %2187
    %v2189 = vsel %vm89, %v2179, -inf
    %2190 = vmax.xlane.f32.xlu0 %v2189
    %v2191 = vpop.xlane.xlu0 %2190
    %v2192 = vsub.f32 %v2176, %v2182
    %v2193 = vsub.f32 %v2177, %v2185
    %v2194 = vsub.f32 %v2178, %v2188
    %v2195 = vsub.f32 %v2179, %v2191
    %v2196 = vmul.f32 %v2192, 1.442695
    %v2197 = vpow.pop %v2196
    %v2198 = vmul.f32 %v2193, 1.442695
    %v2199 = vpow.pop %v2198
    %v2200 = vmul.f32 %v2194, 1.442695
    %v2201 = vpow.pop %v2200
    %v2202 = vmul.f32 %v2195, 1.442695
    %v2203 = vpow.pop %v2202
    %v2204 = vsel %vm89, %v2197, 0.0
    %2205 = vadd.xlane.f32.xlu0 %v2204
    %v2206 = vpop.xlane.xlu0 %2205
    %v2207 = vsel %vm89, %v2199, 0.0
    %2208 = vadd.xlane.f32.xlu0 %v2207
    %v2209 = vpop.xlane.xlu0 %2208
    %v2210 = vsel %vm89, %v2201, 0.0
    %2211 = vadd.xlane.f32.xlu0 %v2210
    %v2212 = vpop.xlane.xlu0 %2211
    %v2213 = vsel %vm89, %v2203, 0.0
    %2214 = vadd.xlane.f32.xlu0 %v2213
    %v2215 = vpop.xlane.xlu0 %2214
    %v2216 = vrcp.pop %v2206
    %v2217 = vmul.f32 %v2197, %v2216
    %v2218 = vrcp.pop %v2209
    %v2219 = vmul.f32 %v2199, %v2218
    %v2220 = vrcp.pop %v2212
    %v2221 = vmul.f32 %v2201, %v2220
    %v2222 = vrcp.pop %v2215
    %v2223 = vmul.f32 %v2203, %v2222
    %v2224 = vpack.c.bf16 %v2219, %v2217
    %v2225 = vpack.c.bf16 %v2223, %v2221
    %2226 = vrot.lane.b32.xlu0 %v1609, 48
    %v2227 = vpop.permute.xlu0 %2226
    %2228 = vrot.lane.b32.xlu0 %v1610, 48
    %v2229 = vpop.permute.xlu0 %2228
    %v2233 = vsel %vm89, %v2224, 0
    %v2236 = vsel %vm89, %v2225, 0
    %2238 = vmatprep.subr.bf16.mxu0 0
    %2239 = vmatpush1.bf16.msra.mxu0 0
    %2240 = vmatprep.subr.bf16.mxu0 0
    %2241 = vmatpush1.bf16.msra.mxu0 0
    %2242 = vmatprep.subr.bf16.mxu0 0
    %2243 = vmatpush1.bf16.msra.mxu0 0
    %2244 = vmatprep.subr.bf16.mxu0 0
    %2245 = vmatpush1.bf16.msra.mxu0 0
    %2246 = vmatprep.subr.bf16.mxu0 0
    %2247 = vmatpush1.bf16.msra.mxu0 0
    %2248 = vmatprep.subr.bf16.mxu0 0
    %2249 = vmatpush1.bf16.msra.mxu0 0
    %2250 = vmatprep.subr.bf16.mxu0 0
    %2251 = vmatpush1.bf16.msra.mxu0 %v2229
    %2252 = vmatprep.subr.bf16.mxu0 0
    %2253 = vmatpush1.bf16.msra.mxu0 %v2227
    %2254 = vmatprep.subr.bf16.mxu0 0
    %2255 = vmatpush2.bf16.msra.mxu0 0
    %2256 = vmatprep.subr.bf16.mxu0 0
    %2257 = vmatpush2.bf16.msra.mxu0 0
    %2258 = vmatprep.subr.bf16.mxu0 0
    %2259 = vmatpush2.bf16.msra.mxu0 0
    %2260 = vmatprep.subr.bf16.mxu0 0
    %2261 = vmatpush2.bf16.msra.mxu0 0
    %2262 = vmatprep.subr.bf16.mxu0 0
    %2263 = vmatpush2.bf16.msra.mxu0 0
    %2264 = vmatprep.subr.bf16.mxu0 0
    %2265 = vmatpush2.bf16.msra.mxu0 0
    %2266 = vmatprep.subr.bf16.mxu0 0
    %2267 = vmatpush2.bf16.msra.mxu0 0
    %2268 = vmatprep.subr.bf16.mxu0 0
    %2269 = vmatpush2.bf16.msra.mxu0 0
    %2270 = vmatprep.mubr.bf16.mxu0 0
    %2271 = vmatmul.mubr.bf16.gmra.mxu0 %v2233
    %v2272 = vpop.f32.mrf.mxu0
    %v2273 = vadd.f32 0.0, %v2272
    %v2274 = vpop.f32.mrf.mxu0
    %v2275 = vpop.f32.mrf.mxu0
    %v2276 = vadd.f32 0.0, %v2275
    %v2277 = vpop.f32.mrf.mxu0
    %2278 = vmatprep.mubr.bf16.mxu0 0
    %2279 = vmatmul.mubr.bf16.gmra.mxu0 %v2236
    %v2280 = vpop.f32.mrf.mxu0
    %v2281 = vadd.f32 0.0, %v2280
    %v2282 = vpop.f32.mrf.mxu0
    %v2283 = vpop.f32.mrf.mxu0
    %v2284 = vadd.f32 0.0, %v2283
    %v2285 = vpop.f32.mrf.mxu0
    %2286 = vdwg.mxu0
    %v2287 = vpack.c.bf16 %v2276, %v2273
    %v2288 = vpack.c.bf16 %v2284, %v2281
    %s2289 = scalar_lea.vmem %s5, 48
    %v2290 = vld [vmem:[%s2289] sm:$0xff]
    %v2291 = vpack.c.bf16 %v2290, %v2290
    %v2293 = vsel %vm153, %v2287, 0
    %v2296 = vsel %vm153, %v2288, 0
    %v2299 = vsel %vm529, %v2291, 0
    %2301 = vmatprep.subr.bf16.mxu0 0
    %2302 = vmatpush1.bf16.msra.mxu0 0
    %2303 = vmatprep.subr.bf16.mxu0 0
    %2304 = vmatpush1.bf16.msra.mxu0 0
    %2305 = vmatprep.subr.bf16.mxu0 0
    %2306 = vmatpush1.bf16.msra.mxu0 0
    %2307 = vmatprep.subr.bf16.mxu0 0
    %2308 = vmatpush1.bf16.msra.mxu0 0
    %2309 = vmatprep.subr.bf16.mxu0 0
    %2310 = vmatpush1.bf16.msra.mxu0 0
    %2311 = vmatprep.subr.bf16.mxu0 0
    %2312 = vmatpush1.bf16.msra.mxu0 0
    %2313 = vmatprep.subr.bf16.mxu0 0
    %2314 = vmatpush1.bf16.msra.mxu0 0
    %2315 = vmatprep.subr.bf16.mxu0 0
    %2316 = vmatpush1.bf16.msra.mxu0 %v2299
    %2317 = vmatprep.subr.bf16.mxu0 0
    %2318 = vmatpush2.bf16.msra.mxu0 0
    %2319 = vmatprep.subr.bf16.mxu0 0
    %2320 = vmatpush2.bf16.msra.mxu0 0
    %2321 = vmatprep.subr.bf16.mxu0 0
    %2322 = vmatpush2.bf16.msra.mxu0 0
    %2323 = vmatprep.subr.bf16.mxu0 0
    %2324 = vmatpush2.bf16.msra.mxu0 0
    %2325 = vmatprep.subr.bf16.mxu0 0
    %2326 = vmatpush2.bf16.msra.mxu0 0
    %2327 = vmatprep.subr.bf16.mxu0 0
    %2328 = vmatpush2.bf16.msra.mxu0 0
    %2329 = vmatprep.subr.bf16.mxu0 0
    %2330 = vmatpush2.bf16.msra.mxu0 0
    %2331 = vmatprep.subr.bf16.mxu0 0
    %2332 = vmatpush2.bf16.msra.mxu0 0
    %2333 = vmatprep.mubr.bf16.mxu0 0
    %2334 = vmatmul.mubr.bf16.gmra.mxu0 %v2293
    %v2335 = vpop.f32.mrf.mxu0
    %v2336 = vadd.f32 0.0, %v2335
    %v2337 = vpop.f32.mrf.mxu0
    %v2338 = vpop.f32.mrf.mxu0
    %v2339 = vadd.f32 0.0, %v2338
    %v2340 = vpop.f32.mrf.mxu0
    %2341 = vmatprep.mubr.bf16.mxu0 0
    %2342 = vmatmul.mubr.bf16.gmra.mxu0 %v2296
    %v2343 = vpop.f32.mrf.mxu0
    %v2344 = vadd.f32 0.0, %v2343
    %v2345 = vpop.f32.mrf.mxu0
    %v2346 = vpop.f32.mrf.mxu0
    %v2347 = vadd.f32 0.0, %v2346
    %v2348 = vpop.f32.mrf.mxu0
    %2349 = vdwg.mxu0
    %v2350 = vadd.f32 %v2089, %v2336
    %v2351 = vadd.f32 %v2092, %v2339
    %v2352 = vadd.f32 %v2097, %v2344
    %v2353 = vadd.f32 %v2100, %v2347
    %2354 = vrot.lane.b32.xlu0 %v1609, 104
    %v2355 = vpop.permute.xlu0 %2354
    %2356 = vrot.lane.b32.xlu0 %v1610, 104
    %v2357 = vpop.permute.xlu0 %2356
    %2358 = vrot.lane.b32.xlu0 %v1609, 72
    %v2359 = vpop.permute.xlu0 %2358
    %2360 = vrot.lane.b32.xlu0 %v1610, 72
    %v2361 = vpop.permute.xlu0 %2360
    %v2363 = vsel %vm153, %v2355, 0
    %v2366 = vsel %vm153, %v2357, 0
    %v2369 = vsel %vm153, %v2359, 0
    %v2372 = vsel %vm153, %v2361, 0
    %2374 = vmatprep.subr.bf16.mxu0 0
    %2375 = vmatpush1.bf16.xpose.msra.mxu0 0
    %2376 = vmatprep.subr.bf16.mxu0 0
    %2377 = vmatpush1.bf16.xpose.msra.mxu0 0
    %2378 = vmatprep.subr.bf16.mxu0 0
    %2379 = vmatpush1.bf16.xpose.msra.mxu0 0
    %2380 = vmatprep.subr.bf16.mxu0 0
    %2381 = vmatpush1.bf16.xpose.msra.mxu0 0
    %2382 = vmatprep.subr.bf16.mxu0 0
    %2383 = vmatpush1.bf16.xpose.msra.mxu0 0
    %2384 = vmatprep.subr.bf16.mxu0 0
    %2385 = vmatpush1.bf16.xpose.msra.mxu0 0
    %2386 = vmatprep.subr.bf16.mxu0 0
    %2387 = vmatpush1.bf16.xpose.msra.mxu0 %v2372
    %2388 = vmatprep.subr.bf16.mxu0 0
    %2389 = vmatpush1.bf16.xpose.msra.mxu0 %v2369
    %2390 = vmatprep.subr.bf16.mxu0 0
    %2391 = vmatpush2.bf16.xpose.msra.mxu0 0
    %2392 = vmatprep.subr.bf16.mxu0 0
    %2393 = vmatpush2.bf16.xpose.msra.mxu0 0
    %2394 = vmatprep.subr.bf16.mxu0 0
    %2395 = vmatpush2.bf16.xpose.msra.mxu0 0
    %2396 = vmatprep.subr.bf16.mxu0 0
    %2397 = vmatpush2.bf16.xpose.msra.mxu0 0
    %2398 = vmatprep.subr.bf16.mxu0 0
    %2399 = vmatpush2.bf16.xpose.msra.mxu0 0
    %2400 = vmatprep.subr.bf16.mxu0 0
    %2401 = vmatpush2.bf16.xpose.msra.mxu0 0
    %2402 = vmatprep.subr.bf16.mxu0 0
    %2403 = vmatpush2.bf16.xpose.msra.mxu0 0
    %2404 = vmatprep.subr.bf16.mxu0 0
    %2405 = vmatpush2.bf16.xpose.msra.mxu0 0
    %2406 = vmatprep.mubr.bf16.mxu0 0
    %2407 = vmatmul.mubr.bf16.gmra.mxu0 %v2363
    %v2408 = vpop.f32.mrf.mxu0
    %v2409 = vadd.f32 0.0, %v2408
    %v2410 = vpop.f32.mrf.mxu0
    %v2411 = vpop.f32.mrf.mxu0
    %v2412 = vadd.f32 0.0, %v2411
    %v2413 = vpop.f32.mrf.mxu0
    %2414 = vmatprep.mubr.bf16.mxu0 0
    %2415 = vmatmul.mubr.bf16.gmra.mxu0 %v2366
    %v2416 = vpop.f32.mrf.mxu0
    %v2417 = vadd.f32 0.0, %v2416
    %v2418 = vpop.f32.mrf.mxu0
    %v2419 = vpop.f32.mrf.mxu0
    %v2420 = vadd.f32 0.0, %v2419
    %v2421 = vpop.f32.mrf.mxu0
    %2422 = vdwg.mxu0
    %v2423 = vmul.f32 %v2409, 0.35355338
    %v2424 = vmul.f32 %v2412, 0.35355338
    %v2425 = vmul.f32 %v2417, 0.35355338
    %v2426 = vmul.f32 %v2420, 0.35355338
    %v2427 = vadd.f32 %v2423, %v60
    %v2428 = vadd.f32 %v2424, %v61
    %v2429 = vadd.f32 %v2425, %v62
    %v2430 = vadd.f32 %v2426, %v63
    %v2431 = vsel %vm89, %v2427, -inf
    %2432 = vmax.xlane.f32.xlu0 %v2431
    %v2433 = vpop.xlane.xlu0 %2432
    %v2434 = vsel %vm89, %v2428, -inf
    %2435 = vmax.xlane.f32.xlu0 %v2434
    %v2436 = vpop.xlane.xlu0 %2435
    %v2437 = vsel %vm89, %v2429, -inf
    %2438 = vmax.xlane.f32.xlu0 %v2437
    %v2439 = vpop.xlane.xlu0 %2438
    %v2440 = vsel %vm89, %v2430, -inf
    %2441 = vmax.xlane.f32.xlu0 %v2440
    %v2442 = vpop.xlane.xlu0 %2441
    %v2443 = vsub.f32 %v2427, %v2433
    %v2444 = vsub.f32 %v2428, %v2436
    %v2445 = vsub.f32 %v2429, %v2439
    %v2446 = vsub.f32 %v2430, %v2442
    %v2447 = vmul.f32 %v2443, 1.442695
    %v2448 = vpow.pop %v2447
    %v2449 = vmul.f32 %v2444, 1.442695
    %v2450 = vpow.pop %v2449
    %v2451 = vmul.f32 %v2445, 1.442695
    %v2452 = vpow.pop %v2451
    %v2453 = vmul.f32 %v2446, 1.442695
    %v2454 = vpow.pop %v2453
    %v2455 = vsel %vm89, %v2448, 0.0
    %2456 = vadd.xlane.f32.xlu0 %v2455
    %v2457 = vpop.xlane.xlu0 %2456
    %v2458 = vsel %vm89, %v2450, 0.0
    %2459 = vadd.xlane.f32.xlu0 %v2458
    %v2460 = vpop.xlane.xlu0 %2459
    %v2461 = vsel %vm89, %v2452, 0.0
    %2462 = vadd.xlane.f32.xlu0 %v2461
    %v2463 = vpop.xlane.xlu0 %2462
    %v2464 = vsel %vm89, %v2454, 0.0
    %2465 = vadd.xlane.f32.xlu0 %v2464
    %v2466 = vpop.xlane.xlu0 %2465
    %v2467 = vrcp.pop %v2457
    %v2468 = vmul.f32 %v2448, %v2467
    %v2469 = vrcp.pop %v2460
    %v2470 = vmul.f32 %v2450, %v2469
    %v2471 = vrcp.pop %v2463
    %v2472 = vmul.f32 %v2452, %v2471
    %v2473 = vrcp.pop %v2466
    %v2474 = vmul.f32 %v2454, %v2473
    %v2475 = vpack.c.bf16 %v2470, %v2468
    %v2476 = vpack.c.bf16 %v2474, %v2472
    %2477 = vrot.lane.b32.xlu0 %v1609, 40
    %v2478 = vpop.permute.xlu0 %2477
    %2479 = vrot.lane.b32.xlu0 %v1610, 40
    %v2480 = vpop.permute.xlu0 %2479
    %v2484 = vsel %vm89, %v2475, 0
    %v2487 = vsel %vm89, %v2476, 0
    %2489 = vmatprep.subr.bf16.mxu0 0
    %2490 = vmatpush1.bf16.msra.mxu0 0
    %2491 = vmatprep.subr.bf16.mxu0 0
    %2492 = vmatpush1.bf16.msra.mxu0 0
    %2493 = vmatprep.subr.bf16.mxu0 0
    %2494 = vmatpush1.bf16.msra.mxu0 0
    %2495 = vmatprep.subr.bf16.mxu0 0
    %2496 = vmatpush1.bf16.msra.mxu0 0
    %2497 = vmatprep.subr.bf16.mxu0 0
    %2498 = vmatpush1.bf16.msra.mxu0 0
    %2499 = vmatprep.subr.bf16.mxu0 0
    %2500 = vmatpush1.bf16.msra.mxu0 0
    %2501 = vmatprep.subr.bf16.mxu0 0
    %2502 = vmatpush1.bf16.msra.mxu0 %v2480
    %2503 = vmatprep.subr.bf16.mxu0 0
    %2504 = vmatpush1.bf16.msra.mxu0 %v2478
    %2505 = vmatprep.subr.bf16.mxu0 0
    %2506 = vmatpush2.bf16.msra.mxu0 0
    %2507 = vmatprep.subr.bf16.mxu0 0
    %2508 = vmatpush2.bf16.msra.mxu0 0
    %2509 = vmatprep.subr.bf16.mxu0 0
    %2510 = vmatpush2.bf16.msra.mxu0 0
    %2511 = vmatprep.subr.bf16.mxu0 0
    %2512 = vmatpush2.bf16.msra.mxu0 0
    %2513 = vmatprep.subr.bf16.mxu0 0
    %2514 = vmatpush2.bf16.msra.mxu0 0
    %2515 = vmatprep.subr.bf16.mxu0 0
    %2516 = vmatpush2.bf16.msra.mxu0 0
    %2517 = vmatprep.subr.bf16.mxu0 0
    %2518 = vmatpush2.bf16.msra.mxu0 0
    %2519 = vmatprep.subr.bf16.mxu0 0
    %2520 = vmatpush2.bf16.msra.mxu0 0
    %2521 = vmatprep.mubr.bf16.mxu0 0
    %2522 = vmatmul.mubr.bf16.gmra.mxu0 %v2484
    %v2523 = vpop.f32.mrf.mxu0
    %v2524 = vadd.f32 0.0, %v2523
    %v2525 = vpop.f32.mrf.mxu0
    %v2526 = vpop.f32.mrf.mxu0
    %v2527 = vadd.f32 0.0, %v2526
    %v2528 = vpop.f32.mrf.mxu0
    %2529 = vmatprep.mubr.bf16.mxu0 0
    %2530 = vmatmul.mubr.bf16.gmra.mxu0 %v2487
    %v2531 = vpop.f32.mrf.mxu0
    %v2532 = vadd.f32 0.0, %v2531
    %v2533 = vpop.f32.mrf.mxu0
    %v2534 = vpop.f32.mrf.mxu0
    %v2535 = vadd.f32 0.0, %v2534
    %v2536 = vpop.f32.mrf.mxu0
    %2537 = vdwg.mxu0
    %v2538 = vpack.c.bf16 %v2527, %v2524
    %v2539 = vpack.c.bf16 %v2535, %v2532
    %s2540 = scalar_lea.vmem %s5, 56
    %v2541 = vld [vmem:[%s2540] sm:$0xff]
    %v2542 = vpack.c.bf16 %v2541, %v2541
    %v2544 = vsel %vm153, %v2538, 0
    %v2547 = vsel %vm153, %v2539, 0
    %v2550 = vsel %vm529, %v2542, 0
    %2552 = vmatprep.subr.bf16.mxu0 0
    %2553 = vmatpush1.bf16.msra.mxu0 0
    %2554 = vmatprep.subr.bf16.mxu0 0
    %2555 = vmatpush1.bf16.msra.mxu0 0
    %2556 = vmatprep.subr.bf16.mxu0 0
    %2557 = vmatpush1.bf16.msra.mxu0 0
    %2558 = vmatprep.subr.bf16.mxu0 0
    %2559 = vmatpush1.bf16.msra.mxu0 0
    %2560 = vmatprep.subr.bf16.mxu0 0
    %2561 = vmatpush1.bf16.msra.mxu0 0
    %2562 = vmatprep.subr.bf16.mxu0 0
    %2563 = vmatpush1.bf16.msra.mxu0 0
    %2564 = vmatprep.subr.bf16.mxu0 0
    %2565 = vmatpush1.bf16.msra.mxu0 0
    %2566 = vmatprep.subr.bf16.mxu0 0
    %2567 = vmatpush1.bf16.msra.mxu0 %v2550
    %2568 = vmatprep.subr.bf16.mxu0 0
    %2569 = vmatpush2.bf16.msra.mxu0 0
    %2570 = vmatprep.subr.bf16.mxu0 0
    %2571 = vmatpush2.bf16.msra.mxu0 0
    %2572 = vmatprep.subr.bf16.mxu0 0
    %2573 = vmatpush2.bf16.msra.mxu0 0
    %2574 = vmatprep.subr.bf16.mxu0 0
    %2575 = vmatpush2.bf16.msra.mxu0 0
    %2576 = vmatprep.subr.bf16.mxu0 0
    %2577 = vmatpush2.bf16.msra.mxu0 0
    %2578 = vmatprep.subr.bf16.mxu0 0
    %2579 = vmatpush2.bf16.msra.mxu0 0
    %2580 = vmatprep.subr.bf16.mxu0 0
    %2581 = vmatpush2.bf16.msra.mxu0 0
    %2582 = vmatprep.subr.bf16.mxu0 0
    %2583 = vmatpush2.bf16.msra.mxu0 0
    %2584 = vmatprep.mubr.bf16.mxu0 0
    %2585 = vmatmul.mubr.bf16.gmra.mxu0 %v2544
    %v2586 = vpop.f32.mrf.mxu0
    %v2587 = vadd.f32 0.0, %v2586
    %v2588 = vpop.f32.mrf.mxu0
    %v2589 = vpop.f32.mrf.mxu0
    %v2590 = vadd.f32 0.0, %v2589
    %v2591 = vpop.f32.mrf.mxu0
    %2592 = vmatprep.mubr.bf16.mxu0 0
    %2593 = vmatmul.mubr.bf16.gmra.mxu0 %v2547
    %v2594 = vpop.f32.mrf.mxu0
    %v2595 = vadd.f32 0.0, %v2594
    %v2596 = vpop.f32.mrf.mxu0
    %v2597 = vpop.f32.mrf.mxu0
    %v2598 = vadd.f32 0.0, %v2597
    %v2599 = vpop.f32.mrf.mxu0
    %2600 = vdwg.mxu0
    %v2601 = vadd.f32 %v2350, %v2587
    %v2602 = vadd.f32 %v2351, %v2590
    %v2603 = vadd.f32 %v2352, %v2595
    %v2604 = vadd.f32 %v2353, %v2598
    %s2605 = scalar_lea.vmem %s6, 1
    %v2606 = vld [vmem:[%s2605] sm:$0x1]
    %v2608 = vlaneseq
    %v2609 = vshrl.u32 %v2608, 7
    %v2610 = vsub.s32 0, %v2609
    %v2611 = vrot.slane %v2606, %v2610
    %v2613 = vadd.f32 %v2601, %v2611
    %v2614 = vadd.f32 %v2602, %v2611
    %v2615 = vadd.f32 %v2603, %v2611
    %v2616 = vadd.f32 %v2604, %v2611
    %v2617 = vsel %vm89, %v2613, 0.0
    %2618 = vadd.xlane.f32.xlu0 %v2617
    %v2619 = vpop.xlane.xlu0 %2618
    %v2620 = vsel %vm89, %v2614, 0.0
    %2621 = vadd.xlane.f32.xlu0 %v2620
    %v2622 = vpop.xlane.xlu0 %2621
    %v2623 = vsel %vm89, %v2615, 0.0
    %2624 = vadd.xlane.f32.xlu0 %v2623
    %v2625 = vpop.xlane.xlu0 %2624
    %v2626 = vsel %vm89, %v2616, 0.0
    %2627 = vadd.xlane.f32.xlu0 %v2626
    %v2628 = vpop.xlane.xlu0 %2627
    %v2629 = vmul.f32 %v2619, %v1165
    %v2630 = vmul.f32 %v2622, %v1165
    %v2631 = vmul.f32 %v2625, %v1165
    %v2632 = vmul.f32 %v2628, %v1165
    %v2633 = vsub.f32 %v2613, %v2629
    %v2634 = vsub.f32 %v2614, %v2630
    %v2635 = vsub.f32 %v2615, %v2631
    %v2636 = vsub.f32 %v2616, %v2632
    %v2637 = vmul.f32 %v2633, %v2633
    %v2638 = vmul.f32 %v2634, %v2634
    %v2639 = vmul.f32 %v2635, %v2635
    %v2640 = vmul.f32 %v2636, %v2636
    %v2641 = vsel %vm89, %v2637, 0.0
    %2642 = vadd.xlane.f32.xlu0 %v2641
    %v2643 = vpop.xlane.xlu0 %2642
    %v2644 = vsel %vm89, %v2638, 0.0
    %2645 = vadd.xlane.f32.xlu0 %v2644
    %v2646 = vpop.xlane.xlu0 %2645
    %v2647 = vsel %vm89, %v2639, 0.0
    %2648 = vadd.xlane.f32.xlu0 %v2647
    %v2649 = vpop.xlane.xlu0 %2648
    %v2650 = vsel %vm89, %v2640, 0.0
    %2651 = vadd.xlane.f32.xlu0 %v2650
    %v2652 = vpop.xlane.xlu0 %2651
    %v2653 = vmul.f32 %v2643, %v1165
    %v2654 = vmul.f32 %v2646, %v1165
    %v2655 = vmul.f32 %v2649, %v1165
    %v2656 = vmul.f32 %v2652, %v1165
    %v2657 = vadd.f32 %v2653, 1e-05
    %v2658 = vadd.f32 %v2654, 1e-05
    %v2659 = vadd.f32 %v2655, 1e-05
    %v2660 = vadd.f32 %v2656, 1e-05
    %v2661 = vrsqrt.pop %v2657
    %v2662 = vrsqrt.pop %v2658
    %v2663 = vrsqrt.pop %v2659
    %v2664 = vrsqrt.pop %v2660
    %v2665 = vmul.f32 %v2633, %v2661
    %v2666 = vmul.f32 %v2634, %v2662
    %v2667 = vmul.f32 %v2635, %v2663
    %v2668 = vmul.f32 %v2636, %v2664
    %s2669 = scalar_lea.vmem %s7, 1
    %v2670 = vld [vmem:[%s2669] sm:$0x1]
    %v2672 = vlaneseq
    %v2673 = vshrl.u32 %v2672, 7
    %v2674 = vsub.s32 0, %v2673
    %v2675 = vrot.slane %v2670, %v2674
    %v2677 = vmul.f32 %v2665, %v2675
    %v2678 = vmul.f32 %v2666, %v2675
    %v2679 = vmul.f32 %v2667, %v2675
    %v2680 = vmul.f32 %v2668, %v2675
    %s2681 = scalar_lea.vmem %s8, 1
    %v2682 = vld [vmem:[%s2681] sm:$0x1]
    %v2684 = vlaneseq
    %v2685 = vshrl.u32 %v2684, 7
    %v2686 = vsub.s32 0, %v2685
    %v2687 = vrot.slane %v2682, %v2686
    %v2689 = vadd.f32 %v2677, %v2687
    %v2690 = vadd.f32 %v2678, %v2687
    %v2691 = vadd.f32 %v2679, %v2687
    %v2692 = vadd.f32 %v2680, %v2687
    %v2693 = vadd.f32 %v2689, %v1523
    %v2694 = vadd.f32 %v2690, %v1524
    %v2695 = vadd.f32 %v2691, %v1525
    %v2696 = vadd.f32 %v2692, %v1526
    %v2697 = vadd.f32 %v2693, %v56
    %v2698 = vadd.f32 %v2694, %v57
    %v2699 = vadd.f32 %v2695, %v58
    %v2700 = vadd.f32 %v2696, %v59
    %v2701 = vpack.c.bf16 %v2698, %v2697
    %v2702 = vpack.c.bf16 %v2700, %v2699
    %s2703 = scalar_lea.vmem %s9, 16
    %v2704 = vld [vmem:[%s2703] sm:$0xf]
    %v2705 = vld [vmem:[%s2703 + $0x4] sm:$0xf]
    %v2706 = vld [vmem:[%s2703 + $0x8] sm:$0xf]
    %v2707 = vld [vmem:[%s2703 + $0xc] sm:$0xf]
    %s2708 = scalar_lea.vmem %s10, 1
    %v2709 = vld [vmem:[%s2708] sm:$0x1]
    %v2711 = vlaneseq
    %v2712 = vshrl.u32 %v2711, 7
    %v2713 = vsub.s32 0, %v2712
    %v2714 = vrot.slane %v2709, %v2713
    %v2720 = vunpack.c.l.b16 %v2704
    %v2721 = vunpack.c.l.b16 %v2705
    %v2722 = vunpack.c.l.b16 %v2706
    %v2723 = vunpack.c.l.b16 %v2707
    %v2724 = vpack.c.b16 %v2721, %v2720
    %v2725 = vpack.c.b16 %v2723, %v2722
    %v2729 = vsel %vm89, %v2701, 0
    %v2732 = vsel %vm89, %v2702, 0
    %2734 = vmatprep.subr.bf16.mxu0 0
    %2735 = vmatpush1.bf16.msra.mxu0 0
    %2736 = vmatprep.subr.bf16.mxu0 0
    %2737 = vmatpush1.bf16.msra.mxu0 0
    %2738 = vmatprep.subr.bf16.mxu0 0
    %2739 = vmatpush1.bf16.msra.mxu0 0
    %2740 = vmatprep.subr.bf16.mxu0 0
    %2741 = vmatpush1.bf16.msra.mxu0 0
    %2742 = vmatprep.subr.bf16.mxu0 0
    %2743 = vmatpush1.bf16.msra.mxu0 0
    %2744 = vmatprep.subr.bf16.mxu0 0
    %2745 = vmatpush1.bf16.msra.mxu0 0
    %2746 = vmatprep.subr.bf16.mxu0 0
    %2747 = vmatpush1.bf16.msra.mxu0 %v2725
    %2748 = vmatprep.subr.bf16.mxu0 0
    %2749 = vmatpush1.bf16.msra.mxu0 %v2724
    %2750 = vmatprep.subr.bf16.mxu0 0
    %2751 = vmatpush2.bf16.msra.mxu0 0
    %2752 = vmatprep.subr.bf16.mxu0 0
    %2753 = vmatpush2.bf16.msra.mxu0 0
    %2754 = vmatprep.subr.bf16.mxu0 0
    %2755 = vmatpush2.bf16.msra.mxu0 0
    %2756 = vmatprep.subr.bf16.mxu0 0
    %2757 = vmatpush2.bf16.msra.mxu0 0
    %2758 = vmatprep.subr.bf16.mxu0 0
    %2759 = vmatpush2.bf16.msra.mxu0 0
    %2760 = vmatprep.subr.bf16.mxu0 0
    %2761 = vmatpush2.bf16.msra.mxu0 0
    %2762 = vmatprep.subr.bf16.mxu0 0
    %2763 = vmatpush2.bf16.msra.mxu0 0
    %2764 = vmatprep.subr.bf16.mxu0 0
    %2765 = vmatpush2.bf16.msra.mxu0 0
    %2766 = vmatprep.mubr.bf16.mxu0 0
    %2767 = vmatmul.mubr.bf16.gmra.mxu0 %v2729
    %v2768 = vpop.f32.mrf.mxu0
    %v2769 = vadd.f32 %v2714, %v2768
    %v2770 = vpop.f32.mrf.mxu0
    %v2771 = vpop.f32.mrf.mxu0
    %v2772 = vadd.f32 %v2714, %v2771
    %v2773 = vpop.f32.mrf.mxu0
    %2774 = vmatprep.mubr.bf16.mxu0 0
    %2775 = vmatmul.mubr.bf16.gmra.mxu0 %v2732
    %v2776 = vpop.f32.mrf.mxu0
    %v2777 = vadd.f32 %v2714, %v2776
    %v2778 = vpop.f32.mrf.mxu0
    %v2779 = vpop.f32.mrf.mxu0
    %v2780 = vadd.f32 %v2714, %v2779
    %v2781 = vpop.f32.mrf.mxu0
    %2782 = vdwg.mxu0
    %v2783 = vmul.f32 %v2769, %v2769
    %v2784 = vmul.f32 %v2772, %v2772
    %v2785 = vmul.f32 %v2777, %v2777
    %v2786 = vmul.f32 %v2780, %v2780
    %v2787 = vmul.f32 %v2769, %v2783
    %v2788 = vmul.f32 %v2772, %v2784
    %v2789 = vmul.f32 %v2777, %v2785
    %v2790 = vmul.f32 %v2780, %v2786
    %v2791 = vmul.f32 %v2787, 0.044715
    %v2792 = vmul.f32 %v2788, 0.044715
    %v2793 = vmul.f32 %v2789, 0.044715
    %v2794 = vmul.f32 %v2790, 0.044715
    %v2795 = vadd.f32 %v2769, %v2791
    %v2796 = vadd.f32 %v2772, %v2792
    %v2797 = vadd.f32 %v2777, %v2793
    %v2798 = vadd.f32 %v2780, %v2794
    %v2799 = vmul.f32 %v2795, 0.7978846
    %v2800 = vmul.f32 %v2796, 0.7978846
    %v2801 = vmul.f32 %v2797, 0.7978846
    %v2802 = vmul.f32 %v2798, 0.7978846
    %v2803 = vtanh.pop %v2799
    %v2804 = vtanh.pop %v2800
    %v2805 = vtanh.pop %v2801
    %v2806 = vtanh.pop %v2802
    %v2807 = vadd.f32 %v2803, 1.0
    %v2808 = vadd.f32 %v2804, 1.0
    %v2809 = vadd.f32 %v2805, 1.0
    %v2810 = vadd.f32 %v2806, 1.0
    %v2811 = vmul.f32 %v2807, 0.5
    %v2812 = vmul.f32 %v2808, 0.5
    %v2813 = vmul.f32 %v2809, 0.5
    %v2814 = vmul.f32 %v2810, 0.5
    %v2815 = vmul.f32 %v2769, %v2811
    %v2816 = vmul.f32 %v2772, %v2812
    %v2817 = vmul.f32 %v2777, %v2813
    %v2818 = vmul.f32 %v2780, %v2814
    %v2819 = vpack.c.bf16 %v2816, %v2815
    %v2820 = vpack.c.bf16 %v2818, %v2817
    %s2821 = scalar_lea.vmem %s11, 32
    %v2822 = vld [vmem:[%s2821] sm:$0xf]
    %v2823 = vld [vmem:[%s2821 + $0x4] sm:$0xf]
    %v2824 = vld [vmem:[%s2821 + $0x8] sm:$0xf]
    %v2825 = vld [vmem:[%s2821 + $0xc] sm:$0xf]
    %v2826 = vld [vmem:[%s2821 + $0x10] sm:$0xf]
    %v2827 = vld [vmem:[%s2821 + $0x14] sm:$0xf]
    %v2828 = vld [vmem:[%s2821 + $0x18] sm:$0xf]
    %v2829 = vld [vmem:[%s2821 + $0x1c] sm:$0xf]
    %s2830 = scalar_lea.vmem %s12, 1
    %v2831 = vld [vmem:[%s2830] sm:$0x1]
    %v2833 = vlaneseq
    %v2834 = vshrl.u32 %v2833, 7
    %v2835 = vsub.s32 0, %v2834
    %v2836 = vrot.slane %v2831, %v2835
    %v2846 = vunpack.c.l.b16 %v2822
    %v2847 = vunpack.c.l.b16 %v2823
    %v2848 = vunpack.c.l.b16 %v2824
    %v2849 = vunpack.c.l.b16 %v2825
    %v2850 = vunpack.c.l.b16 %v2826
    %v2851 = vunpack.c.l.b16 %v2827
    %v2852 = vunpack.c.l.b16 %v2828
    %v2853 = vunpack.c.l.b16 %v2829
    %v2854 = vpack.c.b16 %v2847, %v2846
    %v2855 = vpack.c.b16 %v2849, %v2848
    %v2856 = vpack.c.b16 %v2851, %v2850
    %v2857 = vpack.c.b16 %v2853, %v2852
    %v2863 = vsel %vm1393, %v2819, 0
    %v2866 = vsel %vm1393, %v2820, 0
    %2868 = vmatprep.subr.bf16.mxu0 0
    %2869 = vmatpush1.bf16.msra.mxu0 0
    %2870 = vmatprep.subr.bf16.mxu0 0
    %2871 = vmatpush1.bf16.msra.mxu0 0
    %2872 = vmatprep.subr.bf16.mxu0 0
    %2873 = vmatpush1.bf16.msra.mxu0 0
    %2874 = vmatprep.subr.bf16.mxu0 0
    %2875 = vmatpush1.bf16.msra.mxu0 0
    %2876 = vmatprep.subr.bf16.mxu0 0
    %2877 = vmatpush1.bf16.msra.mxu0 %v2857
    %2878 = vmatprep.subr.bf16.mxu0 0
    %2879 = vmatpush1.bf16.msra.mxu0 %v2856
    %2880 = vmatprep.subr.bf16.mxu0 0
    %2881 = vmatpush1.bf16.msra.mxu0 %v2855
    %2882 = vmatprep.subr.bf16.mxu0 0
    %2883 = vmatpush1.bf16.msra.mxu0 %v2854
    %2884 = vmatprep.subr.bf16.mxu0 0
    %2885 = vmatpush2.bf16.msra.mxu0 0
    %2886 = vmatprep.subr.bf16.mxu0 0
    %2887 = vmatpush2.bf16.msra.mxu0 0
    %2888 = vmatprep.subr.bf16.mxu0 0
    %2889 = vmatpush2.bf16.msra.mxu0 0
    %2890 = vmatprep.subr.bf16.mxu0 0
    %2891 = vmatpush2.bf16.msra.mxu0 0
    %2892 = vmatprep.subr.bf16.mxu0 0
    %2893 = vmatpush2.bf16.msra.mxu0 0
    %2894 = vmatprep.subr.bf16.mxu0 0
    %2895 = vmatpush2.bf16.msra.mxu0 0
    %2896 = vmatprep.subr.bf16.mxu0 0
    %2897 = vmatpush2.bf16.msra.mxu0 0
    %2898 = vmatprep.subr.bf16.mxu0 0
    %2899 = vmatpush2.bf16.msra.mxu0 0
    %2900 = vmatprep.mubr.bf16.mxu0 0
    %2901 = vmatmul.mubr.bf16.gmra.mxu0 %v2863
    %v2902 = vpop.f32.mrf.mxu0
    %v2903 = vadd.f32 %v2836, %v2902
    %v2904 = vpop.f32.mrf.mxu0
    %v2905 = vpop.f32.mrf.mxu0
    %v2906 = vadd.f32 %v2836, %v2905
    %v2907 = vpop.f32.mrf.mxu0
    %2908 = vmatprep.mubr.bf16.mxu0 0
    %2909 = vmatmul.mubr.bf16.gmra.mxu0 %v2866
    %v2910 = vpop.f32.mrf.mxu0
    %v2911 = vadd.f32 %v2836, %v2910
    %v2912 = vpop.f32.mrf.mxu0
    %v2913 = vpop.f32.mrf.mxu0
    %v2914 = vadd.f32 %v2836, %v2913
    %v2915 = vpop.f32.mrf.mxu0
    %2916 = vdwg.mxu0
    %v2917 = vsel %vm89, %v2903, 0.0
    %2918 = vadd.xlane.f32.xlu0 %v2917
    %v2919 = vpop.xlane.xlu0 %2918
    %v2920 = vsel %vm89, %v2906, 0.0
    %2921 = vadd.xlane.f32.xlu0 %v2920
    %v2922 = vpop.xlane.xlu0 %2921
    %v2923 = vsel %vm89, %v2911, 0.0
    %2924 = vadd.xlane.f32.xlu0 %v2923
    %v2925 = vpop.xlane.xlu0 %2924
    %v2926 = vsel %vm89, %v2914, 0.0
    %2927 = vadd.xlane.f32.xlu0 %v2926
    %v2928 = vpop.xlane.xlu0 %2927
    %v2929 = vmul.f32 %v2919, %v1165
    %v2930 = vmul.f32 %v2922, %v1165
    %v2931 = vmul.f32 %v2925, %v1165
    %v2932 = vmul.f32 %v2928, %v1165
    %v2933 = vsub.f32 %v2903, %v2929
    %v2934 = vsub.f32 %v2906, %v2930
    %v2935 = vsub.f32 %v2911, %v2931
    %v2936 = vsub.f32 %v2914, %v2932
    %v2937 = vmul.f32 %v2933, %v2933
    %v2938 = vmul.f32 %v2934, %v2934
    %v2939 = vmul.f32 %v2935, %v2935
    %v2940 = vmul.f32 %v2936, %v2936
    %v2941 = vsel %vm89, %v2937, 0.0
    %2942 = vadd.xlane.f32.xlu0 %v2941
    %v2943 = vpop.xlane.xlu0 %2942
    %v2944 = vsel %vm89, %v2938, 0.0
    %2945 = vadd.xlane.f32.xlu0 %v2944
    %v2946 = vpop.xlane.xlu0 %2945
    %v2947 = vsel %vm89, %v2939, 0.0
    %2948 = vadd.xlane.f32.xlu0 %v2947
    %v2949 = vpop.xlane.xlu0 %2948
    %v2950 = vsel %vm89, %v2940, 0.0
    %2951 = vadd.xlane.f32.xlu0 %v2950
    %v2952 = vpop.xlane.xlu0 %2951
    %v2953 = vmul.f32 %v2943, %v1165
    %v2954 = vmul.f32 %v2946, %v1165
    %v2955 = vmul.f32 %v2949, %v1165
    %v2956 = vmul.f32 %v2952, %v1165
    %v2957 = vadd.f32 %v2953, 1e-05
    %v2958 = vadd.f32 %v2954, 1e-05
    %v2959 = vadd.f32 %v2955, 1e-05
    %v2960 = vadd.f32 %v2956, 1e-05
    %v2961 = vrsqrt.pop %v2957
    %v2962 = vrsqrt.pop %v2958
    %v2963 = vrsqrt.pop %v2959
    %v2964 = vrsqrt.pop %v2960
    %v2965 = vmul.f32 %v2933, %v2961
    %v2966 = vmul.f32 %v2934, %v2962
    %v2967 = vmul.f32 %v2935, %v2963
    %v2968 = vmul.f32 %v2936, %v2964
    %s2969 = scalar_lea.vmem %s13, 1
    %v2970 = vld [vmem:[%s2969] sm:$0x1]
    %v2972 = vlaneseq
    %v2973 = vshrl.u32 %v2972, 7
    %v2974 = vsub.s32 0, %v2973
    %v2975 = vrot.slane %v2970, %v2974
    %v2977 = vmul.f32 %v2965, %v2975
    %v2978 = vmul.f32 %v2966, %v2975
    %v2979 = vmul.f32 %v2967, %v2975
    %v2980 = vmul.f32 %v2968, %v2975
    %s2981 = scalar_lea.vmem %s14, 1
    %v2982 = vld [vmem:[%s2981] sm:$0x1]
    %v2984 = vlaneseq
    %v2985 = vshrl.u32 %v2984, 7
    %v2986 = vsub.s32 0, %v2985
    %v2987 = vrot.slane %v2982, %v2986
    %v2989 = vadd.f32 %v2977, %v2987
    %v2990 = vadd.f32 %v2978, %v2987
    %v2991 = vadd.f32 %v2979, %v2987
    %v2992 = vadd.f32 %v2980, %v2987
    %v2993 = vadd.f32 %v2989, %v2697
    %v2994 = vadd.f32 %v2990, %v2698
    %v2995 = vadd.f32 %v2991, %v2699
    %v2996 = vadd.f32 %v2992, %v2700
    %2997 = vst.msk [vmem:[#allocation2] sm:$0xff] %vm89, %v2993
    %2998 = vst.msk [vmem:[#allocation2 + $0x8] sm:$0xff] %vm89, %v2994
    %2999 = vst.msk [vmem:[#allocation2 + $0x10] sm:$0xff] %vm89, %v2995
    %3000 = vst.msk [vmem:[#allocation2 + $0x18] sm:$0xff] %vm89, %v2996
    // Predicated region
    $region62: #{forward.1} parent=1 // pred_check
      _
    $region63: #{forward.1} parent=1 // pred_check_branch
      %3002 = sbr.rel (0) target = $region65
    $region64: #{forward.1} parent=1 // pred_region
      %s3004 = ssub.s32 512, 512
      %3005 = vsyncadd [#allocation3], %s3004
      %s3006 = sshll.u32 [#allocation2], 4
      %s3007 = int_to_ptr.vmem [resolvable:$true] %s3006
      %3012 = dma.vmem_to_hbm [thread:$0]  %s3007, 512, %s15, [#allocation3], 128, 128, 8
    $region65: #{forward.1} parent=1 // pred_fallthru
      _
    // Predicated region
    $region66: #{forward.1} parent=1 // pred_check
      _
    $region67: #{forward.1} parent=1 // pred_check_branch
      %3014 = sbr.rel (0) target = $region69
    $region68: #{forward.1} parent=1 // pred_region
      %3015 = dma.done [#allocation3], 512
    $region69: #{forward.1} parent=1 // pred_fallthru
      _
    %3016 = vsyncpa [#allocation3], 1

</llo_original>
